<compile_context>
chip_gen: v7x
topology: tpu7x:2x2x1
jax: 0.10.0
libtpu: 0.0.40
codegen_flags: <defaults>
</compile_context>

<pallas_src>
import jax
import jax.numpy as jnp
from jax import lax
from jax.experimental import pallas as pl
from jax.experimental.pallas import tpu as pltpu

FMRI_DIM = 967
FMRI_PAD = 1024        # 967 padded to a multiple of 128 (lane aligned)
H1 = 1024
H2 = 768
LATENT = 512
LN_EPS = 1e-5          # nn.LayerNorm default
L2_EPS = 1e-12         # F.normalize default


# ---------------------------------------------------------------------------
# Helpers (host-side, static)
# ---------------------------------------------------------------------------
def _round_up(v, m):
    return ((v + m - 1) // m) * m


def _device_kind():
    try:
        return jax.devices()[0].device_kind.lower()
    except Exception:
        return ""


def _default_act_dtype():
    # bf16 elementwise only where VPU/EUP are bf16-native (v6e / v7x).
    kind = _device_kind()
    old = any(t in kind for t in ("v2", "v3", "v4", "v5"))
    return jnp.float32 if old else jnp.bfloat16


def _vmem_limit_bytes():
    kind = _device_kind()
    if any(t in kind for t in ("v2", "v3", "v4", "v5", "v6")):
        return 64 << 20            # 128 MiB physical VMEM
    return 40 << 20                # v7x / unknown: 64 MiB physical, leave headroom


def _pick_tb(B):
    """Batch tile: multiple of 16; for B>128 ensure grid >= 2 (v7x megacore)."""
    if B <= 128:
        return _round_up(max(B, 16), 16)
    if B <= 512:
        return min(256, _round_up((B + 1) // 2, 16))
    return 256


# ---------------------------------------------------------------------------
# Kernel
# ---------------------------------------------------------------------------
def _make_kernel(act_dtype, manual_prefetch):
    silu = lambda h: h * jax.nn.sigmoid(h)        # exp runs on the EUP slot

    def ln_block(h_in, w, p_ref, act):
        """bf16 dot (f32 acc) + bias, one-pass f32 LayerNorm, activation."""
        p = p_ref[...]                             # (3, H) f32: bias / gamma / beta
        h = jnp.dot(h_in, w, preferred_element_type=jnp.float32) + p[0:1, :]
        mu = jnp.mean(h, axis=-1, keepdims=True)
        ms = jnp.mean(h * h, axis=-1, keepdims=True)
        h = (h - mu) * lax.rsqrt(ms - mu * mu + LN_EPS) * p[1:2, :] + p[2:3, :]
        return act(h.astype(act_dtype))

    def kernel(x_ref, w1_ref, p1_ref, w2_ref, p2_ref, w3_ref, p3_ref, o_ref,
               *scratch):
        if manual_prefetch:
            # grid == 1: overlap w2/w3 HBM->VMEM DMA with the layer-1 matmul.
            w2_vmem, w3_vmem, sem = scratch
            cp2 = pltpu.make_async_copy(w2_ref, w2_vmem, sem.at[0])
            cp3 = pltpu.make_async_copy(w3_ref, w3_vmem, sem.at[1])
            cp2.start()
            cp3.start()

        # Block 1: Linear(967->1024) + LayerNorm + SiLU   (Dropout = identity)
        h = ln_block(x_ref[...], w1_ref[...], p1_ref, silu)

        # Block 2: Linear(1024->768) + LayerNorm + SiLU   (Dropout = identity)
        if manual_prefetch:
            cp2.wait()
            w2 = w2_vmem[...]
        else:
            w2 = w2_ref[...]
        h = ln_block(h.astype(jnp.bfloat16), w2, p2_ref, silu)

        # Block 3: Linear(768->512) + LayerNorm + Tanh
        if manual_prefetch:
            cp3.wait()
            w3 = w3_vmem[...]
        else:
            w3 = w3_ref[...]
        h = ln_block(h.astype(jnp.bfloat16), w3, p3_ref, jnp.tanh)

        # F.normalize(p=2, dim=1): x / max(||x||, eps) == x * rsqrt(max(sum x^2, eps^2))
        h = h.astype(jnp.float32)
        ss = jnp.sum(h * h, axis=-1, keepdims=True)
        h = h * lax.rsqrt(jnp.maximum(ss, L2_EPS * L2_EPS))

        o_ref[...] = h.astype(o_ref.dtype)

    return kernel


# ---------------------------------------------------------------------------
# Wrapper
# ---------------------------------------------------------------------------
def miyawaki_fmri_encoder(x, p, act_dtype=None):
    """x: [B, FMRI_DIM] f32; p: prepared params (see prepare_params)."""
    assert x.shape[1] == FMRI_DIM
    B = x.shape[0]
    if act_dtype is None:
        act_dtype = _default_act_dtype()

    TB = _pick_tb(B)
    Bp = _round_up(B, TB)
    grid = Bp // TB
    manual_prefetch = (grid == 1)

    # Pad to lane-aligned K, cast activations to bf16 (halves the x DMA).
    xp = jnp.pad(x.astype(jnp.bfloat16),
                 ((0, Bp - B), (0, FMRI_PAD - FMRI_DIM)))

    # VMEM-resident (constant index_map) inputs: single-buffered.
    resident = lambda shape: pl.BlockSpec(shape, lambda i: (0, 0),
                                          pipeline_mode=pl.Buffered(1))

    if manual_prefetch:
        w2_spec = pl.BlockSpec(memory_space=pl.ANY)
        w3_spec = pl.BlockSpec(memory_space=pl.ANY)
        scratch = [pltpu.VMEM((H1, H2), jnp.bfloat16),
                   pltpu.VMEM((H2, LATENT), jnp.bfloat16),
                   pltpu.SemaphoreType.DMA((2,))]
    else:
        w2_spec = resident((H1, H2))
        w3_spec = resident((H2, LATENT))
        scratch = []

    out = pl.pallas_call(
        _make_kernel(act_dtype, manual_prefetch),
        out_shape=jax.ShapeDtypeStruct((Bp, LATENT), jnp.float32),
        grid_spec=pltpu.PrefetchScalarGridSpec(
            num_scalar_prefetch=0,
            grid=(grid,),
            in_specs=[
                pl.BlockSpec((TB, FMRI_PAD), lambda i: (i, 0)),   # x tile (bf16)
                resident((FMRI_PAD, H1)), resident((3, H1)),      # layer 1
                w2_spec,                  resident((3, H2)),      # layer 2
                w3_spec,                  resident((3, LATENT)),  # layer 3
            ],
            out_specs=pl.BlockSpec((TB, LATENT), lambda i: (i, 0)),
            scratch_shapes=scratch,
        ),
        compiler_params=pltpu.CompilerParams(
            dimension_semantics=("parallel",),
            vmem_limit_bytes=_vmem_limit_bytes(),
        ),
    )(xp, p["w1"], p["p1"], p["w2"], p["p2"], p["w3"], p["p3"])
    return out[:B]


# ---------------------------------------------------------------------------
# Parameters
# ---------------------------------------------------------------------------
def init_params(key):
    """PyTorch-default-like uniform init for Linear, ones/zeros for LayerNorm."""
    ks = jax.random.split(key, 6)

    def linear(kw, kb, fan_in, fan_out):
        bound = 1.0 / jnp.sqrt(jnp.float32(fan_in))
        w = jax.random.uniform(kw, (fan_in, fan_out), jnp.float32, -bound, bound)
        b = jax.random.uniform(kb, (fan_out,), jnp.float32, -bound, bound)
        return w, b

    w1, b1 = linear(ks[0], ks[1], FMRI_DIM, H1)
    w2, b2 = linear(ks[2], ks[3], H1, H2)
    w3, b3 = linear(ks[4], ks[5], H2, LATENT)
    ln = lambda h: (jnp.ones((h,), jnp.float32), jnp.zeros((h,), jnp.float32))
    g1, be1 = ln(H1); g2, be2 = ln(H2); g3, be3 = ln(LATENT)
    return {"w1": w1, "b1": b1, "g1": g1, "be1": be1,
            "w2": w2, "b2": b2, "g2": g2, "be2": be2,
            "w3": w3, "b3": b3, "g3": g3, "be3": be3}


def prepare_params(raw):
    """Host-side, one-time: pad w1's K dim, cast weights to bf16, pack
    bias/gamma/beta into one (3, H) f32 array per layer."""
    pack = lambda b, g, be: jnp.stack([b, g, be]).astype(jnp.float32)
    return {
        "w1": jnp.pad(raw["w1"], ((0, FMRI_PAD - FMRI_DIM), (0, 0))).astype(jnp.bfloat16),
        "w2": raw["w2"].astype(jnp.bfloat16),
        "w3": raw["w3"].astype(jnp.bfloat16),
        "p1": pack(raw["b1"], raw["g1"], raw["be1"]),
        "p2": pack(raw["b2"], raw["g2"], raw["be2"]),
        "p3": pack(raw["b3"], raw["g3"], raw["be3"]),
    }


# ---------------------------------------------------------------------------
# Pure-JAX references
# ---------------------------------------------------------------------------
def _reference_kernel_math(x, p, act_dtype):
    """Same math as the kernel (bf16 dots, one-pass LN, act in act_dtype)."""
    def block(h, w, pk, act):
        h = jnp.dot(h.astype(jnp.bfloat16), w,
                    preferred_element_type=jnp.float32) + pk[0:1, :]
        mu = jnp.mean(h, -1, keepdims=True)
        ms = jnp.mean(h * h, -1, keepdims=True)
        h = (h - mu) * lax.rsqrt(ms - mu * mu + LN_EPS) * pk[1:2, :] + pk[2:3, :]
        return act(h.astype(act_dtype))

    silu = lambda h: h * jax.nn.sigmoid(h)
    xp = jnp.pad(x, ((0, 0), (0, FMRI_PAD - FMRI_DIM)))
    h = block(xp, p["w1"], p["p1"], silu)
    h = block(h, p["w2"], p["p2"], silu)
    h = block(h, p["w3"], p["p3"], jnp.tanh)
    h = h.astype(jnp.float32)
    ss = jnp.sum(h * h, -1, keepdims=True)
    return h * lax.rsqrt(jnp.maximum(ss, L2_EPS * L2_EPS))


def _reference_f32(x, raw):
    """Full-precision reference (original PyTorch semantics)."""
    def ln(h, g, b):
        mu = jnp.mean(h, -1, keepdims=True)
        var = jnp.mean((h - mu) ** 2, -1, keepdims=True)
        return (h - mu) / jnp.sqrt(var + LN_EPS) * g + b

    h = x @ raw["w1"] + raw["b1"]
    h = ln(h, raw["g1"], raw["be1"]); h = h * jax.nn.sigmoid(h)
    h = h @ raw["w2"] + raw["b2"]
    h = ln(h, raw["g2"], raw["be2"]); h = h * jax.nn.sigmoid(h)
    h = h @ raw["w3"] + raw["b3"]
    h = jnp.tanh(ln(h, raw["g3"], raw["be3"]))
    n = jnp.sqrt(jnp.sum(h * h, -1, keepdims=True))
    return h / jnp.maximum(n, L2_EPS)


if __name__ == "__main__":
    key = jax.random.PRNGKey(0)
    kx, kp = jax.random.split(key)

    raw = init_params(kp)
    params = prepare_params(raw)
    act_dtype = _default_act_dtype()

    # --- Small batch (grid == 1, manual w2/w3 prefetch path) ---------------
    B = 8
    x = jax.random.normal(kx, (B, FMRI_DIM), jnp.float32)
    out = jax.block_until_ready(miyawaki_fmri_encoder(x, params))
    assert out.shape == (B, LATENT)
    assert bool(jnp.all(jnp.isfinite(out)))

    ref_same = _reference_kernel_math(x, params, act_dtype)
    assert bool(jnp.allclose(out, ref_same, atol=3e-3, rtol=1e-3))

    ref_f32 = _reference_f32(x, raw)
    assert bool(jnp.allclose(out, ref_f32, atol=7e-2, rtol=0))

    assert bool(jnp.allclose(jnp.linalg.norm(out, axis=1), 1.0, atol=1e-3))

    # --- Larger batch (grid > 1, resident-weight path, megacore sharding) --
    B2 = 160
    x2 = jax.random.normal(jax.random.PRNGKey(1), (B2, FMRI_DIM), jnp.float32)
    out2 = jax.block_until_ready(miyawaki_fmri_encoder(x2, params))
    ref2 = _reference_kernel_math(x2, params, act_dtype)
    assert out2.shape == (B2, LATENT)
    assert bool(jnp.allclose(out2, ref2, atol=3e-3, rtol=1e-3))

    print("KERNEL_OK")
</pallas_src>

<mosaic_0001>
module attributes {stable_mosaic.version = 11 : i64} {
  func.func @kernel(%arg0: i32, %arg1: memref<16x1024xbf16, #tpu.memory_space<vmem>>, %arg2: memref<1024x1024xbf16, #tpu.memory_space<vmem>>, %arg3: memref<3x1024xf32, #tpu.memory_space<vmem>>, %arg4: memref<1024x768xbf16, #tpu.memory_space<any>>, %arg5: memref<3x768xf32, #tpu.memory_space<vmem>>, %arg6: memref<768x512xbf16, #tpu.memory_space<any>>, %arg7: memref<3x512xf32, #tpu.memory_space<vmem>>, %arg8: memref<16x512xf32, #tpu.memory_space<vmem>>, %arg9: memref<1024x768xbf16, #tpu.memory_space<vmem>>, %arg10: memref<768x512xbf16, #tpu.memory_space<vmem>>, %arg11: memref<2x!tpu.dma_semaphore, #tpu.memory_space<semaphore_mem>>) attributes {dimension_semantics = [#tpu.dimension_semantics<parallel>], iteration_bounds = array<i64: 1>, scalar_prefetch = 0 : i64, scratch_operands = 3 : i64, tpu.core_type = #tpu.core_type<tc>, window_params = [{transform_indices = @transform_0, window_bounds = array<i64: 16, 1024>}, {pipeline_mode = #tpu.pipeline_mode<synchronous>, transform_indices = @transform_1, window_bounds = array<i64: 1024, 1024>}, {pipeline_mode = #tpu.pipeline_mode<synchronous>, transform_indices = @transform_2, window_bounds = array<i64: 3, 1024>}, {}, {pipeline_mode = #tpu.pipeline_mode<synchronous>, transform_indices = @transform_4, window_bounds = array<i64: 3, 768>}, {}, {pipeline_mode = #tpu.pipeline_mode<synchronous>, transform_indices = @transform_6, window_bounds = array<i64: 3, 512>}, {transform_indices = @transform_7, window_bounds = array<i64: 16, 512>}]} {
    %c0_i32 = arith.constant 0 : i32
    %0 = tpu.memref_slice %arg11[%c0_i32] : memref<2x!tpu.dma_semaphore, #tpu.memory_space<semaphore_mem>> -> memref<1x!tpu.dma_semaphore, #tpu.memory_space<semaphore_mem>>
    %1 = tpu.memref_squeeze %0 : memref<1x!tpu.dma_semaphore, #tpu.memory_space<semaphore_mem>> -> memref<!tpu.dma_semaphore, #tpu.memory_space<semaphore_mem>>
    tpu.enqueue_dma source(%arg4 : memref<1024x768xbf16, #tpu.memory_space<any>>) target(%arg9 : memref<1024x768xbf16, #tpu.memory_space<vmem>>) target_semaphore(%1 : memref<!tpu.dma_semaphore, #tpu.memory_space<semaphore_mem>>)
    %c1_i32 = arith.constant 1 : i32
    %2 = tpu.memref_slice %arg11[%c1_i32] : memref<2x!tpu.dma_semaphore, #tpu.memory_space<semaphore_mem>> -> memref<1x!tpu.dma_semaphore, #tpu.memory_space<semaphore_mem>>
    %3 = tpu.memref_squeeze %2 : memref<1x!tpu.dma_semaphore, #tpu.memory_space<semaphore_mem>> -> memref<!tpu.dma_semaphore, #tpu.memory_space<semaphore_mem>>
    tpu.enqueue_dma source(%arg6 : memref<768x512xbf16, #tpu.memory_space<any>>) target(%arg10 : memref<768x512xbf16, #tpu.memory_space<vmem>>) target_semaphore(%3 : memref<!tpu.dma_semaphore, #tpu.memory_space<semaphore_mem>>)
    %c0 = arith.constant 0 : index
    %c0_0 = arith.constant 0 : index
    %4 = vector.load %arg1[%c0, %c0_0] : memref<16x1024xbf16, #tpu.memory_space<vmem>>, vector<16x1024xbf16>
    %c0_1 = arith.constant 0 : index
    %c0_2 = arith.constant 0 : index
    %5 = vector.load %arg2[%c0_1, %c0_2] : memref<1024x1024xbf16, #tpu.memory_space<vmem>>, vector<1024x1024xbf16>
    %c0_3 = arith.constant 0 : index
    %c0_4 = arith.constant 0 : index
    %6 = vector.load %arg3[%c0_3, %c0_4] : memref<3x1024xf32, #tpu.memory_space<vmem>>, vector<3x1024xf32>
    %cst = arith.constant dense<0.000000e+00> : vector<16x1024xf32>
    %7 = tpu.matmul %4, %5, %cst {dimension_numbers = #tpu.dot_dimension_numbers<[1], [0], [0], [1], [0, 0, 1, 1], [], []>} : vector<16x1024xbf16>, vector<1024x1024xbf16>, vector<16x1024xf32> -> vector<16x1024xf32>
    %8 = vector.extract_strided_slice %6 {offsets = [0, 0], sizes = [1, 1024], strides = [1, 1]} : vector<3x1024xf32> to vector<1x1024xf32>
    %9 = vector.broadcast %8 : vector<1x1024xf32> to vector<16x1024xf32>
    %10 = arith.addf %7, %9 : vector<16x1024xf32>
    %cst_5 = arith.constant dense<0.000000e+00> : vector<16xf32>
    %11 = vector.multi_reduction <add>, %10, %cst_5 [1] : vector<16x1024xf32> to vector<16xf32>
    %12 = vector.shape_cast %11 : vector<16xf32> to vector<16x1xf32>
    %cst_6 = arith.constant 1.024000e+03 : f32
    %13 = vector.broadcast %cst_6 : f32 to vector<16x1xf32>
    %14 = arith.divf %12, %13 : vector<16x1xf32>
    %15 = arith.mulf %10, %10 : vector<16x1024xf32>
    %cst_7 = arith.constant dense<0.000000e+00> : vector<16xf32>
    %16 = vector.multi_reduction <add>, %15, %cst_7 [1] : vector<16x1024xf32> to vector<16xf32>
    %17 = vector.shape_cast %16 : vector<16xf32> to vector<16x1xf32>
    %cst_8 = arith.constant 1.024000e+03 : f32
    %18 = vector.broadcast %cst_8 : f32 to vector<16x1xf32>
    %19 = arith.divf %17, %18 : vector<16x1xf32>
    %20 = vector.broadcast %14 : vector<16x1xf32> to vector<16x1024xf32>
    %21 = arith.subf %10, %20 : vector<16x1024xf32>
    %22 = arith.mulf %14, %14 : vector<16x1xf32>
    %23 = arith.subf %19, %22 : vector<16x1xf32>
    %cst_9 = arith.constant 9.99999974E-6 : f32
    %24 = vector.broadcast %cst_9 : f32 to vector<16x1xf32>
    %25 = arith.addf %23, %24 : vector<16x1xf32>
    %26 = math.rsqrt %25 : vector<16x1xf32>
    %27 = vector.broadcast %26 : vector<16x1xf32> to vector<16x1024xf32>
    %28 = arith.mulf %21, %27 : vector<16x1024xf32>
    %29 = vector.extract_strided_slice %6 {offsets = [1, 0], sizes = [1, 1024], strides = [1, 1]} : vector<3x1024xf32> to vector<1x1024xf32>
    %30 = vector.broadcast %29 : vector<1x1024xf32> to vector<16x1024xf32>
    %31 = arith.mulf %28, %30 : vector<16x1024xf32>
    %32 = vector.extract_strided_slice %6 {offsets = [2, 0], sizes = [1, 1024], strides = [1, 1]} : vector<3x1024xf32> to vector<1x1024xf32>
    %33 = vector.broadcast %32 : vector<1x1024xf32> to vector<16x1024xf32>
    %34 = arith.addf %31, %33 : vector<16x1024xf32>
    %35 = arith.truncf %34 : vector<16x1024xf32> to vector<16x1024xbf16>
    %36 = arith.negf %35 : vector<16x1024xbf16>
    %37 = math.exp %36 : vector<16x1024xbf16>
    %cst_10 = arith.constant 1.000000e+00 : bf16
    %38 = vector.broadcast %cst_10 : bf16 to vector<16x1024xbf16>
    %39 = arith.addf %38, %37 : vector<16x1024xbf16>
    %40 = arith.divf %38, %39 : vector<16x1024xbf16>
    %41 = arith.mulf %35, %40 : vector<16x1024xbf16>
    %c0_i32_11 = arith.constant 0 : i32
    %42 = tpu.memref_slice %arg11[%c0_i32_11] : memref<2x!tpu.dma_semaphore, #tpu.memory_space<semaphore_mem>> -> memref<1x!tpu.dma_semaphore, #tpu.memory_space<semaphore_mem>>
    %43 = tpu.memref_squeeze %42 : memref<1x!tpu.dma_semaphore, #tpu.memory_space<semaphore_mem>> -> memref<!tpu.dma_semaphore, #tpu.memory_space<semaphore_mem>>
    tpu.wait_dma2 semaphore(%43 : memref<!tpu.dma_semaphore, #tpu.memory_space<semaphore_mem>>) src(%arg4 : memref<1024x768xbf16, #tpu.memory_space<any>>) dst(%arg9 : memref<1024x768xbf16, #tpu.memory_space<vmem>>)
    %c0_12 = arith.constant 0 : index
    %c0_13 = arith.constant 0 : index
    %44 = vector.load %arg9[%c0_12, %c0_13] : memref<1024x768xbf16, #tpu.memory_space<vmem>>, vector<1024x768xbf16>
    %c0_14 = arith.constant 0 : index
    %c0_15 = arith.constant 0 : index
    %45 = vector.load %arg5[%c0_14, %c0_15] : memref<3x768xf32, #tpu.memory_space<vmem>>, vector<3x768xf32>
    %cst_16 = arith.constant dense<0.000000e+00> : vector<16x768xf32>
    %46 = tpu.matmul %41, %44, %cst_16 {dimension_numbers = #tpu.dot_dimension_numbers<[1], [0], [0], [1], [0, 0, 1, 1], [], []>} : vector<16x1024xbf16>, vector<1024x768xbf16>, vector<16x768xf32> -> vector<16x768xf32>
    %47 = vector.extract_strided_slice %45 {offsets = [0, 0], sizes = [1, 768], strides = [1, 1]} : vector<3x768xf32> to vector<1x768xf32>
    %48 = vector.broadcast %47 : vector<1x768xf32> to vector<16x768xf32>
    %49 = arith.addf %46, %48 : vector<16x768xf32>
    %cst_17 = arith.constant dense<0.000000e+00> : vector<16xf32>
    %50 = vector.multi_reduction <add>, %49, %cst_17 [1] : vector<16x768xf32> to vector<16xf32>
    %51 = vector.shape_cast %50 : vector<16xf32> to vector<16x1xf32>
    %cst_18 = arith.constant 7.680000e+02 : f32
    %52 = vector.broadcast %cst_18 : f32 to vector<16x1xf32>
    %53 = arith.divf %51, %52 : vector<16x1xf32>
    %54 = arith.mulf %49, %49 : vector<16x768xf32>
    %cst_19 = arith.constant dense<0.000000e+00> : vector<16xf32>
    %55 = vector.multi_reduction <add>, %54, %cst_19 [1] : vector<16x768xf32> to vector<16xf32>
    %56 = vector.shape_cast %55 : vector<16xf32> to vector<16x1xf32>
    %cst_20 = arith.constant 7.680000e+02 : f32
    %57 = vector.broadcast %cst_20 : f32 to vector<16x1xf32>
    %58 = arith.divf %56, %57 : vector<16x1xf32>
    %59 = vector.broadcast %53 : vector<16x1xf32> to vector<16x768xf32>
    %60 = arith.subf %49, %59 : vector<16x768xf32>
    %61 = arith.mulf %53, %53 : vector<16x1xf32>
    %62 = arith.subf %58, %61 : vector<16x1xf32>
    %cst_21 = arith.constant 9.99999974E-6 : f32
    %63 = vector.broadcast %cst_21 : f32 to vector<16x1xf32>
    %64 = arith.addf %62, %63 : vector<16x1xf32>
    %65 = math.rsqrt %64 : vector<16x1xf32>
    %66 = vector.broadcast %65 : vector<16x1xf32> to vector<16x768xf32>
    %67 = arith.mulf %60, %66 : vector<16x768xf32>
    %68 = vector.extract_strided_slice %45 {offsets = [1, 0], sizes = [1, 768], strides = [1, 1]} : vector<3x768xf32> to vector<1x768xf32>
    %69 = vector.broadcast %68 : vector<1x768xf32> to vector<16x768xf32>
    %70 = arith.mulf %67, %69 : vector<16x768xf32>
    %71 = vector.extract_strided_slice %45 {offsets = [2, 0], sizes = [1, 768], strides = [1, 1]} : vector<3x768xf32> to vector<1x768xf32>
    %72 = vector.broadcast %71 : vector<1x768xf32> to vector<16x768xf32>
    %73 = arith.addf %70, %72 : vector<16x768xf32>
    %74 = arith.truncf %73 : vector<16x768xf32> to vector<16x768xbf16>
    %75 = arith.negf %74 : vector<16x768xbf16>
    %76 = math.exp %75 : vector<16x768xbf16>
    %cst_22 = arith.constant 1.000000e+00 : bf16
    %77 = vector.broadcast %cst_22 : bf16 to vector<16x768xbf16>
    %78 = arith.addf %77, %76 : vector<16x768xbf16>
    %79 = arith.divf %77, %78 : vector<16x768xbf16>
    %80 = arith.mulf %74, %79 : vector<16x768xbf16>
    %c1_i32_23 = arith.constant 1 : i32
    %81 = tpu.memref_slice %arg11[%c1_i32_23] : memref<2x!tpu.dma_semaphore, #tpu.memory_space<semaphore_mem>> -> memref<1x!tpu.dma_semaphore, #tpu.memory_space<semaphore_mem>>
    %82 = tpu.memref_squeeze %81 : memref<1x!tpu.dma_semaphore, #tpu.memory_space<semaphore_mem>> -> memref<!tpu.dma_semaphore, #tpu.memory_space<semaphore_mem>>
    tpu.wait_dma2 semaphore(%82 : memref<!tpu.dma_semaphore, #tpu.memory_space<semaphore_mem>>) src(%arg6 : memref<768x512xbf16, #tpu.memory_space<any>>) dst(%arg10 : memref<768x512xbf16, #tpu.memory_space<vmem>>)
    %c0_24 = arith.constant 0 : index
    %c0_25 = arith.constant 0 : index
    %83 = vector.load %arg10[%c0_24, %c0_25] : memref<768x512xbf16, #tpu.memory_space<vmem>>, vector<768x512xbf16>
    %c0_26 = arith.constant 0 : index
    %c0_27 = arith.constant 0 : index
    %84 = vector.load %arg7[%c0_26, %c0_27] : memref<3x512xf32, #tpu.memory_space<vmem>>, vector<3x512xf32>
    %cst_28 = arith.constant dense<0.000000e+00> : vector<16x512xf32>
    %85 = tpu.matmul %80, %83, %cst_28 {dimension_numbers = #tpu.dot_dimension_numbers<[1], [0], [0], [1], [0, 0, 1, 1], [], []>} : vector<16x768xbf16>, vector<768x512xbf16>, vector<16x512xf32> -> vector<16x512xf32>
    %86 = vector.extract_strided_slice %84 {offsets = [0, 0], sizes = [1, 512], strides = [1, 1]} : vector<3x512xf32> to vector<1x512xf32>
    %87 = vector.broadcast %86 : vector<1x512xf32> to vector<16x512xf32>
    %88 = arith.addf %85, %87 : vector<16x512xf32>
    %cst_29 = arith.constant dense<0.000000e+00> : vector<16xf32>
    %89 = vector.multi_reduction <add>, %88, %cst_29 [1] : vector<16x512xf32> to vector<16xf32>
    %90 = vector.shape_cast %89 : vector<16xf32> to vector<16x1xf32>
    %cst_30 = arith.constant 5.120000e+02 : f32
    %91 = vector.broadcast %cst_30 : f32 to vector<16x1xf32>
    %92 = arith.divf %90, %91 : vector<16x1xf32>
    %93 = arith.mulf %88, %88 : vector<16x512xf32>
    %cst_31 = arith.constant dense<0.000000e+00> : vector<16xf32>
    %94 = vector.multi_reduction <add>, %93, %cst_31 [1] : vector<16x512xf32> to vector<16xf32>
    %95 = vector.shape_cast %94 : vector<16xf32> to vector<16x1xf32>
    %cst_32 = arith.constant 5.120000e+02 : f32
    %96 = vector.broadcast %cst_32 : f32 to vector<16x1xf32>
    %97 = arith.divf %95, %96 : vector<16x1xf32>
    %98 = vector.broadcast %92 : vector<16x1xf32> to vector<16x512xf32>
    %99 = arith.subf %88, %98 : vector<16x512xf32>
    %100 = arith.mulf %92, %92 : vector<16x1xf32>
    %101 = arith.subf %97, %100 : vector<16x1xf32>
    %cst_33 = arith.constant 9.99999974E-6 : f32
    %102 = vector.broadcast %cst_33 : f32 to vector<16x1xf32>
    %103 = arith.addf %101, %102 : vector<16x1xf32>
    %104 = math.rsqrt %103 : vector<16x1xf32>
    %105 = vector.broadcast %104 : vector<16x1xf32> to vector<16x512xf32>
    %106 = arith.mulf %99, %105 : vector<16x512xf32>
    %107 = vector.extract_strided_slice %84 {offsets = [1, 0], sizes = [1, 512], strides = [1, 1]} : vector<3x512xf32> to vector<1x512xf32>
    %108 = vector.broadcast %107 : vector<1x512xf32> to vector<16x512xf32>
    %109 = arith.mulf %106, %108 : vector<16x512xf32>
    %110 = vector.extract_strided_slice %84 {offsets = [2, 0], sizes = [1, 512], strides = [1, 1]} : vector<3x512xf32> to vector<1x512xf32>
    %111 = vector.broadcast %110 : vector<1x512xf32> to vector<16x512xf32>
    %112 = arith.addf %109, %111 : vector<16x512xf32>
    %113 = arith.truncf %112 : vector<16x512xf32> to vector<16x512xbf16>
    %114 = math.tanh %113 : vector<16x512xbf16>
    %115 = arith.extf %114 : vector<16x512xbf16> to vector<16x512xf32>
    %116 = arith.mulf %115, %115 : vector<16x512xf32>
    %cst_34 = arith.constant dense<0.000000e+00> : vector<16xf32>
    %117 = vector.multi_reduction <add>, %116, %cst_34 [1] : vector<16x512xf32> to vector<16xf32>
    %118 = vector.shape_cast %117 : vector<16xf32> to vector<16x1xf32>
    %cst_35 = arith.constant 1.000000e-24 : f32
    %119 = vector.broadcast %cst_35 : f32 to vector<16x1xf32>
    %120 = arith.maximumf %118, %119 : vector<16x1xf32>
    %121 = math.rsqrt %120 : vector<16x1xf32>
    %122 = vector.broadcast %121 : vector<16x1xf32> to vector<16x512xf32>
    %123 = arith.mulf %115, %122 : vector<16x512xf32>
    %c0_36 = arith.constant 0 : index
    %c0_37 = arith.constant 0 : index
    %124 = vector.load %arg8[%c0_36, %c0_37] : memref<16x512xf32, #tpu.memory_space<vmem>>, vector<16x512xf32>
    tpu.vector_store %arg8[%c0_36, %c0_37], %123 {strides = array<i32>} : memref<16x512xf32, #tpu.memory_space<vmem>>, vector<16x512xf32>,
    return
  }
  func.func @transform_0(%arg0: i32) -> (i32, i32) {
    %c0_i32 = arith.constant 0 : i32
    %c0_i32_0 = arith.constant 0 : i32
    return %arg0, %c0_i32 : i32, i32
  }
  func.func @transform_1(%arg0: i32) -> (i32, i32) {
    %c0_i32 = arith.constant 0 : i32
    %c0_i32_0 = arith.constant 0 : i32
    %c0_i32_1 = arith.constant 0 : i32
    return %c0_i32, %c0_i32_0 : i32, i32
  }
  func.func @transform_2(%arg0: i32) -> (i32, i32) {
    %c0_i32 = arith.constant 0 : i32
    %c0_i32_0 = arith.constant 0 : i32
    %c0_i32_1 = arith.constant 0 : i32
    return %c0_i32, %c0_i32_0 : i32, i32
  }
  func.func @transform_4(%arg0: i32) -> (i32, i32) {
    %c0_i32 = arith.constant 0 : i32
    %c0_i32_0 = arith.constant 0 : i32
    %c0_i32_1 = arith.constant 0 : i32
    return %c0_i32, %c0_i32_0 : i32, i32
  }
  func.func @transform_6(%arg0: i32) -> (i32, i32) {
    %c0_i32 = arith.constant 0 : i32
    %c0_i32_0 = arith.constant 0 : i32
    %c0_i32_1 = arith.constant 0 : i32
    return %c0_i32, %c0_i32_0 : i32, i32
  }
  func.func @transform_7(%arg0: i32) -> (i32, i32) {
    %c0_i32 = arith.constant 0 : i32
    %c0_i32_0 = arith.constant 0 : i32
    return %arg0, %c0_i32 : i32, i32
  }
}

</mosaic_0001>

<llo_original>
// kernel: tpu_custom_call.1
$region0: #{tpu_custom_call.1}
  #allocation0 [shape = 'u32[]', space=smem, size = 0x4, offset = 0x4, fixed_abs, tag = 'smem constant byte address 0x4 - core index']
  #allocation1 [shape = 'u32[144,128]{1,0:T(1,128)}', space=vmem, size = 0x12000, scoped, tag = 'internal scratch']
  #allocation2 [shape = 'bf16[1024,768]{1,0:T(16,128)(2,1)}', space=vmem, size = 0x180000, scoped, tag = 'scratch operand']
  #allocation3 [shape = 'bf16[768,512]{1,0:T(16,128)(2,1)}', space=vmem, size = 0xc0000, scoped, tag = 'scratch operand']
  #allocation4 [shape = 's32[2]{0}', space=sflag, size = 0x8, scoped, tag = 'scratch operand']
  #allocation15 [shape = 's32[]', space=sflag, size = 0x4, offset = 0, fixed_abs, tag = 'sflag constant byte address 0x0 - dummy sync flag']
  #allocation17 [shape = 's32[]', space=sflag, size = 0x4, offset = 0, fixed_abs, tag = 'sflag constant byte address 0x0 - dummy sync flag']
  %s0 = inlined_call_operand.hbm [shape: bf16[16,1024], index: 0, kind: input, shape index: {}]
  %s1 = inlined_call_operand.hbm [shape: bf16[1024,1024], index: 1, kind: input, shape index: {}]
  %s2 = inlined_call_operand.hbm [shape: f32[3,1024], index: 2, kind: input, shape index: {}]
  %s3 = inlined_call_operand.hbm [shape: bf16[1024,768], index: 3, kind: input, shape index: {}]
  %s4 = inlined_call_operand.hbm [shape: f32[3,768], index: 4, kind: input, shape index: {}]
  %s5 = inlined_call_operand.hbm [shape: bf16[768,512], index: 5, kind: input, shape index: {}]
  %s6 = inlined_call_operand.hbm [shape: f32[3,512], index: 6, kind: input, shape index: {}]
  %s7 = inlined_call_operand.hbm [shape: f32[16,512], index: 7, kind: output, shape index: {}]
  %s8 = sld [smem:[#allocation0]]
  $region50: #{tpu_custom_call.1} parent=0
    _
  %s10 = ssub.s32 1, %s8
  %s11 = scalar_select 0, %s10, %s8
  $region1: #{tpu_custom_call.1} parent=0
    #allocation5 [shape = 'u8[32768]{0}', space=vmem, size = 0x8000, scoped, tag = 'input window, operand 0, single buffered']
    #allocation6 [shape = 's32[1]{0}', space=sflag, size = 0x4, scoped, tag = 'scoped memory for tpu_custom_call.1']
    #allocation7 [shape = 's32[1]{0}', space=sflag, size = 0x4, scoped, tag = 'scoped memory for tpu_custom_call.1']
    #allocation8 [shape = 'u8[2097152]{0}', space=vmem, size = 0x200000, scoped, tag = 'input window, operand 1, single buffered']
    #allocation9 [shape = 's32[1]{0}', space=sflag, size = 0x4, scoped, tag = 'scoped memory for tpu_custom_call.1']
    #allocation10 [shape = 'u8[16384]{0}', space=vmem, size = 0x4000, scoped, tag = 'input window, operand 2, single buffered']
    #allocation11 [shape = 'u8[12288]{0}', space=vmem, size = 0x3000, scoped, tag = 'input window, operand 4, single buffered']
    #allocation12 [shape = 's32[1]{0}', space=sflag, size = 0x4, scoped, tag = 'scoped memory for tpu_custom_call.1']
    #allocation13 [shape = 'u8[8192]{0}', space=vmem, size = 0x2000, scoped, tag = 'input window, operand 6, single buffered']
    #allocation14 [shape = 'u8[32768]{0}', space=vmem, size = 0x8000, scoped, tag = 'output window, operand 0, single buffered']
    #allocation16 [shape = 'u32[9]{0}', space=smem, size = 0x24, scoped, tag = 'DMA stride descriptor']
    #allocation18 [shape = 'u32[9]{0}', space=smem, size = 0x24, scoped, tag = 'DMA stride descriptor']
    %12 = vsyncpa [#allocation6], 0
    %13 = vsyncpa [#allocation9], 0
    %14 = vsyncpa [#allocation12], 0
    %15 = vsyncpa [#allocation7], 0
    // Predicated region
    $region2: #{tpu_custom_call.1} parent=1 // pred_check
      _
    $region3: #{tpu_custom_call.1} parent=1 // pred_check_branch
      %17 = sbr.rel (0) target = $region5
    $region4: #{tpu_custom_call.1} parent=1 // pred_region
      %s19 = ssub.s32 1024, 1024
      %20 = vsyncadd [#allocation6], %s19
      %s21 = sshll.u32 [#allocation5], 4
      %s22 = int_to_ptr.vmem [resolvable:$true] %s21
      %27 = dma.hbm_to_vmem [thread:$0]  %s0, 1024, %s22, [#allocation6], 512, 512, 32
    $region5: #{tpu_custom_call.1} parent=1 // pred_fallthru
      _
    // Predicated region
    $region6: #{tpu_custom_call.1} parent=1 // pred_check
      _
    $region7: #{tpu_custom_call.1} parent=1 // pred_check_branch
      %29 = sbr.rel (0) target = $region9
    $region8: #{tpu_custom_call.1} parent=1 // pred_region
      %s31 = ssub.s32 65536, 65536
      %32 = vsyncadd [#allocation9], %s31
      %s33 = sshll.u32 [#allocation8], 4
      %s34 = int_to_ptr.vmem [resolvable:$true] %s33
      %39 = dma.hbm_to_vmem [thread:$0]  %s1, 65536, %s34, [#allocation9], 512, 512, 32
    $region9: #{tpu_custom_call.1} parent=1 // pred_fallthru
      _
    // Predicated region
    $region10: #{tpu_custom_call.1} parent=1 // pred_check
      _
    $region11: #{tpu_custom_call.1} parent=1 // pred_check_branch
      %41 = sbr.rel (0) target = $region13
    $region12: #{tpu_custom_call.1} parent=1 // pred_region
      %s43 = ssub.s32 512, 512
      %44 = vsyncadd [#allocation9], %s43
      %s46 = sshll.u32 [#allocation10], 4
      %s47 = int_to_ptr.vmem [resolvable:$true] %s46
      %49 = dma.hbm_to_vmem [thread:$0]  %s2, 512, %s47, [#allocation9]
    $region13: #{tpu_custom_call.1} parent=1 // pred_fallthru
      _
    // Predicated region
    $region14: #{tpu_custom_call.1} parent=1 // pred_check
      _
    $region15: #{tpu_custom_call.1} parent=1 // pred_check_branch
      %51 = sbr.rel (0) target = $region17
    $region16: #{tpu_custom_call.1} parent=1 // pred_region
      %s53 = ssub.s32 384, 384
      %54 = vsyncadd [#allocation12], %s53
      %s56 = sshll.u32 [#allocation11], 4
      %s57 = int_to_ptr.vmem [resolvable:$true] %s56
      %59 = dma.hbm_to_vmem [thread:$0]  %s4, 384, %s57, [#allocation12]
    $region17: #{tpu_custom_call.1} parent=1 // pred_fallthru
      _
    // Predicated region
    $region18: #{tpu_custom_call.1} parent=1 // pred_check
      _
    $region19: #{tpu_custom_call.1} parent=1 // pred_check_branch
      %61 = sbr.rel (0) target = $region21
    $region20: #{tpu_custom_call.1} parent=1 // pred_region
      %s63 = ssub.s32 256, 256
      %64 = vsyncadd [#allocation12], %s63
      %s66 = sshll.u32 [#allocation13], 4
      %s67 = int_to_ptr.vmem [resolvable:$true] %s66
      %69 = dma.hbm_to_vmem [thread:$0]  %s6, 256, %s67, [#allocation12]
    $region21: #{tpu_custom_call.1} parent=1 // pred_fallthru
      _
    // Predicated region
    $region22: #{tpu_custom_call.1} parent=1 // pred_check
      _
    $region23: #{tpu_custom_call.1} parent=1 // pred_check_branch
      %71 = sbr.rel (0) target = $region25
    $region24: #{tpu_custom_call.1} parent=1 // pred_region
      %72 = dma.done [#allocation6], 1024
    $region25: #{tpu_custom_call.1} parent=1 // pred_fallthru
      _
    // Predicated region
    $region26: #{tpu_custom_call.1} parent=1 // pred_check
      _
    $region27: #{tpu_custom_call.1} parent=1 // pred_check_branch
      %74 = sbr.rel (0) target = $region29
    $region28: #{tpu_custom_call.1} parent=1 // pred_region
      %75 = dma.done [#allocation9], 65536
    $region29: #{tpu_custom_call.1} parent=1 // pred_fallthru
      _
    // Predicated region
    $region30: #{tpu_custom_call.1} parent=1 // pred_check
      _
    $region31: #{tpu_custom_call.1} parent=1 // pred_check_branch
      %77 = sbr.rel (0) target = $region33
    $region32: #{tpu_custom_call.1} parent=1 // pred_region
      %78 = dma.done [#allocation9], 512
    $region33: #{tpu_custom_call.1} parent=1 // pred_fallthru
      _
    // Predicated region
    $region34: #{tpu_custom_call.1} parent=1 // pred_check
      _
    $region35: #{tpu_custom_call.1} parent=1 // pred_check_branch
      %80 = sbr.rel (0) target = $region37
    $region36: #{tpu_custom_call.1} parent=1 // pred_region
      %81 = dma.done [#allocation12], 384
    $region37: #{tpu_custom_call.1} parent=1 // pred_fallthru
      _
    // Predicated region
    $region38: #{tpu_custom_call.1} parent=1 // pred_check
      _
    $region39: #{tpu_custom_call.1} parent=1 // pred_check_branch
      %83 = sbr.rel (0) target = $region41
    $region40: #{tpu_custom_call.1} parent=1 // pred_region
      %84 = dma.done [#allocation12], 256
    $region41: #{tpu_custom_call.1} parent=1 // pred_fallthru
      _
    %s87 = sshll.u32 1, 14
    %s88 = sxor.u32 4294967295, %s87
    %s90 = sld [smem:[#allocation0]]
    %s91 = sadd.s32 2, %s90
    %s93 = sshll.u32 7, 26
    %s94 = sxor.u32 4294967295, %s93
    %s95 = sand.u32 0, %s94
    %s96 = sshll.u32 %s91, 26
    %s97 = sor.u32 %s95, %s96
    %s98 = sshll.u32 [#allocation2], 4
    %s99 = int_to_ptr.vmem [resolvable:$true] %s98
    %102 = sst [smem:[#allocation16]] 768
    %s103 = scalar_lea.smem [#allocation16], 1
    %104 = sst [smem:[%s103]] 768
    %s105 = scalar_lea.smem [#allocation16], 2
    %106 = sst [smem:[%s105]] 6
    %s107 = scalar_lea.smem [#allocation16], 3
    %108 = sst [smem:[%s107]] 64
    %s109 = scalar_lea.smem [#allocation16], 4
    %110 = sst [smem:[%s109]] 128
    %s111 = scalar_lea.smem [#allocation16], 5
    %112 = sst [smem:[%s111]] 2
    %s113 = scalar_lea.smem [#allocation16], 6
    %114 = sst [smem:[%s113]] 384
    %s115 = scalar_lea.smem [#allocation16], 7
    %116 = sst [smem:[%s115]] 64
    %s117 = scalar_lea.smem [#allocation16], 8
    %118 = sst [smem:[%s117]] 4
    %120 = dma.general %s3, 49152, %s99, [#allocation4], [#allocation15], [#allocation16], %s97, 0
    %s121 = scalar_lea.sflag [#allocation4], 1
    %s123 = sshll.u32 1, 14
    %s124 = sxor.u32 4294967295, %s123
    %s126 = sadd.s32 2, %s90
    %s128 = sshll.u32 7, 26
    %s129 = sxor.u32 4294967295, %s128
    %s130 = sand.u32 0, %s129
    %s131 = sshll.u32 %s126, 26
    %s132 = sor.u32 %s130, %s131
    %s133 = sshll.u32 [#allocation3], 4
    %s134 = int_to_ptr.vmem [resolvable:$true] %s133
    %137 = sst [smem:[#allocation18]] 512
    %s138 = scalar_lea.smem [#allocation18], 1
    %139 = sst [smem:[%s138]] 512
    %s140 = scalar_lea.smem [#allocation18], 2
    %141 = sst [smem:[%s140]] 4
    %s142 = scalar_lea.smem [#allocation18], 3
    %143 = sst [smem:[%s142]] 64
    %s144 = scalar_lea.smem [#allocation18], 4
    %145 = sst [smem:[%s144]] 128
    %s146 = scalar_lea.smem [#allocation18], 5
    %147 = sst [smem:[%s146]] 2
    %s148 = scalar_lea.smem [#allocation18], 6
    %149 = sst [smem:[%s148]] 256
    %s150 = scalar_lea.smem [#allocation18], 7
    %151 = sst [smem:[%s150]] 64
    %s152 = scalar_lea.smem [#allocation18], 8
    %153 = sst [smem:[%s152]] 4
    %155 = dma.general %s5, 24576, %s134, %s121, [#allocation17], [#allocation18], %s132, 0
    %v156 = vld [vmem:[#allocation5] sm:$0xff]
    %v157 = vld [vmem:[#allocation5 + $0x8] sm:$0xff]
    %v158 = vld [vmem:[#allocation5 + $0x10] sm:$0xff]
    %v159 = vld [vmem:[#allocation5 + $0x18] sm:$0xff]
    %v160 = vld [vmem:[#allocation5 + $0x20] sm:$0xff]
    %v161 = vld [vmem:[#allocation5 + $0x28] sm:$0xff]
    %v162 = vld [vmem:[#allocation5 + $0x30] sm:$0xff]
    %v163 = vld [vmem:[#allocation5 + $0x38] sm:$0xff]
    %v164 = vld [vmem:[#allocation8] sm:$0xff]
    %v165 = vld [vmem:[#allocation8 + $0x8] sm:$0xff]
    %v166 = vld [vmem:[#allocation8 + $0x10] sm:$0xff]
    %v167 = vld [vmem:[#allocation8 + $0x18] sm:$0xff]
    %v168 = vld [vmem:[#allocation8 + $0x20] sm:$0xff]
    %v169 = vld [vmem:[#allocation8 + $0x28] sm:$0xff]
    %v170 = vld [vmem:[#allocation8 + $0x30] sm:$0xff]
    %v171 = vld [vmem:[#allocation8 + $0x38] sm:$0xff]
    %v172 = vld [vmem:[#allocation8 + $0x40] sm:$0xff]
    %v173 = vld [vmem:[#allocation8 + $0x48] sm:$0xff]
    %v174 = vld [vmem:[#allocation8 + $0x50] sm:$0xff]
    %v175 = vld [vmem:[#allocation8 + $0x58] sm:$0xff]
    %v176 = vld [vmem:[#allocation8 + $0x60] sm:$0xff]
    %v177 = vld [vmem:[#allocation8 + $0x68] sm:$0xff]
    %v178 = vld [vmem:[#allocation8 + $0x70] sm:$0xff]
    %v179 = vld [vmem:[#allocation8 + $0x78] sm:$0xff]
    %v180 = vld [vmem:[#allocation8 + $0x80] sm:$0xff]
    %v181 = vld [vmem:[#allocation8 + $0x88] sm:$0xff]
    %v182 = vld [vmem:[#allocation8 + $0x90] sm:$0xff]
    %v183 = vld [vmem:[#allocation8 + $0x98] sm:$0xff]
    %v184 = vld [vmem:[#allocation8 + $0xa0] sm:$0xff]
    %v185 = vld [vmem:[#allocation8 + $0xa8] sm:$0xff]
    %v186 = vld [vmem:[#allocation8 + $0xb0] sm:$0xff]
    %v187 = vld [vmem:[#allocation8 + $0xb8] sm:$0xff]
    %v188 = vld [vmem:[#allocation8 + $0xc0] sm:$0xff]
    %v189 = vld [vmem:[#allocation8 + $0xc8] sm:$0xff]
    %v190 = vld [vmem:[#allocation8 + $0xd0] sm:$0xff]
    %v191 = vld [vmem:[#allocation8 + $0xd8] sm:$0xff]
    %v192 = vld [vmem:[#allocation8 + $0xe0] sm:$0xff]
    %v193 = vld [vmem:[#allocation8 + $0xe8] sm:$0xff]
    %v194 = vld [vmem:[#allocation8 + $0xf0] sm:$0xff]
    %v195 = vld [vmem:[#allocation8 + $0xf8] sm:$0xff]
    %v196 = vld [vmem:[#allocation8 + $0x100] sm:$0xff]
    %v197 = vld [vmem:[#allocation8 + $0x108] sm:$0xff]
    %v198 = vld [vmem:[#allocation8 + $0x110] sm:$0xff]
    %v199 = vld [vmem:[#allocation8 + $0x118] sm:$0xff]
    %v200 = vld [vmem:[#allocation8 + $0x120] sm:$0xff]
    %v201 = vld [vmem:[#allocation8 + $0x128] sm:$0xff]
    %v202 = vld [vmem:[#allocation8 + $0x130] sm:$0xff]
    %v203 = vld [vmem:[#allocation8 + $0x138] sm:$0xff]
    %v204 = vld [vmem:[#allocation8 + $0x140] sm:$0xff]
    %v205 = vld [vmem:[#allocation8 + $0x148] sm:$0xff]
    %v206 = vld [vmem:[#allocation8 + $0x150] sm:$0xff]
    %v207 = vld [vmem:[#allocation8 + $0x158] sm:$0xff]
    %v208 = vld [vmem:[#allocation8 + $0x160] sm:$0xff]
    %v209 = vld [vmem:[#allocation8 + $0x168] sm:$0xff]
    %v210 = vld [vmem:[#allocation8 + $0x170] sm:$0xff]
    %v211 = vld [vmem:[#allocation8 + $0x178] sm:$0xff]
    %v212 = vld [vmem:[#allocation8 + $0x180] sm:$0xff]
    %v213 = vld [vmem:[#allocation8 + $0x188] sm:$0xff]
    %v214 = vld [vmem:[#allocation8 + $0x190] sm:$0xff]
    %v215 = vld [vmem:[#allocation8 + $0x198] sm:$0xff]
    %v216 = vld [vmem:[#allocation8 + $0x1a0] sm:$0xff]
    %v217 = vld [vmem:[#allocation8 + $0x1a8] sm:$0xff]
    %v218 = vld [vmem:[#allocation8 + $0x1b0] sm:$0xff]
    %v219 = vld [vmem:[#allocation8 + $0x1b8] sm:$0xff]
    %v220 = vld [vmem:[#allocation8 + $0x1c0] sm:$0xff]
    %v221 = vld [vmem:[#allocation8 + $0x1c8] sm:$0xff]
    %v222 = vld [vmem:[#allocation8 + $0x1d0] sm:$0xff]
    %v223 = vld [vmem:[#allocation8 + $0x1d8] sm:$0xff]
    %v224 = vld [vmem:[#allocation8 + $0x1e0] sm:$0xff]
    %v225 = vld [vmem:[#allocation8 + $0x1e8] sm:$0xff]
    %v226 = vld [vmem:[#allocation8 + $0x1f0] sm:$0xff]
    %v227 = vld [vmem:[#allocation8 + $0x1f8] sm:$0xff]
    %v228 = vld [vmem:[#allocation8 + $0x200] sm:$0xff]
    %v229 = vld [vmem:[#allocation8 + $0x208] sm:$0xff]
    %v230 = vld [vmem:[#allocation8 + $0x210] sm:$0xff]
    %v231 = vld [vmem:[#allocation8 + $0x218] sm:$0xff]
    %v232 = vld [vmem:[#allocation8 + $0x220] sm:$0xff]
    %v233 = vld [vmem:[#allocation8 + $0x228] sm:$0xff]
    %v234 = vld [vmem:[#allocation8 + $0x230] sm:$0xff]
    %v235 = vld [vmem:[#allocation8 + $0x238] sm:$0xff]
    %v236 = vld [vmem:[#allocation8 + $0x240] sm:$0xff]
    %v237 = vld [vmem:[#allocation8 + $0x248] sm:$0xff]
    %v238 = vld [vmem:[#allocation8 + $0x250] sm:$0xff]
    %v239 = vld [vmem:[#allocation8 + $0x258] sm:$0xff]
    %v240 = vld [vmem:[#allocation8 + $0x260] sm:$0xff]
    %v241 = vld [vmem:[#allocation8 + $0x268] sm:$0xff]
    %v242 = vld [vmem:[#allocation8 + $0x270] sm:$0xff]
    %v243 = vld [vmem:[#allocation8 + $0x278] sm:$0xff]
    %v244 = vld [vmem:[#allocation8 + $0x280] sm:$0xff]
    %v245 = vld [vmem:[#allocation8 + $0x288] sm:$0xff]
    %v246 = vld [vmem:[#allocation8 + $0x290] sm:$0xff]
    %v247 = vld [vmem:[#allocation8 + $0x298] sm:$0xff]
    %v248 = vld [vmem:[#allocation8 + $0x2a0] sm:$0xff]
    %v249 = vld [vmem:[#allocation8 + $0x2a8] sm:$0xff]
    %v250 = vld [vmem:[#allocation8 + $0x2b0] sm:$0xff]
    %v251 = vld [vmem:[#allocation8 + $0x2b8] sm:$0xff]
    %v252 = vld [vmem:[#allocation8 + $0x2c0] sm:$0xff]
    %v253 = vld [vmem:[#allocation8 + $0x2c8] sm:$0xff]
    %v254 = vld [vmem:[#allocation8 + $0x2d0] sm:$0xff]
    %v255 = vld [vmem:[#allocation8 + $0x2d8] sm:$0xff]
    %v256 = vld [vmem:[#allocation8 + $0x2e0] sm:$0xff]
    %v257 = vld [vmem:[#allocation8 + $0x2e8] sm:$0xff]
    %v258 = vld [vmem:[#allocation8 + $0x2f0] sm:$0xff]
    %v259 = vld [vmem:[#allocation8 + $0x2f8] sm:$0xff]
    %v260 = vld [vmem:[#allocation8 + $0x300] sm:$0xff]
    %v261 = vld [vmem:[#allocation8 + $0x308] sm:$0xff]
    %v262 = vld [vmem:[#allocation8 + $0x310] sm:$0xff]
    %v263 = vld [vmem:[#allocation8 + $0x318] sm:$0xff]
    %v264 = vld [vmem:[#allocation8 + $0x320] sm:$0xff]
    %v265 = vld [vmem:[#allocation8 + $0x328] sm:$0xff]
    %v266 = vld [vmem:[#allocation8 + $0x330] sm:$0xff]
    %v267 = vld [vmem:[#allocation8 + $0x338] sm:$0xff]
    %v268 = vld [vmem:[#allocation8 + $0x340] sm:$0xff]
    %v269 = vld [vmem:[#allocation8 + $0x348] sm:$0xff]
    %v270 = vld [vmem:[#allocation8 + $0x350] sm:$0xff]
    %v271 = vld [vmem:[#allocation8 + $0x358] sm:$0xff]
    %v272 = vld [vmem:[#allocation8 + $0x360] sm:$0xff]
    %v273 = vld [vmem:[#allocation8 + $0x368] sm:$0xff]
    %v274 = vld [vmem:[#allocation8 + $0x370] sm:$0xff]
    %v275 = vld [vmem:[#allocation8 + $0x378] sm:$0xff]
    %v276 = vld [vmem:[#allocation8 + $0x380] sm:$0xff]
    %v277 = vld [vmem:[#allocation8 + $0x388] sm:$0xff]
    %v278 = vld [vmem:[#allocation8 + $0x390] sm:$0xff]
    %v279 = vld [vmem:[#allocation8 + $0x398] sm:$0xff]
    %v280 = vld [vmem:[#allocation8 + $0x3a0] sm:$0xff]
    %v281 = vld [vmem:[#allocation8 + $0x3a8] sm:$0xff]
    %v282 = vld [vmem:[#allocation8 + $0x3b0] sm:$0xff]
    %v283 = vld [vmem:[#allocation8 + $0x3b8] sm:$0xff]
    %v284 = vld [vmem:[#allocation8 + $0x3c0] sm:$0xff]
    %v285 = vld [vmem:[#allocation8 + $0x3c8] sm:$0xff]
    %v286 = vld [vmem:[#allocation8 + $0x3d0] sm:$0xff]
    %v287 = vld [vmem:[#allocation8 + $0x3d8] sm:$0xff]
    %v288 = vld [vmem:[#allocation8 + $0x3e0] sm:$0xff]
    %v289 = vld [vmem:[#allocation8 + $0x3e8] sm:$0xff]
    %v290 = vld [vmem:[#allocation8 + $0x3f0] sm:$0xff]
    %v291 = vld [vmem:[#allocation8 + $0x3f8] sm:$0xff]
    %v292 = vld [vmem:[#allocation8 + $0x400] sm:$0xff]
    %v293 = vld [vmem:[#allocation8 + $0x408] sm:$0xff]
    %v294 = vld [vmem:[#allocation8 + $0x410] sm:$0xff]
    %v295 = vld [vmem:[#allocation8 + $0x418] sm:$0xff]
    %v296 = vld [vmem:[#allocation8 + $0x420] sm:$0xff]
    %v297 = vld [vmem:[#allocation8 + $0x428] sm:$0xff]
    %v298 = vld [vmem:[#allocation8 + $0x430] sm:$0xff]
    %v299 = vld [vmem:[#allocation8 + $0x438] sm:$0xff]
    %v300 = vld [vmem:[#allocation8 + $0x440] sm:$0xff]
    %v301 = vld [vmem:[#allocation8 + $0x448] sm:$0xff]
    %v302 = vld [vmem:[#allocation8 + $0x450] sm:$0xff]
    %v303 = vld [vmem:[#allocation8 + $0x458] sm:$0xff]
    %v304 = vld [vmem:[#allocation8 + $0x460] sm:$0xff]
    %v305 = vld [vmem:[#allocation8 + $0x468] sm:$0xff]
    %v306 = vld [vmem:[#allocation8 + $0x470] sm:$0xff]
    %v307 = vld [vmem:[#allocation8 + $0x478] sm:$0xff]
    %v308 = vld [vmem:[#allocation8 + $0x480] sm:$0xff]
    %v309 = vld [vmem:[#allocation8 + $0x488] sm:$0xff]
    %v310 = vld [vmem:[#allocation8 + $0x490] sm:$0xff]
    %v311 = vld [vmem:[#allocation8 + $0x498] sm:$0xff]
    %v312 = vld [vmem:[#allocation8 + $0x4a0] sm:$0xff]
    %v313 = vld [vmem:[#allocation8 + $0x4a8] sm:$0xff]
    %v314 = vld [vmem:[#allocation8 + $0x4b0] sm:$0xff]
    %v315 = vld [vmem:[#allocation8 + $0x4b8] sm:$0xff]
    %v316 = vld [vmem:[#allocation8 + $0x4c0] sm:$0xff]
    %v317 = vld [vmem:[#allocation8 + $0x4c8] sm:$0xff]
    %v318 = vld [vmem:[#allocation8 + $0x4d0] sm:$0xff]
    %v319 = vld [vmem:[#allocation8 + $0x4d8] sm:$0xff]
    %v320 = vld [vmem:[#allocation8 + $0x4e0] sm:$0xff]
    %v321 = vld [vmem:[#allocation8 + $0x4e8] sm:$0xff]
    %v322 = vld [vmem:[#allocation8 + $0x4f0] sm:$0xff]
    %v323 = vld [vmem:[#allocation8 + $0x4f8] sm:$0xff]
    %v324 = vld [vmem:[#allocation8 + $0x500] sm:$0xff]
    %v325 = vld [vmem:[#allocation8 + $0x508] sm:$0xff]
    %v326 = vld [vmem:[#allocation8 + $0x510] sm:$0xff]
    %v327 = vld [vmem:[#allocation8 + $0x518] sm:$0xff]
    %v328 = vld [vmem:[#allocation8 + $0x520] sm:$0xff]
    %v329 = vld [vmem:[#allocation8 + $0x528] sm:$0xff]
    %v330 = vld [vmem:[#allocation8 + $0x530] sm:$0xff]
    %v331 = vld [vmem:[#allocation8 + $0x538] sm:$0xff]
    %v332 = vld [vmem:[#allocation8 + $0x540] sm:$0xff]
    %v333 = vld [vmem:[#allocation8 + $0x548] sm:$0xff]
    %v334 = vld [vmem:[#allocation8 + $0x550] sm:$0xff]
    %v335 = vld [vmem:[#allocation8 + $0x558] sm:$0xff]
    %v336 = vld [vmem:[#allocation8 + $0x560] sm:$0xff]
    %v337 = vld [vmem:[#allocation8 + $0x568] sm:$0xff]
    %v338 = vld [vmem:[#allocation8 + $0x570] sm:$0xff]
    %v339 = vld [vmem:[#allocation8 + $0x578] sm:$0xff]
    %v340 = vld [vmem:[#allocation8 + $0x580] sm:$0xff]
    %v341 = vld [vmem:[#allocation8 + $0x588] sm:$0xff]
    %v342 = vld [vmem:[#allocation8 + $0x590] sm:$0xff]
    %v343 = vld [vmem:[#allocation8 + $0x598] sm:$0xff]
    %v344 = vld [vmem:[#allocation8 + $0x5a0] sm:$0xff]
    %v345 = vld [vmem:[#allocation8 + $0x5a8] sm:$0xff]
    %v346 = vld [vmem:[#allocation8 + $0x5b0] sm:$0xff]
    %v347 = vld [vmem:[#allocation8 + $0x5b8] sm:$0xff]
    %v348 = vld [vmem:[#allocation8 + $0x5c0] sm:$0xff]
    %v349 = vld [vmem:[#allocation8 + $0x5c8] sm:$0xff]
    %v350 = vld [vmem:[#allocation8 + $0x5d0] sm:$0xff]
    %v351 = vld [vmem:[#allocation8 + $0x5d8] sm:$0xff]
    %v352 = vld [vmem:[#allocation8 + $0x5e0] sm:$0xff]
    %v353 = vld [vmem:[#allocation8 + $0x5e8] sm:$0xff]
    %v354 = vld [vmem:[#allocation8 + $0x5f0] sm:$0xff]
    %v355 = vld [vmem:[#allocation8 + $0x5f8] sm:$0xff]
    %v356 = vld [vmem:[#allocation8 + $0x600] sm:$0xff]
    %v357 = vld [vmem:[#allocation8 + $0x608] sm:$0xff]
    %v358 = vld [vmem:[#allocation8 + $0x610] sm:$0xff]
    %v359 = vld [vmem:[#allocation8 + $0x618] sm:$0xff]
    %v360 = vld [vmem:[#allocation8 + $0x620] sm:$0xff]
    %v361 = vld [vmem:[#allocation8 + $0x628] sm:$0xff]
    %v362 = vld [vmem:[#allocation8 + $0x630] sm:$0xff]
    %v363 = vld [vmem:[#allocation8 + $0x638] sm:$0xff]
    %v364 = vld [vmem:[#allocation8 + $0x640] sm:$0xff]
    %v365 = vld [vmem:[#allocation8 + $0x648] sm:$0xff]
    %v366 = vld [vmem:[#allocation8 + $0x650] sm:$0xff]
    %v367 = vld [vmem:[#allocation8 + $0x658] sm:$0xff]
    %v368 = vld [vmem:[#allocation8 + $0x660] sm:$0xff]
    %v369 = vld [vmem:[#allocation8 + $0x668] sm:$0xff]
    %v370 = vld [vmem:[#allocation8 + $0x670] sm:$0xff]
    %v371 = vld [vmem:[#allocation8 + $0x678] sm:$0xff]
    %v372 = vld [vmem:[#allocation8 + $0x680] sm:$0xff]
    %v373 = vld [vmem:[#allocation8 + $0x688] sm:$0xff]
    %v374 = vld [vmem:[#allocation8 + $0x690] sm:$0xff]
    %v375 = vld [vmem:[#allocation8 + $0x698] sm:$0xff]
    %v376 = vld [vmem:[#allocation8 + $0x6a0] sm:$0xff]
    %v377 = vld [vmem:[#allocation8 + $0x6a8] sm:$0xff]
    %v378 = vld [vmem:[#allocation8 + $0x6b0] sm:$0xff]
    %v379 = vld [vmem:[#allocation8 + $0x6b8] sm:$0xff]
    %v380 = vld [vmem:[#allocation8 + $0x6c0] sm:$0xff]
    %v381 = vld [vmem:[#allocation8 + $0x6c8] sm:$0xff]
    %v382 = vld [vmem:[#allocation8 + $0x6d0] sm:$0xff]
    %v383 = vld [vmem:[#allocation8 + $0x6d8] sm:$0xff]
    %v384 = vld [vmem:[#allocation8 + $0x6e0] sm:$0xff]
    %v385 = vld [vmem:[#allocation8 + $0x6e8] sm:$0xff]
    %v386 = vld [vmem:[#allocation8 + $0x6f0] sm:$0xff]
    %v387 = vld [vmem:[#allocation8 + $0x6f8] sm:$0xff]
    %v388 = vld [vmem:[#allocation8 + $0x700] sm:$0xff]
    %v389 = vld [vmem:[#allocation8 + $0x708] sm:$0xff]
    %v390 = vld [vmem:[#allocation8 + $0x710] sm:$0xff]
    %v391 = vld [vmem:[#allocation8 + $0x718] sm:$0xff]
    %v392 = vld [vmem:[#allocation8 + $0x720] sm:$0xff]
    %v393 = vld [vmem:[#allocation8 + $0x728] sm:$0xff]
    %v394 = vld [vmem:[#allocation8 + $0x730] sm:$0xff]
    %v395 = vld [vmem:[#allocation8 + $0x738] sm:$0xff]
    %v396 = vld [vmem:[#allocation8 + $0x740] sm:$0xff]
    %v397 = vld [vmem:[#allocation8 + $0x748] sm:$0xff]
    %v398 = vld [vmem:[#allocation8 + $0x750] sm:$0xff]
    %v399 = vld [vmem:[#allocation8 + $0x758] sm:$0xff]
    %v400 = vld [vmem:[#allocation8 + $0x760] sm:$0xff]
    %v401 = vld [vmem:[#allocation8 + $0x768] sm:$0xff]
    %v402 = vld [vmem:[#allocation8 + $0x770] sm:$0xff]
    %v403 = vld [vmem:[#allocation8 + $0x778] sm:$0xff]
    %v404 = vld [vmem:[#allocation8 + $0x780] sm:$0xff]
    %v405 = vld [vmem:[#allocation8 + $0x788] sm:$0xff]
    %v406 = vld [vmem:[#allocation8 + $0x790] sm:$0xff]
    %v407 = vld [vmem:[#allocation8 + $0x798] sm:$0xff]
    %v408 = vld [vmem:[#allocation8 + $0x7a0] sm:$0xff]
    %v409 = vld [vmem:[#allocation8 + $0x7a8] sm:$0xff]
    %v410 = vld [vmem:[#allocation8 + $0x7b0] sm:$0xff]
    %v411 = vld [vmem:[#allocation8 + $0x7b8] sm:$0xff]
    %v412 = vld [vmem:[#allocation8 + $0x7c0] sm:$0xff]
    %v413 = vld [vmem:[#allocation8 + $0x7c8] sm:$0xff]
    %v414 = vld [vmem:[#allocation8 + $0x7d0] sm:$0xff]
    %v415 = vld [vmem:[#allocation8 + $0x7d8] sm:$0xff]
    %v416 = vld [vmem:[#allocation8 + $0x7e0] sm:$0xff]
    %v417 = vld [vmem:[#allocation8 + $0x7e8] sm:$0xff]
    %v418 = vld [vmem:[#allocation8 + $0x7f0] sm:$0xff]
    %v419 = vld [vmem:[#allocation8 + $0x7f8] sm:$0xff]
    %v420 = vld [vmem:[#allocation8 + $0x800] sm:$0xff]
    %v421 = vld [vmem:[#allocation8 + $0x808] sm:$0xff]
    %v422 = vld [vmem:[#allocation8 + $0x810] sm:$0xff]
    %v423 = vld [vmem:[#allocation8 + $0x818] sm:$0xff]
    %v424 = vld [vmem:[#allocation8 + $0x820] sm:$0xff]
    %v425 = vld [vmem:[#allocation8 + $0x828] sm:$0xff]
    %v426 = vld [vmem:[#allocation8 + $0x830] sm:$0xff]
    %v427 = vld [vmem:[#allocation8 + $0x838] sm:$0xff]
    %v428 = vld [vmem:[#allocation8 + $0x840] sm:$0xff]
    %v429 = vld [vmem:[#allocation8 + $0x848] sm:$0xff]
    %v430 = vld [vmem:[#allocation8 + $0x850] sm:$0xff]
    %v431 = vld [vmem:[#allocation8 + $0x858] sm:$0xff]
    %v432 = vld [vmem:[#allocation8 + $0x860] sm:$0xff]
    %v433 = vld [vmem:[#allocation8 + $0x868] sm:$0xff]
    %v434 = vld [vmem:[#allocation8 + $0x870] sm:$0xff]
    %v435 = vld [vmem:[#allocation8 + $0x878] sm:$0xff]
    %v436 = vld [vmem:[#allocation8 + $0x880] sm:$0xff]
    %v437 = vld [vmem:[#allocation8 + $0x888] sm:$0xff]
    %v438 = vld [vmem:[#allocation8 + $0x890] sm:$0xff]
    %v439 = vld [vmem:[#allocation8 + $0x898] sm:$0xff]
    %v440 = vld [vmem:[#allocation8 + $0x8a0] sm:$0xff]
    %v441 = vld [vmem:[#allocation8 + $0x8a8] sm:$0xff]
    %v442 = vld [vmem:[#allocation8 + $0x8b0] sm:$0xff]
    %v443 = vld [vmem:[#allocation8 + $0x8b8] sm:$0xff]
    %v444 = vld [vmem:[#allocation8 + $0x8c0] sm:$0xff]
    %v445 = vld [vmem:[#allocation8 + $0x8c8] sm:$0xff]
    %v446 = vld [vmem:[#allocation8 + $0x8d0] sm:$0xff]
    %v447 = vld [vmem:[#allocation8 + $0x8d8] sm:$0xff]
    %v448 = vld [vmem:[#allocation8 + $0x8e0] sm:$0xff]
    %v449 = vld [vmem:[#allocation8 + $0x8e8] sm:$0xff]
    %v450 = vld [vmem:[#allocation8 + $0x8f0] sm:$0xff]
    %v451 = vld [vmem:[#allocation8 + $0x8f8] sm:$0xff]
    %v452 = vld [vmem:[#allocation8 + $0x900] sm:$0xff]
    %v453 = vld [vmem:[#allocation8 + $0x908] sm:$0xff]
    %v454 = vld [vmem:[#allocation8 + $0x910] sm:$0xff]
    %v455 = vld [vmem:[#allocation8 + $0x918] sm:$0xff]
    %v456 = vld [vmem:[#allocation8 + $0x920] sm:$0xff]
    %v457 = vld [vmem:[#allocation8 + $0x928] sm:$0xff]
    %v458 = vld [vmem:[#allocation8 + $0x930] sm:$0xff]
    %v459 = vld [vmem:[#allocation8 + $0x938] sm:$0xff]
    %v460 = vld [vmem:[#allocation8 + $0x940] sm:$0xff]
    %v461 = vld [vmem:[#allocation8 + $0x948] sm:$0xff]
    %v462 = vld [vmem:[#allocation8 + $0x950] sm:$0xff]
    %v463 = vld [vmem:[#allocation8 + $0x958] sm:$0xff]
    %v464 = vld [vmem:[#allocation8 + $0x960] sm:$0xff]
    %v465 = vld [vmem:[#allocation8 + $0x968] sm:$0xff]
    %v466 = vld [vmem:[#allocation8 + $0x970] sm:$0xff]
    %v467 = vld [vmem:[#allocation8 + $0x978] sm:$0xff]
    %v468 = vld [vmem:[#allocation8 + $0x980] sm:$0xff]
    %v469 = vld [vmem:[#allocation8 + $0x988] sm:$0xff]
    %v470 = vld [vmem:[#allocation8 + $0x990] sm:$0xff]
    %v471 = vld [vmem:[#allocation8 + $0x998] sm:$0xff]
    %v472 = vld [vmem:[#allocation8 + $0x9a0] sm:$0xff]
    %v473 = vld [vmem:[#allocation8 + $0x9a8] sm:$0xff]
    %v474 = vld [vmem:[#allocation8 + $0x9b0] sm:$0xff]
    %v475 = vld [vmem:[#allocation8 + $0x9b8] sm:$0xff]
    %v476 = vld [vmem:[#allocation8 + $0x9c0] sm:$0xff]
    %v477 = vld [vmem:[#allocation8 + $0x9c8] sm:$0xff]
    %v478 = vld [vmem:[#allocation8 + $0x9d0] sm:$0xff]
    %v479 = vld [vmem:[#allocation8 + $0x9d8] sm:$0xff]
    %v480 = vld [vmem:[#allocation8 + $0x9e0] sm:$0xff]
    %v481 = vld [vmem:[#allocation8 + $0x9e8] sm:$0xff]
    %v482 = vld [vmem:[#allocation8 + $0x9f0] sm:$0xff]
    %v483 = vld [vmem:[#allocation8 + $0x9f8] sm:$0xff]
    %v484 = vld [vmem:[#allocation8 + $0xa00] sm:$0xff]
    %v485 = vld [vmem:[#allocation8 + $0xa08] sm:$0xff]
    %v486 = vld [vmem:[#allocation8 + $0xa10] sm:$0xff]
    %v487 = vld [vmem:[#allocation8 + $0xa18] sm:$0xff]
    %v488 = vld [vmem:[#allocation8 + $0xa20] sm:$0xff]
    %v489 = vld [vmem:[#allocation8 + $0xa28] sm:$0xff]
    %v490 = vld [vmem:[#allocation8 + $0xa30] sm:$0xff]
    %v491 = vld [vmem:[#allocation8 + $0xa38] sm:$0xff]
    %v492 = vld [vmem:[#allocation8 + $0xa40] sm:$0xff]
    %v493 = vld [vmem:[#allocation8 + $0xa48] sm:$0xff]
    %v494 = vld [vmem:[#allocation8 + $0xa50] sm:$0xff]
    %v495 = vld [vmem:[#allocation8 + $0xa58] sm:$0xff]
    %v496 = vld [vmem:[#allocation8 + $0xa60] sm:$0xff]
    %v497 = vld [vmem:[#allocation8 + $0xa68] sm:$0xff]
    %v498 = vld [vmem:[#allocation8 + $0xa70] sm:$0xff]
    %v499 = vld [vmem:[#allocation8 + $0xa78] sm:$0xff]
    %v500 = vld [vmem:[#allocation8 + $0xa80] sm:$0xff]
    %v501 = vld [vmem:[#allocation8 + $0xa88] sm:$0xff]
    %v502 = vld [vmem:[#allocation8 + $0xa90] sm:$0xff]
    %v503 = vld [vmem:[#allocation8 + $0xa98] sm:$0xff]
    %v504 = vld [vmem:[#allocation8 + $0xaa0] sm:$0xff]
    %v505 = vld [vmem:[#allocation8 + $0xaa8] sm:$0xff]
    %v506 = vld [vmem:[#allocation8 + $0xab0] sm:$0xff]
    %v507 = vld [vmem:[#allocation8 + $0xab8] sm:$0xff]
    %v508 = vld [vmem:[#allocation8 + $0xac0] sm:$0xff]
    %v509 = vld [vmem:[#allocation8 + $0xac8] sm:$0xff]
    %v510 = vld [vmem:[#allocation8 + $0xad0] sm:$0xff]
    %v511 = vld [vmem:[#allocation8 + $0xad8] sm:$0xff]
    %v512 = vld [vmem:[#allocation8 + $0xae0] sm:$0xff]
    %v513 = vld [vmem:[#allocation8 + $0xae8] sm:$0xff]
    %v514 = vld [vmem:[#allocation8 + $0xaf0] sm:$0xff]
    %v515 = vld [vmem:[#allocation8 + $0xaf8] sm:$0xff]
    %v516 = vld [vmem:[#allocation8 + $0xb00] sm:$0xff]
    %v517 = vld [vmem:[#allocation8 + $0xb08] sm:$0xff]
    %v518 = vld [vmem:[#allocation8 + $0xb10] sm:$0xff]
    %v519 = vld [vmem:[#allocation8 + $0xb18] sm:$0xff]
    %v520 = vld [vmem:[#allocation8 + $0xb20] sm:$0xff]
    %v521 = vld [vmem:[#allocation8 + $0xb28] sm:$0xff]
    %v522 = vld [vmem:[#allocation8 + $0xb30] sm:$0xff]
    %v523 = vld [vmem:[#allocation8 + $0xb38] sm:$0xff]
    %v524 = vld [vmem:[#allocation8 + $0xb40] sm:$0xff]
    %v525 = vld [vmem:[#allocation8 + $0xb48] sm:$0xff]
    %v526 = vld [vmem:[#allocation8 + $0xb50] sm:$0xff]
    %v527 = vld [vmem:[#allocation8 + $0xb58] sm:$0xff]
    %v528 = vld [vmem:[#allocation8 + $0xb60] sm:$0xff]
    %v529 = vld [vmem:[#allocation8 + $0xb68] sm:$0xff]
    %v530 = vld [vmem:[#allocation8 + $0xb70] sm:$0xff]
    %v531 = vld [vmem:[#allocation8 + $0xb78] sm:$0xff]
    %v532 = vld [vmem:[#allocation8 + $0xb80] sm:$0xff]
    %v533 = vld [vmem:[#allocation8 + $0xb88] sm:$0xff]
    %v534 = vld [vmem:[#allocation8 + $0xb90] sm:$0xff]
    %v535 = vld [vmem:[#allocation8 + $0xb98] sm:$0xff]
    %v536 = vld [vmem:[#allocation8 + $0xba0] sm:$0xff]
    %v537 = vld [vmem:[#allocation8 + $0xba8] sm:$0xff]
    %v538 = vld [vmem:[#allocation8 + $0xbb0] sm:$0xff]
    %v539 = vld [vmem:[#allocation8 + $0xbb8] sm:$0xff]
    %v540 = vld [vmem:[#allocation8 + $0xbc0] sm:$0xff]
    %v541 = vld [vmem:[#allocation8 + $0xbc8] sm:$0xff]
    %v542 = vld [vmem:[#allocation8 + $0xbd0] sm:$0xff]
    %v543 = vld [vmem:[#allocation8 + $0xbd8] sm:$0xff]
    %v544 = vld [vmem:[#allocation8 + $0xbe0] sm:$0xff]
    %v545 = vld [vmem:[#allocation8 + $0xbe8] sm:$0xff]
    %v546 = vld [vmem:[#allocation8 + $0xbf0] sm:$0xff]
    %v547 = vld [vmem:[#allocation8 + $0xbf8] sm:$0xff]
    %v548 = vld [vmem:[#allocation8 + $0xc00] sm:$0xff]
    %v549 = vld [vmem:[#allocation8 + $0xc08] sm:$0xff]
    %v550 = vld [vmem:[#allocation8 + $0xc10] sm:$0xff]
    %v551 = vld [vmem:[#allocation8 + $0xc18] sm:$0xff]
    %v552 = vld [vmem:[#allocation8 + $0xc20] sm:$0xff]
    %v553 = vld [vmem:[#allocation8 + $0xc28] sm:$0xff]
    %v554 = vld [vmem:[#allocation8 + $0xc30] sm:$0xff]
    %v555 = vld [vmem:[#allocation8 + $0xc38] sm:$0xff]
    %v556 = vld [vmem:[#allocation8 + $0xc40] sm:$0xff]
    %v557 = vld [vmem:[#allocation8 + $0xc48] sm:$0xff]
    %v558 = vld [vmem:[#allocation8 + $0xc50] sm:$0xff]
    %v559 = vld [vmem:[#allocation8 + $0xc58] sm:$0xff]
    %v560 = vld [vmem:[#allocation8 + $0xc60] sm:$0xff]
    %v561 = vld [vmem:[#allocation8 + $0xc68] sm:$0xff]
    %v562 = vld [vmem:[#allocation8 + $0xc70] sm:$0xff]
    %v563 = vld [vmem:[#allocation8 + $0xc78] sm:$0xff]
    %v564 = vld [vmem:[#allocation8 + $0xc80] sm:$0xff]
    %v565 = vld [vmem:[#allocation8 + $0xc88] sm:$0xff]
    %v566 = vld [vmem:[#allocation8 + $0xc90] sm:$0xff]
    %v567 = vld [vmem:[#allocation8 + $0xc98] sm:$0xff]
    %v568 = vld [vmem:[#allocation8 + $0xca0] sm:$0xff]
    %v569 = vld [vmem:[#allocation8 + $0xca8] sm:$0xff]
    %v570 = vld [vmem:[#allocation8 + $0xcb0] sm:$0xff]
    %v571 = vld [vmem:[#allocation8 + $0xcb8] sm:$0xff]
    %v572 = vld [vmem:[#allocation8 + $0xcc0] sm:$0xff]
    %v573 = vld [vmem:[#allocation8 + $0xcc8] sm:$0xff]
    %v574 = vld [vmem:[#allocation8 + $0xcd0] sm:$0xff]
    %v575 = vld [vmem:[#allocation8 + $0xcd8] sm:$0xff]
    %v576 = vld [vmem:[#allocation8 + $0xce0] sm:$0xff]
    %v577 = vld [vmem:[#allocation8 + $0xce8] sm:$0xff]
    %v578 = vld [vmem:[#allocation8 + $0xcf0] sm:$0xff]
    %v579 = vld [vmem:[#allocation8 + $0xcf8] sm:$0xff]
    %v580 = vld [vmem:[#allocation8 + $0xd00] sm:$0xff]
    %v581 = vld [vmem:[#allocation8 + $0xd08] sm:$0xff]
    %v582 = vld [vmem:[#allocation8 + $0xd10] sm:$0xff]
    %v583 = vld [vmem:[#allocation8 + $0xd18] sm:$0xff]
    %v584 = vld [vmem:[#allocation8 + $0xd20] sm:$0xff]
    %v585 = vld [vmem:[#allocation8 + $0xd28] sm:$0xff]
    %v586 = vld [vmem:[#allocation8 + $0xd30] sm:$0xff]
    %v587 = vld [vmem:[#allocation8 + $0xd38] sm:$0xff]
    %v588 = vld [vmem:[#allocation8 + $0xd40] sm:$0xff]
    %v589 = vld [vmem:[#allocation8 + $0xd48] sm:$0xff]
    %v590 = vld [vmem:[#allocation8 + $0xd50] sm:$0xff]
    %v591 = vld [vmem:[#allocation8 + $0xd58] sm:$0xff]
    %v592 = vld [vmem:[#allocation8 + $0xd60] sm:$0xff]
    %v593 = vld [vmem:[#allocation8 + $0xd68] sm:$0xff]
    %v594 = vld [vmem:[#allocation8 + $0xd70] sm:$0xff]
    %v595 = vld [vmem:[#allocation8 + $0xd78] sm:$0xff]
    %v596 = vld [vmem:[#allocation8 + $0xd80] sm:$0xff]
    %v597 = vld [vmem:[#allocation8 + $0xd88] sm:$0xff]
    %v598 = vld [vmem:[#allocation8 + $0xd90] sm:$0xff]
    %v599 = vld [vmem:[#allocation8 + $0xd98] sm:$0xff]
    %v600 = vld [vmem:[#allocation8 + $0xda0] sm:$0xff]
    %v601 = vld [vmem:[#allocation8 + $0xda8] sm:$0xff]
    %v602 = vld [vmem:[#allocation8 + $0xdb0] sm:$0xff]
    %v603 = vld [vmem:[#allocation8 + $0xdb8] sm:$0xff]
    %v604 = vld [vmem:[#allocation8 + $0xdc0] sm:$0xff]
    %v605 = vld [vmem:[#allocation8 + $0xdc8] sm:$0xff]
    %v606 = vld [vmem:[#allocation8 + $0xdd0] sm:$0xff]
    %v607 = vld [vmem:[#allocation8 + $0xdd8] sm:$0xff]
    %v608 = vld [vmem:[#allocation8 + $0xde0] sm:$0xff]
    %v609 = vld [vmem:[#allocation8 + $0xde8] sm:$0xff]
    %v610 = vld [vmem:[#allocation8 + $0xdf0] sm:$0xff]
    %v611 = vld [vmem:[#allocation8 + $0xdf8] sm:$0xff]
    %v612 = vld [vmem:[#allocation8 + $0xe00] sm:$0xff]
    %v613 = vld [vmem:[#allocation8 + $0xe08] sm:$0xff]
    %v614 = vld [vmem:[#allocation8 + $0xe10] sm:$0xff]
    %v615 = vld [vmem:[#allocation8 + $0xe18] sm:$0xff]
    %v616 = vld [vmem:[#allocation8 + $0xe20] sm:$0xff]
    %v617 = vld [vmem:[#allocation8 + $0xe28] sm:$0xff]
    %v618 = vld [vmem:[#allocation8 + $0xe30] sm:$0xff]
    %v619 = vld [vmem:[#allocation8 + $0xe38] sm:$0xff]
    %v620 = vld [vmem:[#allocation8 + $0xe40] sm:$0xff]
    %v621 = vld [vmem:[#allocation8 + $0xe48] sm:$0xff]
    %v622 = vld [vmem:[#allocation8 + $0xe50] sm:$0xff]
    %v623 = vld [vmem:[#allocation8 + $0xe58] sm:$0xff]
    %v624 = vld [vmem:[#allocation8 + $0xe60] sm:$0xff]
    %v625 = vld [vmem:[#allocation8 + $0xe68] sm:$0xff]
    %v626 = vld [vmem:[#allocation8 + $0xe70] sm:$0xff]
    %v627 = vld [vmem:[#allocation8 + $0xe78] sm:$0xff]
    %v628 = vld [vmem:[#allocation8 + $0xe80] sm:$0xff]
    %v629 = vld [vmem:[#allocation8 + $0xe88] sm:$0xff]
    %v630 = vld [vmem:[#allocation8 + $0xe90] sm:$0xff]
    %v631 = vld [vmem:[#allocation8 + $0xe98] sm:$0xff]
    %v632 = vld [vmem:[#allocation8 + $0xea0] sm:$0xff]
    %v633 = vld [vmem:[#allocation8 + $0xea8] sm:$0xff]
    %v634 = vld [vmem:[#allocation8 + $0xeb0] sm:$0xff]
    %v635 = vld [vmem:[#allocation8 + $0xeb8] sm:$0xff]
    %v636 = vld [vmem:[#allocation8 + $0xec0] sm:$0xff]
    %v637 = vld [vmem:[#allocation8 + $0xec8] sm:$0xff]
    %v638 = vld [vmem:[#allocation8 + $0xed0] sm:$0xff]
    %v639 = vld [vmem:[#allocation8 + $0xed8] sm:$0xff]
    %v640 = vld [vmem:[#allocation8 + $0xee0] sm:$0xff]
    %v641 = vld [vmem:[#allocation8 + $0xee8] sm:$0xff]
    %v642 = vld [vmem:[#allocation8 + $0xef0] sm:$0xff]
    %v643 = vld [vmem:[#allocation8 + $0xef8] sm:$0xff]
    %v644 = vld [vmem:[#allocation8 + $0xf00] sm:$0xff]
    %v645 = vld [vmem:[#allocation8 + $0xf08] sm:$0xff]
    %v646 = vld [vmem:[#allocation8 + $0xf10] sm:$0xff]
    %v647 = vld [vmem:[#allocation8 + $0xf18] sm:$0xff]
    %v648 = vld [vmem:[#allocation8 + $0xf20] sm:$0xff]
    %v649 = vld [vmem:[#allocation8 + $0xf28] sm:$0xff]
    %v650 = vld [vmem:[#allocation8 + $0xf30] sm:$0xff]
    %v651 = vld [vmem:[#allocation8 + $0xf38] sm:$0xff]
    %v652 = vld [vmem:[#allocation8 + $0xf40] sm:$0xff]
    %v653 = vld [vmem:[#allocation8 + $0xf48] sm:$0xff]
    %v654 = vld [vmem:[#allocation8 + $0xf50] sm:$0xff]
    %v655 = vld [vmem:[#allocation8 + $0xf58] sm:$0xff]
    %v656 = vld [vmem:[#allocation8 + $0xf60] sm:$0xff]
    %v657 = vld [vmem:[#allocation8 + $0xf68] sm:$0xff]
    %v658 = vld [vmem:[#allocation8 + $0xf70] sm:$0xff]
    %v659 = vld [vmem:[#allocation8 + $0xf78] sm:$0xff]
    %v660 = vld [vmem:[#allocation8 + $0xf80] sm:$0xff]
    %v661 = vld [vmem:[#allocation8 + $0xf88] sm:$0xff]
    %v662 = vld [vmem:[#allocation8 + $0xf90] sm:$0xff]
    %v663 = vld [vmem:[#allocation8 + $0xf98] sm:$0xff]
    %v664 = vld [vmem:[#allocation8 + $0xfa0] sm:$0xff]
    %v665 = vld [vmem:[#allocation8 + $0xfa8] sm:$0xff]
    %v666 = vld [vmem:[#allocation8 + $0xfb0] sm:$0xff]
    %v667 = vld [vmem:[#allocation8 + $0xfb8] sm:$0xff]
    %v668 = vld [vmem:[#allocation8 + $0xfc0] sm:$0xff]
    %v669 = vld [vmem:[#allocation8 + $0xfc8] sm:$0xff]
    %v670 = vld [vmem:[#allocation8 + $0xfd0] sm:$0xff]
    %v671 = vld [vmem:[#allocation8 + $0xfd8] sm:$0xff]
    %v672 = vld [vmem:[#allocation8 + $0xfe0] sm:$0xff]
    %v673 = vld [vmem:[#allocation8 + $0xfe8] sm:$0xff]
    %v674 = vld [vmem:[#allocation8 + $0xff0] sm:$0xff]
    %v675 = vld [vmem:[#allocation8 + $0xff8] sm:$0xff]
    %v676 = vld [vmem:[#allocation10] sm:$0x77]
    %v677 = vld [vmem:[#allocation10 + $0x8] sm:$0x77]
    %v678 = vld [vmem:[#allocation10 + $0x10] sm:$0x77]
    %v679 = vld [vmem:[#allocation10 + $0x18] sm:$0x77]
    %v684 = vlaneseq
    %v685 = vshrl.u32 %v684, 7
    %v686 = vsub.s32 0, %v685
    %v687 = vrot.slane %v676, %v686
    %v688 = vlaneseq
    %v689 = vshrl.u32 %v688, 7
    %v690 = vsub.s32 4, %v689
    %v691 = vrot.slane %v676, %v690
    %v692 = vlaneseq
    %v693 = vshrl.u32 %v692, 7
    %v694 = vsub.s32 0, %v693
    %v695 = vrot.slane %v677, %v694
    %v696 = vlaneseq
    %v697 = vshrl.u32 %v696, 7
    %v698 = vsub.s32 4, %v697
    %v699 = vrot.slane %v677, %v698
    %v700 = vlaneseq
    %v701 = vshrl.u32 %v700, 7
    %v702 = vsub.s32 0, %v701
    %v703 = vrot.slane %v678, %v702
    %v704 = vlaneseq
    %v705 = vshrl.u32 %v704, 7
    %v706 = vsub.s32 4, %v705
    %v707 = vrot.slane %v678, %v706
    %v708 = vlaneseq
    %v709 = vshrl.u32 %v708, 7
    %v710 = vsub.s32 0, %v709
    %v711 = vrot.slane %v679, %v710
    %v712 = vlaneseq
    %v713 = vshrl.u32 %v712, 7
    %v714 = vsub.s32 4, %v713
    %v715 = vrot.slane %v679, %v714
    %v724 = vlaneseq
    %v725 = vshrl.u32 %v724, 7
    %v726 = vsub.s32 0, %v725
    %v727 = vrot.slane %v687, %v726
    %v728 = vlaneseq
    %v729 = vshrl.u32 %v728, 7
    %v730 = vsub.s32 0, %v729
    %v731 = vrot.slane %v691, %v730
    %v732 = vlaneseq
    %v733 = vshrl.u32 %v732, 7
    %v734 = vsub.s32 0, %v733
    %v735 = vrot.slane %v695, %v734
    %v736 = vlaneseq
    %v737 = vshrl.u32 %v736, 7
    %v738 = vsub.s32 0, %v737
    %v739 = vrot.slane %v699, %v738
    %v740 = vlaneseq
    %v741 = vshrl.u32 %v740, 7
    %v742 = vsub.s32 0, %v741
    %v743 = vrot.slane %v703, %v742
    %v744 = vlaneseq
    %v745 = vshrl.u32 %v744, 7
    %v746 = vsub.s32 0, %v745
    %v747 = vrot.slane %v707, %v746
    %v748 = vlaneseq
    %v749 = vshrl.u32 %v748, 7
    %v750 = vsub.s32 0, %v749
    %v751 = vrot.slane %v711, %v750
    %v752 = vlaneseq
    %v753 = vshrl.u32 %v752, 7
    %v754 = vsub.s32 0, %v753
    %v755 = vrot.slane %v715, %v754
    %v764 = vunpack.c.l.b16 %v156
    %v765 = vunpack.c.h.b16 %v156
    %v766 = vunpack.c.l.b16 %v157
    %v767 = vunpack.c.h.b16 %v157
    %v768 = vunpack.c.l.b16 %v158
    %v769 = vunpack.c.h.b16 %v158
    %v770 = vunpack.c.l.b16 %v159
    %v771 = vunpack.c.h.b16 %v159
    %v772 = vunpack.c.l.b16 %v160
    %v773 = vunpack.c.h.b16 %v160
    %v774 = vunpack.c.l.b16 %v161
    %v775 = vunpack.c.h.b16 %v161
    %v776 = vunpack.c.l.b16 %v162
    %v777 = vunpack.c.h.b16 %v162
    %v778 = vunpack.c.l.b16 %v163
    %v779 = vunpack.c.h.b16 %v163
    %v780 = vpack.c.b16 %v772, %v764
    %v781 = vpack.c.b16 %v773, %v765
    %v782 = vpack.c.b16 %v774, %v766
    %v783 = vpack.c.b16 %v775, %v767
    %v784 = vpack.c.b16 %v776, %v768
    %v785 = vpack.c.b16 %v777, %v769
    %v786 = vpack.c.b16 %v778, %v770
    %v787 = vpack.c.b16 %v779, %v771
    %v1308 = vunpack.c.l.b16 %v164
    %v1309 = vunpack.c.h.b16 %v164
    %v1310 = vunpack.c.l.b16 %v165
    %v1311 = vunpack.c.h.b16 %v165
    %v1312 = vunpack.c.l.b16 %v166
    %v1313 = vunpack.c.h.b16 %v166
    %v1314 = vunpack.c.l.b16 %v167
    %v1315 = vunpack.c.h.b16 %v167
    %v1316 = vunpack.c.l.b16 %v168
    %v1317 = vunpack.c.h.b16 %v168
    %v1318 = vunpack.c.l.b16 %v169
    %v1319 = vunpack.c.h.b16 %v169
    %v1320 = vunpack.c.l.b16 %v170
    %v1321 = vunpack.c.h.b16 %v170
    %v1322 = vunpack.c.l.b16 %v171
    %v1323 = vunpack.c.h.b16 %v171
    %v1324 = vunpack.c.l.b16 %v172
    %v1325 = vunpack.c.h.b16 %v172
    %v1326 = vunpack.c.l.b16 %v173
    %v1327 = vunpack.c.h.b16 %v173
    %v1328 = vunpack.c.l.b16 %v174
    %v1329 = vunpack.c.h.b16 %v174
    %v1330 = vunpack.c.l.b16 %v175
    %v1331 = vunpack.c.h.b16 %v175
    %v1332 = vunpack.c.l.b16 %v176
    %v1333 = vunpack.c.h.b16 %v176
    %v1334 = vunpack.c.l.b16 %v177
    %v1335 = vunpack.c.h.b16 %v177
    %v1336 = vunpack.c.l.b16 %v178
    %v1337 = vunpack.c.h.b16 %v178
    %v1338 = vunpack.c.l.b16 %v179
    %v1339 = vunpack.c.h.b16 %v179
    %v1340 = vunpack.c.l.b16 %v180
    %v1341 = vunpack.c.h.b16 %v180
    %v1342 = vunpack.c.l.b16 %v181
    %v1343 = vunpack.c.h.b16 %v181
    %v1344 = vunpack.c.l.b16 %v182
    %v1345 = vunpack.c.h.b16 %v182
    %v1346 = vunpack.c.l.b16 %v183
    %v1347 = vunpack.c.h.b16 %v183
    %v1348 = vunpack.c.l.b16 %v184
    %v1349 = vunpack.c.h.b16 %v184
    %v1350 = vunpack.c.l.b16 %v185
    %v1351 = vunpack.c.h.b16 %v185
    %v1352 = vunpack.c.l.b16 %v186
    %v1353 = vunpack.c.h.b16 %v186
    %v1354 = vunpack.c.l.b16 %v187
    %v1355 = vunpack.c.h.b16 %v187
    %v1356 = vunpack.c.l.b16 %v188
    %v1357 = vunpack.c.h.b16 %v188
    %v1358 = vunpack.c.l.b16 %v189
    %v1359 = vunpack.c.h.b16 %v189
    %v1360 = vunpack.c.l.b16 %v190
    %v1361 = vunpack.c.h.b16 %v190
    %v1362 = vunpack.c.l.b16 %v191
    %v1363 = vunpack.c.h.b16 %v191
    %v1364 = vunpack.c.l.b16 %v192
    %v1365 = vunpack.c.h.b16 %v192
    %v1366 = vunpack.c.l.b16 %v193
    %v1367 = vunpack.c.h.b16 %v193
    %v1368 = vunpack.c.l.b16 %v194
    %v1369 = vunpack.c.h.b16 %v194
    %v1370 = vunpack.c.l.b16 %v195
    %v1371 = vunpack.c.h.b16 %v195
    %v1372 = vunpack.c.l.b16 %v196
    %v1373 = vunpack.c.h.b16 %v196
    %v1374 = vunpack.c.l.b16 %v197
    %v1375 = vunpack.c.h.b16 %v197
    %v1376 = vunpack.c.l.b16 %v198
    %v1377 = vunpack.c.h.b16 %v198
    %v1378 = vunpack.c.l.b16 %v199
    %v1379 = vunpack.c.h.b16 %v199
    %v1380 = vunpack.c.l.b16 %v200
    %v1381 = vunpack.c.h.b16 %v200
    %v1382 = vunpack.c.l.b16 %v201
    %v1383 = vunpack.c.h.b16 %v201
    %v1384 = vunpack.c.l.b16 %v202
    %v1385 = vunpack.c.h.b16 %v202
    %v1386 = vunpack.c.l.b16 %v203
    %v1387 = vunpack.c.h.b16 %v203
    %v1388 = vunpack.c.l.b16 %v204
    %v1389 = vunpack.c.h.b16 %v204
    %v1390 = vunpack.c.l.b16 %v205
    %v1391 = vunpack.c.h.b16 %v205
    %v1392 = vunpack.c.l.b16 %v206
    %v1393 = vunpack.c.h.b16 %v206
    %v1394 = vunpack.c.l.b16 %v207
    %v1395 = vunpack.c.h.b16 %v207
    %v1396 = vunpack.c.l.b16 %v208
    %v1397 = vunpack.c.h.b16 %v208
    %v1398 = vunpack.c.l.b16 %v209
    %v1399 = vunpack.c.h.b16 %v209
    %v1400 = vunpack.c.l.b16 %v210
    %v1401 = vunpack.c.h.b16 %v210
    %v1402 = vunpack.c.l.b16 %v211
    %v1403 = vunpack.c.h.b16 %v211
    %v1404 = vunpack.c.l.b16 %v212
    %v1405 = vunpack.c.h.b16 %v212
    %v1406 = vunpack.c.l.b16 %v213
    %v1407 = vunpack.c.h.b16 %v213
    %v1408 = vunpack.c.l.b16 %v214
    %v1409 = vunpack.c.h.b16 %v214
    %v1410 = vunpack.c.l.b16 %v215
    %v1411 = vunpack.c.h.b16 %v215
    %v1412 = vunpack.c.l.b16 %v216
    %v1413 = vunpack.c.h.b16 %v216
    %v1414 = vunpack.c.l.b16 %v217
    %v1415 = vunpack.c.h.b16 %v217
    %v1416 = vunpack.c.l.b16 %v218
    %v1417 = vunpack.c.h.b16 %v218
    %v1418 = vunpack.c.l.b16 %v219
    %v1419 = vunpack.c.h.b16 %v219
    %v1420 = vunpack.c.l.b16 %v220
    %v1421 = vunpack.c.h.b16 %v220
    %v1422 = vunpack.c.l.b16 %v221
    %v1423 = vunpack.c.h.b16 %v221
    %v1424 = vunpack.c.l.b16 %v222
    %v1425 = vunpack.c.h.b16 %v222
    %v1426 = vunpack.c.l.b16 %v223
    %v1427 = vunpack.c.h.b16 %v223
    %v1428 = vunpack.c.l.b16 %v224
    %v1429 = vunpack.c.h.b16 %v224
    %v1430 = vunpack.c.l.b16 %v225
    %v1431 = vunpack.c.h.b16 %v225
    %v1432 = vunpack.c.l.b16 %v226
    %v1433 = vunpack.c.h.b16 %v226
    %v1434 = vunpack.c.l.b16 %v227
    %v1435 = vunpack.c.h.b16 %v227
    %v1436 = vunpack.c.l.b16 %v228
    %v1437 = vunpack.c.h.b16 %v228
    %v1438 = vunpack.c.l.b16 %v229
    %v1439 = vunpack.c.h.b16 %v229
    %v1440 = vunpack.c.l.b16 %v230
    %v1441 = vunpack.c.h.b16 %v230
    %v1442 = vunpack.c.l.b16 %v231
    %v1443 = vunpack.c.h.b16 %v231
    %v1444 = vunpack.c.l.b16 %v232
    %v1445 = vunpack.c.h.b16 %v232
    %v1446 = vunpack.c.l.b16 %v233
    %v1447 = vunpack.c.h.b16 %v233
    %v1448 = vunpack.c.l.b16 %v234
    %v1449 = vunpack.c.h.b16 %v234
    %v1450 = vunpack.c.l.b16 %v235
    %v1451 = vunpack.c.h.b16 %v235
    %v1452 = vunpack.c.l.b16 %v236
    %v1453 = vunpack.c.h.b16 %v236
    %v1454 = vunpack.c.l.b16 %v237
    %v1455 = vunpack.c.h.b16 %v237
    %v1456 = vunpack.c.l.b16 %v238
    %v1457 = vunpack.c.h.b16 %v238
    %v1458 = vunpack.c.l.b16 %v239
    %v1459 = vunpack.c.h.b16 %v239
    %v1460 = vunpack.c.l.b16 %v240
    %v1461 = vunpack.c.h.b16 %v240
    %v1462 = vunpack.c.l.b16 %v241
    %v1463 = vunpack.c.h.b16 %v241
    %v1464 = vunpack.c.l.b16 %v242
    %v1465 = vunpack.c.h.b16 %v242
    %v1466 = vunpack.c.l.b16 %v243
    %v1467 = vunpack.c.h.b16 %v243
    %v1468 = vunpack.c.l.b16 %v244
    %v1469 = vunpack.c.h.b16 %v244
    %v1470 = vunpack.c.l.b16 %v245
    %v1471 = vunpack.c.h.b16 %v245
    %v1472 = vunpack.c.l.b16 %v246
    %v1473 = vunpack.c.h.b16 %v246
    %v1474 = vunpack.c.l.b16 %v247
    %v1475 = vunpack.c.h.b16 %v247
    %v1476 = vunpack.c.l.b16 %v248
    %v1477 = vunpack.c.h.b16 %v248
    %v1478 = vunpack.c.l.b16 %v249
    %v1479 = vunpack.c.h.b16 %v249
    %v1480 = vunpack.c.l.b16 %v250
    %v1481 = vunpack.c.h.b16 %v250
    %v1482 = vunpack.c.l.b16 %v251
    %v1483 = vunpack.c.h.b16 %v251
    %v1484 = vunpack.c.l.b16 %v252
    %v1485 = vunpack.c.h.b16 %v252
    %v1486 = vunpack.c.l.b16 %v253
    %v1487 = vunpack.c.h.b16 %v253
    %v1488 = vunpack.c.l.b16 %v254
    %v1489 = vunpack.c.h.b16 %v254
    %v1490 = vunpack.c.l.b16 %v255
    %v1491 = vunpack.c.h.b16 %v255
    %v1492 = vunpack.c.l.b16 %v256
    %v1493 = vunpack.c.h.b16 %v256
    %v1494 = vunpack.c.l.b16 %v257
    %v1495 = vunpack.c.h.b16 %v257
    %v1496 = vunpack.c.l.b16 %v258
    %v1497 = vunpack.c.h.b16 %v258
    %v1498 = vunpack.c.l.b16 %v259
    %v1499 = vunpack.c.h.b16 %v259
    %v1500 = vunpack.c.l.b16 %v260
    %v1501 = vunpack.c.h.b16 %v260
    %v1502 = vunpack.c.l.b16 %v261
    %v1503 = vunpack.c.h.b16 %v261
    %v1504 = vunpack.c.l.b16 %v262
    %v1505 = vunpack.c.h.b16 %v262
    %v1506 = vunpack.c.l.b16 %v263
    %v1507 = vunpack.c.h.b16 %v263
    %v1508 = vunpack.c.l.b16 %v264
    %v1509 = vunpack.c.h.b16 %v264
    %v1510 = vunpack.c.l.b16 %v265
    %v1511 = vunpack.c.h.b16 %v265
    %v1512 = vunpack.c.l.b16 %v266
    %v1513 = vunpack.c.h.b16 %v266
    %v1514 = vunpack.c.l.b16 %v267
    %v1515 = vunpack.c.h.b16 %v267
    %v1516 = vunpack.c.l.b16 %v268
    %v1517 = vunpack.c.h.b16 %v268
    %v1518 = vunpack.c.l.b16 %v269
    %v1519 = vunpack.c.h.b16 %v269
    %v1520 = vunpack.c.l.b16 %v270
    %v1521 = vunpack.c.h.b16 %v270
    %v1522 = vunpack.c.l.b16 %v271
    %v1523 = vunpack.c.h.b16 %v271
    %v1524 = vunpack.c.l.b16 %v272
    %v1525 = vunpack.c.h.b16 %v272
    %v1526 = vunpack.c.l.b16 %v273
    %v1527 = vunpack.c.h.b16 %v273
    %v1528 = vunpack.c.l.b16 %v274
    %v1529 = vunpack.c.h.b16 %v274
    %v1530 = vunpack.c.l.b16 %v275
    %v1531 = vunpack.c.h.b16 %v275
    %v1532 = vunpack.c.l.b16 %v276
    %v1533 = vunpack.c.h.b16 %v276
    %v1534 = vunpack.c.l.b16 %v277
    %v1535 = vunpack.c.h.b16 %v277
    %v1536 = vunpack.c.l.b16 %v278
    %v1537 = vunpack.c.h.b16 %v278
    %v1538 = vunpack.c.l.b16 %v279
    %v1539 = vunpack.c.h.b16 %v279
    %v1540 = vunpack.c.l.b16 %v280
    %v1541 = vunpack.c.h.b16 %v280
    %v1542 = vunpack.c.l.b16 %v281
    %v1543 = vunpack.c.h.b16 %v281
    %v1544 = vunpack.c.l.b16 %v282
    %v1545 = vunpack.c.h.b16 %v282
    %v1546 = vunpack.c.l.b16 %v283
    %v1547 = vunpack.c.h.b16 %v283
    %v1548 = vunpack.c.l.b16 %v284
    %v1549 = vunpack.c.h.b16 %v284
    %v1550 = vunpack.c.l.b16 %v285
    %v1551 = vunpack.c.h.b16 %v285
    %v1552 = vunpack.c.l.b16 %v286
    %v1553 = vunpack.c.h.b16 %v286
    %v1554 = vunpack.c.l.b16 %v287
    %v1555 = vunpack.c.h.b16 %v287
    %v1556 = vunpack.c.l.b16 %v288
    %v1557 = vunpack.c.h.b16 %v288
    %v1558 = vunpack.c.l.b16 %v289
    %v1559 = vunpack.c.h.b16 %v289
    %v1560 = vunpack.c.l.b16 %v290
    %v1561 = vunpack.c.h.b16 %v290
    %v1562 = vunpack.c.l.b16 %v291
    %v1563 = vunpack.c.h.b16 %v291
    %v1564 = vunpack.c.l.b16 %v292
    %v1565 = vunpack.c.h.b16 %v292
    %v1566 = vunpack.c.l.b16 %v293
    %v1567 = vunpack.c.h.b16 %v293
    %v1568 = vunpack.c.l.b16 %v294
    %v1569 = vunpack.c.h.b16 %v294
    %v1570 = vunpack.c.l.b16 %v295
    %v1571 = vunpack.c.h.b16 %v295
    %v1572 = vunpack.c.l.b16 %v296
    %v1573 = vunpack.c.h.b16 %v296
    %v1574 = vunpack.c.l.b16 %v297
    %v1575 = vunpack.c.h.b16 %v297
    %v1576 = vunpack.c.l.b16 %v298
    %v1577 = vunpack.c.h.b16 %v298
    %v1578 = vunpack.c.l.b16 %v299
    %v1579 = vunpack.c.h.b16 %v299
    %v1580 = vunpack.c.l.b16 %v300
    %v1581 = vunpack.c.h.b16 %v300
    %v1582 = vunpack.c.l.b16 %v301
    %v1583 = vunpack.c.h.b16 %v301
    %v1584 = vunpack.c.l.b16 %v302
    %v1585 = vunpack.c.h.b16 %v302
    %v1586 = vunpack.c.l.b16 %v303
    %v1587 = vunpack.c.h.b16 %v303
    %v1588 = vunpack.c.l.b16 %v304
    %v1589 = vunpack.c.h.b16 %v304
    %v1590 = vunpack.c.l.b16 %v305
    %v1591 = vunpack.c.h.b16 %v305
    %v1592 = vunpack.c.l.b16 %v306
    %v1593 = vunpack.c.h.b16 %v306
    %v1594 = vunpack.c.l.b16 %v307
    %v1595 = vunpack.c.h.b16 %v307
    %v1596 = vunpack.c.l.b16 %v308
    %v1597 = vunpack.c.h.b16 %v308
    %v1598 = vunpack.c.l.b16 %v309
    %v1599 = vunpack.c.h.b16 %v309
    %v1600 = vunpack.c.l.b16 %v310
    %v1601 = vunpack.c.h.b16 %v310
    %v1602 = vunpack.c.l.b16 %v311
    %v1603 = vunpack.c.h.b16 %v311
    %v1604 = vunpack.c.l.b16 %v312
    %v1605 = vunpack.c.h.b16 %v312
    %v1606 = vunpack.c.l.b16 %v313
    %v1607 = vunpack.c.h.b16 %v313
    %v1608 = vunpack.c.l.b16 %v314
    %v1609 = vunpack.c.h.b16 %v314
    %v1610 = vunpack.c.l.b16 %v315
    %v1611 = vunpack.c.h.b16 %v315
    %v1612 = vunpack.c.l.b16 %v316
    %v1613 = vunpack.c.h.b16 %v316
    %v1614 = vunpack.c.l.b16 %v317
    %v1615 = vunpack.c.h.b16 %v317
    %v1616 = vunpack.c.l.b16 %v318
    %v1617 = vunpack.c.h.b16 %v318
    %v1618 = vunpack.c.l.b16 %v319
    %v1619 = vunpack.c.h.b16 %v319
    %v1620 = vunpack.c.l.b16 %v320
    %v1621 = vunpack.c.h.b16 %v320
    %v1622 = vunpack.c.l.b16 %v321
    %v1623 = vunpack.c.h.b16 %v321
    %v1624 = vunpack.c.l.b16 %v322
    %v1625 = vunpack.c.h.b16 %v322
    %v1626 = vunpack.c.l.b16 %v323
    %v1627 = vunpack.c.h.b16 %v323
    %v1628 = vunpack.c.l.b16 %v324
    %v1629 = vunpack.c.h.b16 %v324
    %v1630 = vunpack.c.l.b16 %v325
    %v1631 = vunpack.c.h.b16 %v325
    %v1632 = vunpack.c.l.b16 %v326
    %v1633 = vunpack.c.h.b16 %v326
    %v1634 = vunpack.c.l.b16 %v327
    %v1635 = vunpack.c.h.b16 %v327
    %v1636 = vunpack.c.l.b16 %v328
    %v1637 = vunpack.c.h.b16 %v328
    %v1638 = vunpack.c.l.b16 %v329
    %v1639 = vunpack.c.h.b16 %v329
    %v1640 = vunpack.c.l.b16 %v330
    %v1641 = vunpack.c.h.b16 %v330
    %v1642 = vunpack.c.l.b16 %v331
    %v1643 = vunpack.c.h.b16 %v331
    %v1644 = vunpack.c.l.b16 %v332
    %v1645 = vunpack.c.h.b16 %v332
    %v1646 = vunpack.c.l.b16 %v333
    %v1647 = vunpack.c.h.b16 %v333
    %v1648 = vunpack.c.l.b16 %v334
    %v1649 = vunpack.c.h.b16 %v334
    %v1650 = vunpack.c.l.b16 %v335
    %v1651 = vunpack.c.h.b16 %v335
    %v1652 = vunpack.c.l.b16 %v336
    %v1653 = vunpack.c.h.b16 %v336
    %v1654 = vunpack.c.l.b16 %v337
    %v1655 = vunpack.c.h.b16 %v337
    %v1656 = vunpack.c.l.b16 %v338
    %v1657 = vunpack.c.h.b16 %v338
    %v1658 = vunpack.c.l.b16 %v339
    %v1659 = vunpack.c.h.b16 %v339
    %v1660 = vunpack.c.l.b16 %v340
    %v1661 = vunpack.c.h.b16 %v340
    %v1662 = vunpack.c.l.b16 %v341
    %v1663 = vunpack.c.h.b16 %v341
    %v1664 = vunpack.c.l.b16 %v342
    %v1665 = vunpack.c.h.b16 %v342
    %v1666 = vunpack.c.l.b16 %v343
    %v1667 = vunpack.c.h.b16 %v343
    %v1668 = vunpack.c.l.b16 %v344
    %v1669 = vunpack.c.h.b16 %v344
    %v1670 = vunpack.c.l.b16 %v345
    %v1671 = vunpack.c.h.b16 %v345
    %v1672 = vunpack.c.l.b16 %v346
    %v1673 = vunpack.c.h.b16 %v346
    %v1674 = vunpack.c.l.b16 %v347
    %v1675 = vunpack.c.h.b16 %v347
    %v1676 = vunpack.c.l.b16 %v348
    %v1677 = vunpack.c.h.b16 %v348
    %v1678 = vunpack.c.l.b16 %v349
    %v1679 = vunpack.c.h.b16 %v349
    %v1680 = vunpack.c.l.b16 %v350
    %v1681 = vunpack.c.h.b16 %v350
    %v1682 = vunpack.c.l.b16 %v351
    %v1683 = vunpack.c.h.b16 %v351
    %v1684 = vunpack.c.l.b16 %v352
    %v1685 = vunpack.c.h.b16 %v352
    %v1686 = vunpack.c.l.b16 %v353
    %v1687 = vunpack.c.h.b16 %v353
    %v1688 = vunpack.c.l.b16 %v354
    %v1689 = vunpack.c.h.b16 %v354
    %v1690 = vunpack.c.l.b16 %v355
    %v1691 = vunpack.c.h.b16 %v355
    %v1692 = vunpack.c.l.b16 %v356
    %v1693 = vunpack.c.h.b16 %v356
    %v1694 = vunpack.c.l.b16 %v357
    %v1695 = vunpack.c.h.b16 %v357
    %v1696 = vunpack.c.l.b16 %v358
    %v1697 = vunpack.c.h.b16 %v358
    %v1698 = vunpack.c.l.b16 %v359
    %v1699 = vunpack.c.h.b16 %v359
    %v1700 = vunpack.c.l.b16 %v360
    %v1701 = vunpack.c.h.b16 %v360
    %v1702 = vunpack.c.l.b16 %v361
    %v1703 = vunpack.c.h.b16 %v361
    %v1704 = vunpack.c.l.b16 %v362
    %v1705 = vunpack.c.h.b16 %v362
    %v1706 = vunpack.c.l.b16 %v363
    %v1707 = vunpack.c.h.b16 %v363
    %v1708 = vunpack.c.l.b16 %v364
    %v1709 = vunpack.c.h.b16 %v364
    %v1710 = vunpack.c.l.b16 %v365
    %v1711 = vunpack.c.h.b16 %v365
    %v1712 = vunpack.c.l.b16 %v366
    %v1713 = vunpack.c.h.b16 %v366
    %v1714 = vunpack.c.l.b16 %v367
    %v1715 = vunpack.c.h.b16 %v367
    %v1716 = vunpack.c.l.b16 %v368
    %v1717 = vunpack.c.h.b16 %v368
    %v1718 = vunpack.c.l.b16 %v369
    %v1719 = vunpack.c.h.b16 %v369
    %v1720 = vunpack.c.l.b16 %v370
    %v1721 = vunpack.c.h.b16 %v370
    %v1722 = vunpack.c.l.b16 %v371
    %v1723 = vunpack.c.h.b16 %v371
    %v1724 = vunpack.c.l.b16 %v372
    %v1725 = vunpack.c.h.b16 %v372
    %v1726 = vunpack.c.l.b16 %v373
    %v1727 = vunpack.c.h.b16 %v373
    %v1728 = vunpack.c.l.b16 %v374
    %v1729 = vunpack.c.h.b16 %v374
    %v1730 = vunpack.c.l.b16 %v375
    %v1731 = vunpack.c.h.b16 %v375
    %v1732 = vunpack.c.l.b16 %v376
    %v1733 = vunpack.c.h.b16 %v376
    %v1734 = vunpack.c.l.b16 %v377
    %v1735 = vunpack.c.h.b16 %v377
    %v1736 = vunpack.c.l.b16 %v378
    %v1737 = vunpack.c.h.b16 %v378
    %v1738 = vunpack.c.l.b16 %v379
    %v1739 = vunpack.c.h.b16 %v379
    %v1740 = vunpack.c.l.b16 %v380
    %v1741 = vunpack.c.h.b16 %v380
    %v1742 = vunpack.c.l.b16 %v381
    %v1743 = vunpack.c.h.b16 %v381
    %v1744 = vunpack.c.l.b16 %v382
    %v1745 = vunpack.c.h.b16 %v382
    %v1746 = vunpack.c.l.b16 %v383
    %v1747 = vunpack.c.h.b16 %v383
    %v1748 = vunpack.c.l.b16 %v384
    %v1749 = vunpack.c.h.b16 %v384
    %v1750 = vunpack.c.l.b16 %v385
    %v1751 = vunpack.c.h.b16 %v385
    %v1752 = vunpack.c.l.b16 %v386
    %v1753 = vunpack.c.h.b16 %v386
    %v1754 = vunpack.c.l.b16 %v387
    %v1755 = vunpack.c.h.b16 %v387
    %v1756 = vunpack.c.l.b16 %v388
    %v1757 = vunpack.c.h.b16 %v388
    %v1758 = vunpack.c.l.b16 %v389
    %v1759 = vunpack.c.h.b16 %v389
    %v1760 = vunpack.c.l.b16 %v390
    %v1761 = vunpack.c.h.b16 %v390
    %v1762 = vunpack.c.l.b16 %v391
    %v1763 = vunpack.c.h.b16 %v391
    %v1764 = vunpack.c.l.b16 %v392
    %v1765 = vunpack.c.h.b16 %v392
    %v1766 = vunpack.c.l.b16 %v393
    %v1767 = vunpack.c.h.b16 %v393
    %v1768 = vunpack.c.l.b16 %v394
    %v1769 = vunpack.c.h.b16 %v394
    %v1770 = vunpack.c.l.b16 %v395
    %v1771 = vunpack.c.h.b16 %v395
    %v1772 = vunpack.c.l.b16 %v396
    %v1773 = vunpack.c.h.b16 %v396
    %v1774 = vunpack.c.l.b16 %v397
    %v1775 = vunpack.c.h.b16 %v397
    %v1776 = vunpack.c.l.b16 %v398
    %v1777 = vunpack.c.h.b16 %v398
    %v1778 = vunpack.c.l.b16 %v399
    %v1779 = vunpack.c.h.b16 %v399
    %v1780 = vunpack.c.l.b16 %v400
    %v1781 = vunpack.c.h.b16 %v400
    %v1782 = vunpack.c.l.b16 %v401
    %v1783 = vunpack.c.h.b16 %v401
    %v1784 = vunpack.c.l.b16 %v402
    %v1785 = vunpack.c.h.b16 %v402
    %v1786 = vunpack.c.l.b16 %v403
    %v1787 = vunpack.c.h.b16 %v403
    %v1788 = vunpack.c.l.b16 %v404
    %v1789 = vunpack.c.h.b16 %v404
    %v1790 = vunpack.c.l.b16 %v405
    %v1791 = vunpack.c.h.b16 %v405
    %v1792 = vunpack.c.l.b16 %v406
    %v1793 = vunpack.c.h.b16 %v406
    %v1794 = vunpack.c.l.b16 %v407
    %v1795 = vunpack.c.h.b16 %v407
    %v1796 = vunpack.c.l.b16 %v408
    %v1797 = vunpack.c.h.b16 %v408
    %v1798 = vunpack.c.l.b16 %v409
    %v1799 = vunpack.c.h.b16 %v409
    %v1800 = vunpack.c.l.b16 %v410
    %v1801 = vunpack.c.h.b16 %v410
    %v1802 = vunpack.c.l.b16 %v411
    %v1803 = vunpack.c.h.b16 %v411
    %v1804 = vunpack.c.l.b16 %v412
    %v1805 = vunpack.c.h.b16 %v412
    %v1806 = vunpack.c.l.b16 %v413
    %v1807 = vunpack.c.h.b16 %v413
    %v1808 = vunpack.c.l.b16 %v414
    %v1809 = vunpack.c.h.b16 %v414
    %v1810 = vunpack.c.l.b16 %v415
    %v1811 = vunpack.c.h.b16 %v415
    %v1812 = vunpack.c.l.b16 %v416
    %v1813 = vunpack.c.h.b16 %v416
    %v1814 = vunpack.c.l.b16 %v417
    %v1815 = vunpack.c.h.b16 %v417
    %v1816 = vunpack.c.l.b16 %v418
    %v1817 = vunpack.c.h.b16 %v418
    %v1818 = vunpack.c.l.b16 %v419
    %v1819 = vunpack.c.h.b16 %v419
    %v1820 = vunpack.c.l.b16 %v420
    %v1821 = vunpack.c.h.b16 %v420
    %v1822 = vunpack.c.l.b16 %v421
    %v1823 = vunpack.c.h.b16 %v421
    %v1824 = vunpack.c.l.b16 %v422
    %v1825 = vunpack.c.h.b16 %v422
    %v1826 = vunpack.c.l.b16 %v423
    %v1827 = vunpack.c.h.b16 %v423
    %v1828 = vunpack.c.l.b16 %v424
    %v1829 = vunpack.c.h.b16 %v424
    %v1830 = vunpack.c.l.b16 %v425
    %v1831 = vunpack.c.h.b16 %v425
    %v1832 = vunpack.c.l.b16 %v426
    %v1833 = vunpack.c.h.b16 %v426
    %v1834 = vunpack.c.l.b16 %v427
    %v1835 = vunpack.c.h.b16 %v427
    %v1836 = vunpack.c.l.b16 %v428
    %v1837 = vunpack.c.h.b16 %v428
    %v1838 = vunpack.c.l.b16 %v429
    %v1839 = vunpack.c.h.b16 %v429
    %v1840 = vunpack.c.l.b16 %v430
    %v1841 = vunpack.c.h.b16 %v430
    %v1842 = vunpack.c.l.b16 %v431
    %v1843 = vunpack.c.h.b16 %v431
    %v1844 = vunpack.c.l.b16 %v432
    %v1845 = vunpack.c.h.b16 %v432
    %v1846 = vunpack.c.l.b16 %v433
    %v1847 = vunpack.c.h.b16 %v433
    %v1848 = vunpack.c.l.b16 %v434
    %v1849 = vunpack.c.h.b16 %v434
    %v1850 = vunpack.c.l.b16 %v435
    %v1851 = vunpack.c.h.b16 %v435
    %v1852 = vunpack.c.l.b16 %v436
    %v1853 = vunpack.c.h.b16 %v436
    %v1854 = vunpack.c.l.b16 %v437
    %v1855 = vunpack.c.h.b16 %v437
    %v1856 = vunpack.c.l.b16 %v438
    %v1857 = vunpack.c.h.b16 %v438
    %v1858 = vunpack.c.l.b16 %v439
    %v1859 = vunpack.c.h.b16 %v439
    %v1860 = vunpack.c.l.b16 %v440
    %v1861 = vunpack.c.h.b16 %v440
    %v1862 = vunpack.c.l.b16 %v441
    %v1863 = vunpack.c.h.b16 %v441
    %v1864 = vunpack.c.l.b16 %v442
    %v1865 = vunpack.c.h.b16 %v442
    %v1866 = vunpack.c.l.b16 %v443
    %v1867 = vunpack.c.h.b16 %v443
    %v1868 = vunpack.c.l.b16 %v444
    %v1869 = vunpack.c.h.b16 %v444
    %v1870 = vunpack.c.l.b16 %v445
    %v1871 = vunpack.c.h.b16 %v445
    %v1872 = vunpack.c.l.b16 %v446
    %v1873 = vunpack.c.h.b16 %v446
    %v1874 = vunpack.c.l.b16 %v447
    %v1875 = vunpack.c.h.b16 %v447
    %v1876 = vunpack.c.l.b16 %v448
    %v1877 = vunpack.c.h.b16 %v448
    %v1878 = vunpack.c.l.b16 %v449
    %v1879 = vunpack.c.h.b16 %v449
    %v1880 = vunpack.c.l.b16 %v450
    %v1881 = vunpack.c.h.b16 %v450
    %v1882 = vunpack.c.l.b16 %v451
    %v1883 = vunpack.c.h.b16 %v451
    %v1884 = vunpack.c.l.b16 %v452
    %v1885 = vunpack.c.h.b16 %v452
    %v1886 = vunpack.c.l.b16 %v453
    %v1887 = vunpack.c.h.b16 %v453
    %v1888 = vunpack.c.l.b16 %v454
    %v1889 = vunpack.c.h.b16 %v454
    %v1890 = vunpack.c.l.b16 %v455
    %v1891 = vunpack.c.h.b16 %v455
    %v1892 = vunpack.c.l.b16 %v456
    %v1893 = vunpack.c.h.b16 %v456
    %v1894 = vunpack.c.l.b16 %v457
    %v1895 = vunpack.c.h.b16 %v457
    %v1896 = vunpack.c.l.b16 %v458
    %v1897 = vunpack.c.h.b16 %v458
    %v1898 = vunpack.c.l.b16 %v459
    %v1899 = vunpack.c.h.b16 %v459
    %v1900 = vunpack.c.l.b16 %v460
    %v1901 = vunpack.c.h.b16 %v460
    %v1902 = vunpack.c.l.b16 %v461
    %v1903 = vunpack.c.h.b16 %v461
    %v1904 = vunpack.c.l.b16 %v462
    %v1905 = vunpack.c.h.b16 %v462
    %v1906 = vunpack.c.l.b16 %v463
    %v1907 = vunpack.c.h.b16 %v463
    %v1908 = vunpack.c.l.b16 %v464
    %v1909 = vunpack.c.h.b16 %v464
    %v1910 = vunpack.c.l.b16 %v465
    %v1911 = vunpack.c.h.b16 %v465
    %v1912 = vunpack.c.l.b16 %v466
    %v1913 = vunpack.c.h.b16 %v466
    %v1914 = vunpack.c.l.b16 %v467
    %v1915 = vunpack.c.h.b16 %v467
    %v1916 = vunpack.c.l.b16 %v468
    %v1917 = vunpack.c.h.b16 %v468
    %v1918 = vunpack.c.l.b16 %v469
    %v1919 = vunpack.c.h.b16 %v469
    %v1920 = vunpack.c.l.b16 %v470
    %v1921 = vunpack.c.h.b16 %v470
    %v1922 = vunpack.c.l.b16 %v471
    %v1923 = vunpack.c.h.b16 %v471
    %v1924 = vunpack.c.l.b16 %v472
    %v1925 = vunpack.c.h.b16 %v472
    %v1926 = vunpack.c.l.b16 %v473
    %v1927 = vunpack.c.h.b16 %v473
    %v1928 = vunpack.c.l.b16 %v474
    %v1929 = vunpack.c.h.b16 %v474
    %v1930 = vunpack.c.l.b16 %v475
    %v1931 = vunpack.c.h.b16 %v475
    %v1932 = vunpack.c.l.b16 %v476
    %v1933 = vunpack.c.h.b16 %v476
    %v1934 = vunpack.c.l.b16 %v477
    %v1935 = vunpack.c.h.b16 %v477
    %v1936 = vunpack.c.l.b16 %v478
    %v1937 = vunpack.c.h.b16 %v478
    %v1938 = vunpack.c.l.b16 %v479
    %v1939 = vunpack.c.h.b16 %v479
    %v1940 = vunpack.c.l.b16 %v480
    %v1941 = vunpack.c.h.b16 %v480
    %v1942 = vunpack.c.l.b16 %v481
    %v1943 = vunpack.c.h.b16 %v481
    %v1944 = vunpack.c.l.b16 %v482
    %v1945 = vunpack.c.h.b16 %v482
    %v1946 = vunpack.c.l.b16 %v483
    %v1947 = vunpack.c.h.b16 %v483
    %v1948 = vunpack.c.l.b16 %v484
    %v1949 = vunpack.c.h.b16 %v484
    %v1950 = vunpack.c.l.b16 %v485
    %v1951 = vunpack.c.h.b16 %v485
    %v1952 = vunpack.c.l.b16 %v486
    %v1953 = vunpack.c.h.b16 %v486
    %v1954 = vunpack.c.l.b16 %v487
    %v1955 = vunpack.c.h.b16 %v487
    %v1956 = vunpack.c.l.b16 %v488
    %v1957 = vunpack.c.h.b16 %v488
    %v1958 = vunpack.c.l.b16 %v489
    %v1959 = vunpack.c.h.b16 %v489
    %v1960 = vunpack.c.l.b16 %v490
    %v1961 = vunpack.c.h.b16 %v490
    %v1962 = vunpack.c.l.b16 %v491
    %v1963 = vunpack.c.h.b16 %v491
    %v1964 = vunpack.c.l.b16 %v492
    %v1965 = vunpack.c.h.b16 %v492
    %v1966 = vunpack.c.l.b16 %v493
    %v1967 = vunpack.c.h.b16 %v493
    %v1968 = vunpack.c.l.b16 %v494
    %v1969 = vunpack.c.h.b16 %v494
    %v1970 = vunpack.c.l.b16 %v495
    %v1971 = vunpack.c.h.b16 %v495
    %v1972 = vunpack.c.l.b16 %v496
    %v1973 = vunpack.c.h.b16 %v496
    %v1974 = vunpack.c.l.b16 %v497
    %v1975 = vunpack.c.h.b16 %v497
    %v1976 = vunpack.c.l.b16 %v498
    %v1977 = vunpack.c.h.b16 %v498
    %v1978 = vunpack.c.l.b16 %v499
    %v1979 = vunpack.c.h.b16 %v499
    %v1980 = vunpack.c.l.b16 %v500
    %v1981 = vunpack.c.h.b16 %v500
    %v1982 = vunpack.c.l.b16 %v501
    %v1983 = vunpack.c.h.b16 %v501
    %v1984 = vunpack.c.l.b16 %v502
    %v1985 = vunpack.c.h.b16 %v502
    %v1986 = vunpack.c.l.b16 %v503
    %v1987 = vunpack.c.h.b16 %v503
    %v1988 = vunpack.c.l.b16 %v504
    %v1989 = vunpack.c.h.b16 %v504
    %v1990 = vunpack.c.l.b16 %v505
    %v1991 = vunpack.c.h.b16 %v505
    %v1992 = vunpack.c.l.b16 %v506
    %v1993 = vunpack.c.h.b16 %v506
    %v1994 = vunpack.c.l.b16 %v507
    %v1995 = vunpack.c.h.b16 %v507
    %v1996 = vunpack.c.l.b16 %v508
    %v1997 = vunpack.c.h.b16 %v508
    %v1998 = vunpack.c.l.b16 %v509
    %v1999 = vunpack.c.h.b16 %v509
    %v2000 = vunpack.c.l.b16 %v510
    %v2001 = vunpack.c.h.b16 %v510
    %v2002 = vunpack.c.l.b16 %v511
    %v2003 = vunpack.c.h.b16 %v511
    %v2004 = vunpack.c.l.b16 %v512
    %v2005 = vunpack.c.h.b16 %v512
    %v2006 = vunpack.c.l.b16 %v513
    %v2007 = vunpack.c.h.b16 %v513
    %v2008 = vunpack.c.l.b16 %v514
    %v2009 = vunpack.c.h.b16 %v514
    %v2010 = vunpack.c.l.b16 %v515
    %v2011 = vunpack.c.h.b16 %v515
    %v2012 = vunpack.c.l.b16 %v516
    %v2013 = vunpack.c.h.b16 %v516
    %v2014 = vunpack.c.l.b16 %v517
    %v2015 = vunpack.c.h.b16 %v517
    %v2016 = vunpack.c.l.b16 %v518
    %v2017 = vunpack.c.h.b16 %v518
    %v2018 = vunpack.c.l.b16 %v519
    %v2019 = vunpack.c.h.b16 %v519
    %v2020 = vunpack.c.l.b16 %v520
    %v2021 = vunpack.c.h.b16 %v520
    %v2022 = vunpack.c.l.b16 %v521
    %v2023 = vunpack.c.h.b16 %v521
    %v2024 = vunpack.c.l.b16 %v522
    %v2025 = vunpack.c.h.b16 %v522
    %v2026 = vunpack.c.l.b16 %v523
    %v2027 = vunpack.c.h.b16 %v523
    %v2028 = vunpack.c.l.b16 %v524
    %v2029 = vunpack.c.h.b16 %v524
    %v2030 = vunpack.c.l.b16 %v525
    %v2031 = vunpack.c.h.b16 %v525
    %v2032 = vunpack.c.l.b16 %v526
    %v2033 = vunpack.c.h.b16 %v526
    %v2034 = vunpack.c.l.b16 %v527
    %v2035 = vunpack.c.h.b16 %v527
    %v2036 = vunpack.c.l.b16 %v528
    %v2037 = vunpack.c.h.b16 %v528
    %v2038 = vunpack.c.l.b16 %v529
    %v2039 = vunpack.c.h.b16 %v529
    %v2040 = vunpack.c.l.b16 %v530
    %v2041 = vunpack.c.h.b16 %v530
    %v2042 = vunpack.c.l.b16 %v531
    %v2043 = vunpack.c.h.b16 %v531
    %v2044 = vunpack.c.l.b16 %v532
    %v2045 = vunpack.c.h.b16 %v532
    %v2046 = vunpack.c.l.b16 %v533
    %v2047 = vunpack.c.h.b16 %v533
    %v2048 = vunpack.c.l.b16 %v534
    %v2049 = vunpack.c.h.b16 %v534
    %v2050 = vunpack.c.l.b16 %v535
    %v2051 = vunpack.c.h.b16 %v535
    %v2052 = vunpack.c.l.b16 %v536
    %v2053 = vunpack.c.h.b16 %v536
    %v2054 = vunpack.c.l.b16 %v537
    %v2055 = vunpack.c.h.b16 %v537
    %v2056 = vunpack.c.l.b16 %v538
    %v2057 = vunpack.c.h.b16 %v538
    %v2058 = vunpack.c.l.b16 %v539
    %v2059 = vunpack.c.h.b16 %v539
    %v2060 = vunpack.c.l.b16 %v540
    %v2061 = vunpack.c.h.b16 %v540
    %v2062 = vunpack.c.l.b16 %v541
    %v2063 = vunpack.c.h.b16 %v541
    %v2064 = vunpack.c.l.b16 %v542
    %v2065 = vunpack.c.h.b16 %v542
    %v2066 = vunpack.c.l.b16 %v543
    %v2067 = vunpack.c.h.b16 %v543
    %v2068 = vunpack.c.l.b16 %v544
    %v2069 = vunpack.c.h.b16 %v544
    %v2070 = vunpack.c.l.b16 %v545
    %v2071 = vunpack.c.h.b16 %v545
    %v2072 = vunpack.c.l.b16 %v546
    %v2073 = vunpack.c.h.b16 %v546
    %v2074 = vunpack.c.l.b16 %v547
    %v2075 = vunpack.c.h.b16 %v547
    %v2076 = vunpack.c.l.b16 %v548
    %v2077 = vunpack.c.h.b16 %v548
    %v2078 = vunpack.c.l.b16 %v549
    %v2079 = vunpack.c.h.b16 %v549
    %v2080 = vunpack.c.l.b16 %v550
    %v2081 = vunpack.c.h.b16 %v550
    %v2082 = vunpack.c.l.b16 %v551
    %v2083 = vunpack.c.h.b16 %v551
    %v2084 = vunpack.c.l.b16 %v552
    %v2085 = vunpack.c.h.b16 %v552
    %v2086 = vunpack.c.l.b16 %v553
    %v2087 = vunpack.c.h.b16 %v553
    %v2088 = vunpack.c.l.b16 %v554
    %v2089 = vunpack.c.h.b16 %v554
    %v2090 = vunpack.c.l.b16 %v555
    %v2091 = vunpack.c.h.b16 %v555
    %v2092 = vunpack.c.l.b16 %v556
    %v2093 = vunpack.c.h.b16 %v556
    %v2094 = vunpack.c.l.b16 %v557
    %v2095 = vunpack.c.h.b16 %v557
    %v2096 = vunpack.c.l.b16 %v558
    %v2097 = vunpack.c.h.b16 %v558
    %v2098 = vunpack.c.l.b16 %v559
    %v2099 = vunpack.c.h.b16 %v559
    %v2100 = vunpack.c.l.b16 %v560
    %v2101 = vunpack.c.h.b16 %v560
    %v2102 = vunpack.c.l.b16 %v561
    %v2103 = vunpack.c.h.b16 %v561
    %v2104 = vunpack.c.l.b16 %v562
    %v2105 = vunpack.c.h.b16 %v562
    %v2106 = vunpack.c.l.b16 %v563
    %v2107 = vunpack.c.h.b16 %v563
    %v2108 = vunpack.c.l.b16 %v564
    %v2109 = vunpack.c.h.b16 %v564
    %v2110 = vunpack.c.l.b16 %v565
    %v2111 = vunpack.c.h.b16 %v565
    %v2112 = vunpack.c.l.b16 %v566
    %v2113 = vunpack.c.h.b16 %v566
    %v2114 = vunpack.c.l.b16 %v567
    %v2115 = vunpack.c.h.b16 %v567
    %v2116 = vunpack.c.l.b16 %v568
    %v2117 = vunpack.c.h.b16 %v568
    %v2118 = vunpack.c.l.b16 %v569
    %v2119 = vunpack.c.h.b16 %v569
    %v2120 = vunpack.c.l.b16 %v570
    %v2121 = vunpack.c.h.b16 %v570
    %v2122 = vunpack.c.l.b16 %v571
    %v2123 = vunpack.c.h.b16 %v571
    %v2124 = vunpack.c.l.b16 %v572
    %v2125 = vunpack.c.h.b16 %v572
    %v2126 = vunpack.c.l.b16 %v573
    %v2127 = vunpack.c.h.b16 %v573
    %v2128 = vunpack.c.l.b16 %v574
    %v2129 = vunpack.c.h.b16 %v574
    %v2130 = vunpack.c.l.b16 %v575
    %v2131 = vunpack.c.h.b16 %v575
    %v2132 = vunpack.c.l.b16 %v576
    %v2133 = vunpack.c.h.b16 %v576
    %v2134 = vunpack.c.l.b16 %v577
    %v2135 = vunpack.c.h.b16 %v577
    %v2136 = vunpack.c.l.b16 %v578
    %v2137 = vunpack.c.h.b16 %v578
    %v2138 = vunpack.c.l.b16 %v579
    %v2139 = vunpack.c.h.b16 %v579
    %v2140 = vunpack.c.l.b16 %v580
    %v2141 = vunpack.c.h.b16 %v580
    %v2142 = vunpack.c.l.b16 %v581
    %v2143 = vunpack.c.h.b16 %v581
    %v2144 = vunpack.c.l.b16 %v582
    %v2145 = vunpack.c.h.b16 %v582
    %v2146 = vunpack.c.l.b16 %v583
    %v2147 = vunpack.c.h.b16 %v583
    %v2148 = vunpack.c.l.b16 %v584
    %v2149 = vunpack.c.h.b16 %v584
    %v2150 = vunpack.c.l.b16 %v585
    %v2151 = vunpack.c.h.b16 %v585
    %v2152 = vunpack.c.l.b16 %v586
    %v2153 = vunpack.c.h.b16 %v586
    %v2154 = vunpack.c.l.b16 %v587
    %v2155 = vunpack.c.h.b16 %v587
    %v2156 = vunpack.c.l.b16 %v588
    %v2157 = vunpack.c.h.b16 %v588
    %v2158 = vunpack.c.l.b16 %v589
    %v2159 = vunpack.c.h.b16 %v589
    %v2160 = vunpack.c.l.b16 %v590
    %v2161 = vunpack.c.h.b16 %v590
    %v2162 = vunpack.c.l.b16 %v591
    %v2163 = vunpack.c.h.b16 %v591
    %v2164 = vunpack.c.l.b16 %v592
    %v2165 = vunpack.c.h.b16 %v592
    %v2166 = vunpack.c.l.b16 %v593
    %v2167 = vunpack.c.h.b16 %v593
    %v2168 = vunpack.c.l.b16 %v594
    %v2169 = vunpack.c.h.b16 %v594
    %v2170 = vunpack.c.l.b16 %v595
    %v2171 = vunpack.c.h.b16 %v595
    %v2172 = vunpack.c.l.b16 %v596
    %v2173 = vunpack.c.h.b16 %v596
    %v2174 = vunpack.c.l.b16 %v597
    %v2175 = vunpack.c.h.b16 %v597
    %v2176 = vunpack.c.l.b16 %v598
    %v2177 = vunpack.c.h.b16 %v598
    %v2178 = vunpack.c.l.b16 %v599
    %v2179 = vunpack.c.h.b16 %v599
    %v2180 = vunpack.c.l.b16 %v600
    %v2181 = vunpack.c.h.b16 %v600
    %v2182 = vunpack.c.l.b16 %v601
    %v2183 = vunpack.c.h.b16 %v601
    %v2184 = vunpack.c.l.b16 %v602
    %v2185 = vunpack.c.h.b16 %v602
    %v2186 = vunpack.c.l.b16 %v603
    %v2187 = vunpack.c.h.b16 %v603
    %v2188 = vunpack.c.l.b16 %v604
    %v2189 = vunpack.c.h.b16 %v604
    %v2190 = vunpack.c.l.b16 %v605
    %v2191 = vunpack.c.h.b16 %v605
    %v2192 = vunpack.c.l.b16 %v606
    %v2193 = vunpack.c.h.b16 %v606
    %v2194 = vunpack.c.l.b16 %v607
    %v2195 = vunpack.c.h.b16 %v607
    %v2196 = vunpack.c.l.b16 %v608
    %v2197 = vunpack.c.h.b16 %v608
    %v2198 = vunpack.c.l.b16 %v609
    %v2199 = vunpack.c.h.b16 %v609
    %v2200 = vunpack.c.l.b16 %v610
    %v2201 = vunpack.c.h.b16 %v610
    %v2202 = vunpack.c.l.b16 %v611
    %v2203 = vunpack.c.h.b16 %v611
    %v2204 = vunpack.c.l.b16 %v612
    %v2205 = vunpack.c.h.b16 %v612
    %v2206 = vunpack.c.l.b16 %v613
    %v2207 = vunpack.c.h.b16 %v613
    %v2208 = vunpack.c.l.b16 %v614
    %v2209 = vunpack.c.h.b16 %v614
    %v2210 = vunpack.c.l.b16 %v615
    %v2211 = vunpack.c.h.b16 %v615
    %v2212 = vunpack.c.l.b16 %v616
    %v2213 = vunpack.c.h.b16 %v616
    %v2214 = vunpack.c.l.b16 %v617
    %v2215 = vunpack.c.h.b16 %v617
    %v2216 = vunpack.c.l.b16 %v618
    %v2217 = vunpack.c.h.b16 %v618
    %v2218 = vunpack.c.l.b16 %v619
    %v2219 = vunpack.c.h.b16 %v619
    %v2220 = vunpack.c.l.b16 %v620
    %v2221 = vunpack.c.h.b16 %v620
    %v2222 = vunpack.c.l.b16 %v621
    %v2223 = vunpack.c.h.b16 %v621
    %v2224 = vunpack.c.l.b16 %v622
    %v2225 = vunpack.c.h.b16 %v622
    %v2226 = vunpack.c.l.b16 %v623
    %v2227 = vunpack.c.h.b16 %v623
    %v2228 = vunpack.c.l.b16 %v624
    %v2229 = vunpack.c.h.b16 %v624
    %v2230 = vunpack.c.l.b16 %v625
    %v2231 = vunpack.c.h.b16 %v625
    %v2232 = vunpack.c.l.b16 %v626
    %v2233 = vunpack.c.h.b16 %v626
    %v2234 = vunpack.c.l.b16 %v627
    %v2235 = vunpack.c.h.b16 %v627
    %v2236 = vunpack.c.l.b16 %v628
    %v2237 = vunpack.c.h.b16 %v628
    %v2238 = vunpack.c.l.b16 %v629
    %v2239 = vunpack.c.h.b16 %v629
    %v2240 = vunpack.c.l.b16 %v630
    %v2241 = vunpack.c.h.b16 %v630
    %v2242 = vunpack.c.l.b16 %v631
    %v2243 = vunpack.c.h.b16 %v631
    %v2244 = vunpack.c.l.b16 %v632
    %v2245 = vunpack.c.h.b16 %v632
    %v2246 = vunpack.c.l.b16 %v633
    %v2247 = vunpack.c.h.b16 %v633
    %v2248 = vunpack.c.l.b16 %v634
    %v2249 = vunpack.c.h.b16 %v634
    %v2250 = vunpack.c.l.b16 %v635
    %v2251 = vunpack.c.h.b16 %v635
    %v2252 = vunpack.c.l.b16 %v636
    %v2253 = vunpack.c.h.b16 %v636
    %v2254 = vunpack.c.l.b16 %v637
    %v2255 = vunpack.c.h.b16 %v637
    %v2256 = vunpack.c.l.b16 %v638
    %v2257 = vunpack.c.h.b16 %v638
    %v2258 = vunpack.c.l.b16 %v639
    %v2259 = vunpack.c.h.b16 %v639
    %v2260 = vunpack.c.l.b16 %v640
    %v2261 = vunpack.c.h.b16 %v640
    %v2262 = vunpack.c.l.b16 %v641
    %v2263 = vunpack.c.h.b16 %v641
    %v2264 = vunpack.c.l.b16 %v642
    %v2265 = vunpack.c.h.b16 %v642
    %v2266 = vunpack.c.l.b16 %v643
    %v2267 = vunpack.c.h.b16 %v643
    %v2268 = vunpack.c.l.b16 %v644
    %v2269 = vunpack.c.h.b16 %v644
    %v2270 = vunpack.c.l.b16 %v645
    %v2271 = vunpack.c.h.b16 %v645
    %v2272 = vunpack.c.l.b16 %v646
    %v2273 = vunpack.c.h.b16 %v646
    %v2274 = vunpack.c.l.b16 %v647
    %v2275 = vunpack.c.h.b16 %v647
    %v2276 = vunpack.c.l.b16 %v648
    %v2277 = vunpack.c.h.b16 %v648
    %v2278 = vunpack.c.l.b16 %v649
    %v2279 = vunpack.c.h.b16 %v649
    %v2280 = vunpack.c.l.b16 %v650
    %v2281 = vunpack.c.h.b16 %v650
    %v2282 = vunpack.c.l.b16 %v651
    %v2283 = vunpack.c.h.b16 %v651
    %v2284 = vunpack.c.l.b16 %v652
    %v2285 = vunpack.c.h.b16 %v652
    %v2286 = vunpack.c.l.b16 %v653
    %v2287 = vunpack.c.h.b16 %v653
    %v2288 = vunpack.c.l.b16 %v654
    %v2289 = vunpack.c.h.b16 %v654
    %v2290 = vunpack.c.l.b16 %v655
    %v2291 = vunpack.c.h.b16 %v655
    %v2292 = vunpack.c.l.b16 %v656
    %v2293 = vunpack.c.h.b16 %v656
    %v2294 = vunpack.c.l.b16 %v657
    %v2295 = vunpack.c.h.b16 %v657
    %v2296 = vunpack.c.l.b16 %v658
    %v2297 = vunpack.c.h.b16 %v658
    %v2298 = vunpack.c.l.b16 %v659
    %v2299 = vunpack.c.h.b16 %v659
    %v2300 = vunpack.c.l.b16 %v660
    %v2301 = vunpack.c.h.b16 %v660
    %v2302 = vunpack.c.l.b16 %v661
    %v2303 = vunpack.c.h.b16 %v661
    %v2304 = vunpack.c.l.b16 %v662
    %v2305 = vunpack.c.h.b16 %v662
    %v2306 = vunpack.c.l.b16 %v663
    %v2307 = vunpack.c.h.b16 %v663
    %v2308 = vunpack.c.l.b16 %v664
    %v2309 = vunpack.c.h.b16 %v664
    %v2310 = vunpack.c.l.b16 %v665
    %v2311 = vunpack.c.h.b16 %v665
    %v2312 = vunpack.c.l.b16 %v666
    %v2313 = vunpack.c.h.b16 %v666
    %v2314 = vunpack.c.l.b16 %v667
    %v2315 = vunpack.c.h.b16 %v667
    %v2316 = vunpack.c.l.b16 %v668
    %v2317 = vunpack.c.h.b16 %v668
    %v2318 = vunpack.c.l.b16 %v669
    %v2319 = vunpack.c.h.b16 %v669
    %v2320 = vunpack.c.l.b16 %v670
    %v2321 = vunpack.c.h.b16 %v670
    %v2322 = vunpack.c.l.b16 %v671
    %v2323 = vunpack.c.h.b16 %v671
    %v2324 = vunpack.c.l.b16 %v672
    %v2325 = vunpack.c.h.b16 %v672
    %v2326 = vunpack.c.l.b16 %v673
    %v2327 = vunpack.c.h.b16 %v673
    %v2328 = vunpack.c.l.b16 %v674
    %v2329 = vunpack.c.h.b16 %v674
    %v2330 = vunpack.c.l.b16 %v675
    %v2331 = vunpack.c.h.b16 %v675
    %v2332 = vpack.c.b16 %v1316, %v1308
    %v2333 = vpack.c.b16 %v1317, %v1309
    %v2334 = vpack.c.b16 %v1318, %v1310
    %v2335 = vpack.c.b16 %v1319, %v1311
    %v2336 = vpack.c.b16 %v1320, %v1312
    %v2337 = vpack.c.b16 %v1321, %v1313
    %v2338 = vpack.c.b16 %v1322, %v1314
    %v2339 = vpack.c.b16 %v1323, %v1315
    %v2340 = vpack.c.b16 %v1332, %v1324
    %v2341 = vpack.c.b16 %v1333, %v1325
    %v2342 = vpack.c.b16 %v1334, %v1326
    %v2343 = vpack.c.b16 %v1335, %v1327
    %v2344 = vpack.c.b16 %v1336, %v1328
    %v2345 = vpack.c.b16 %v1337, %v1329
    %v2346 = vpack.c.b16 %v1338, %v1330
    %v2347 = vpack.c.b16 %v1339, %v1331
    %v2348 = vpack.c.b16 %v1348, %v1340
    %v2349 = vpack.c.b16 %v1349, %v1341
    %v2350 = vpack.c.b16 %v1350, %v1342
    %v2351 = vpack.c.b16 %v1351, %v1343
    %v2352 = vpack.c.b16 %v1352, %v1344
    %v2353 = vpack.c.b16 %v1353, %v1345
    %v2354 = vpack.c.b16 %v1354, %v1346
    %v2355 = vpack.c.b16 %v1355, %v1347
    %v2356 = vpack.c.b16 %v1364, %v1356
    %v2357 = vpack.c.b16 %v1365, %v1357
    %v2358 = vpack.c.b16 %v1366, %v1358
    %v2359 = vpack.c.b16 %v1367, %v1359
    %v2360 = vpack.c.b16 %v1368, %v1360
    %v2361 = vpack.c.b16 %v1369, %v1361
    %v2362 = vpack.c.b16 %v1370, %v1362
    %v2363 = vpack.c.b16 %v1371, %v1363
    %v2364 = vpack.c.b16 %v1380, %v1372
    %v2365 = vpack.c.b16 %v1381, %v1373
    %v2366 = vpack.c.b16 %v1382, %v1374
    %v2367 = vpack.c.b16 %v1383, %v1375
    %v2368 = vpack.c.b16 %v1384, %v1376
    %v2369 = vpack.c.b16 %v1385, %v1377
    %v2370 = vpack.c.b16 %v1386, %v1378
    %v2371 = vpack.c.b16 %v1387, %v1379
    %v2372 = vpack.c.b16 %v1396, %v1388
    %v2373 = vpack.c.b16 %v1397, %v1389
    %v2374 = vpack.c.b16 %v1398, %v1390
    %v2375 = vpack.c.b16 %v1399, %v1391
    %v2376 = vpack.c.b16 %v1400, %v1392
    %v2377 = vpack.c.b16 %v1401, %v1393
    %v2378 = vpack.c.b16 %v1402, %v1394
    %v2379 = vpack.c.b16 %v1403, %v1395
    %v2380 = vpack.c.b16 %v1412, %v1404
    %v2381 = vpack.c.b16 %v1413, %v1405
    %v2382 = vpack.c.b16 %v1414, %v1406
    %v2383 = vpack.c.b16 %v1415, %v1407
    %v2384 = vpack.c.b16 %v1416, %v1408
    %v2385 = vpack.c.b16 %v1417, %v1409
    %v2386 = vpack.c.b16 %v1418, %v1410
    %v2387 = vpack.c.b16 %v1419, %v1411
    %v2388 = vpack.c.b16 %v1428, %v1420
    %v2389 = vpack.c.b16 %v1429, %v1421
    %v2390 = vpack.c.b16 %v1430, %v1422
    %v2391 = vpack.c.b16 %v1431, %v1423
    %v2392 = vpack.c.b16 %v1432, %v1424
    %v2393 = vpack.c.b16 %v1433, %v1425
    %v2394 = vpack.c.b16 %v1434, %v1426
    %v2395 = vpack.c.b16 %v1435, %v1427
    %v2396 = vpack.c.b16 %v1444, %v1436
    %v2397 = vpack.c.b16 %v1445, %v1437
    %v2398 = vpack.c.b16 %v1446, %v1438
    %v2399 = vpack.c.b16 %v1447, %v1439
    %v2400 = vpack.c.b16 %v1448, %v1440
    %v2401 = vpack.c.b16 %v1449, %v1441
    %v2402 = vpack.c.b16 %v1450, %v1442
    %v2403 = vpack.c.b16 %v1451, %v1443
    %v2404 = vpack.c.b16 %v1460, %v1452
    %v2405 = vpack.c.b16 %v1461, %v1453
    %v2406 = vpack.c.b16 %v1462, %v1454
    %v2407 = vpack.c.b16 %v1463, %v1455
    %v2408 = vpack.c.b16 %v1464, %v1456
    %v2409 = vpack.c.b16 %v1465, %v1457
    %v2410 = vpack.c.b16 %v1466, %v1458
    %v2411 = vpack.c.b16 %v1467, %v1459
    %v2412 = vpack.c.b16 %v1476, %v1468
    %v2413 = vpack.c.b16 %v1477, %v1469
    %v2414 = vpack.c.b16 %v1478, %v1470
    %v2415 = vpack.c.b16 %v1479, %v1471
    %v2416 = vpack.c.b16 %v1480, %v1472
    %v2417 = vpack.c.b16 %v1481, %v1473
    %v2418 = vpack.c.b16 %v1482, %v1474
    %v2419 = vpack.c.b16 %v1483, %v1475
    %v2420 = vpack.c.b16 %v1492, %v1484
    %v2421 = vpack.c.b16 %v1493, %v1485
    %v2422 = vpack.c.b16 %v1494, %v1486
    %v2423 = vpack.c.b16 %v1495, %v1487
    %v2424 = vpack.c.b16 %v1496, %v1488
    %v2425 = vpack.c.b16 %v1497, %v1489
    %v2426 = vpack.c.b16 %v1498, %v1490
    %v2427 = vpack.c.b16 %v1499, %v1491
    %v2428 = vpack.c.b16 %v1508, %v1500
    %v2429 = vpack.c.b16 %v1509, %v1501
    %v2430 = vpack.c.b16 %v1510, %v1502
    %v2431 = vpack.c.b16 %v1511, %v1503
    %v2432 = vpack.c.b16 %v1512, %v1504
    %v2433 = vpack.c.b16 %v1513, %v1505
    %v2434 = vpack.c.b16 %v1514, %v1506
    %v2435 = vpack.c.b16 %v1515, %v1507
    %v2436 = vpack.c.b16 %v1524, %v1516
    %v2437 = vpack.c.b16 %v1525, %v1517
    %v2438 = vpack.c.b16 %v1526, %v1518
    %v2439 = vpack.c.b16 %v1527, %v1519
    %v2440 = vpack.c.b16 %v1528, %v1520
    %v2441 = vpack.c.b16 %v1529, %v1521
    %v2442 = vpack.c.b16 %v1530, %v1522
    %v2443 = vpack.c.b16 %v1531, %v1523
    %v2444 = vpack.c.b16 %v1540, %v1532
    %v2445 = vpack.c.b16 %v1541, %v1533
    %v2446 = vpack.c.b16 %v1542, %v1534
    %v2447 = vpack.c.b16 %v1543, %v1535
    %v2448 = vpack.c.b16 %v1544, %v1536
    %v2449 = vpack.c.b16 %v1545, %v1537
    %v2450 = vpack.c.b16 %v1546, %v1538
    %v2451 = vpack.c.b16 %v1547, %v1539
    %v2452 = vpack.c.b16 %v1556, %v1548
    %v2453 = vpack.c.b16 %v1557, %v1549
    %v2454 = vpack.c.b16 %v1558, %v1550
    %v2455 = vpack.c.b16 %v1559, %v1551
    %v2456 = vpack.c.b16 %v1560, %v1552
    %v2457 = vpack.c.b16 %v1561, %v1553
    %v2458 = vpack.c.b16 %v1562, %v1554
    %v2459 = vpack.c.b16 %v1563, %v1555
    %v2460 = vpack.c.b16 %v1572, %v1564
    %v2461 = vpack.c.b16 %v1573, %v1565
    %v2462 = vpack.c.b16 %v1574, %v1566
    %v2463 = vpack.c.b16 %v1575, %v1567
    %v2464 = vpack.c.b16 %v1576, %v1568
    %v2465 = vpack.c.b16 %v1577, %v1569
    %v2466 = vpack.c.b16 %v1578, %v1570
    %v2467 = vpack.c.b16 %v1579, %v1571
    %v2468 = vpack.c.b16 %v1588, %v1580
    %v2469 = vpack.c.b16 %v1589, %v1581
    %v2470 = vpack.c.b16 %v1590, %v1582
    %v2471 = vpack.c.b16 %v1591, %v1583
    %v2472 = vpack.c.b16 %v1592, %v1584
    %v2473 = vpack.c.b16 %v1593, %v1585
    %v2474 = vpack.c.b16 %v1594, %v1586
    %v2475 = vpack.c.b16 %v1595, %v1587
    %v2476 = vpack.c.b16 %v1604, %v1596
    %v2477 = vpack.c.b16 %v1605, %v1597
    %v2478 = vpack.c.b16 %v1606, %v1598
    %v2479 = vpack.c.b16 %v1607, %v1599
    %v2480 = vpack.c.b16 %v1608, %v1600
    %v2481 = vpack.c.b16 %v1609, %v1601
    %v2482 = vpack.c.b16 %v1610, %v1602
    %v2483 = vpack.c.b16 %v1611, %v1603
    %v2484 = vpack.c.b16 %v1620, %v1612
    %v2485 = vpack.c.b16 %v1621, %v1613
    %v2486 = vpack.c.b16 %v1622, %v1614
    %v2487 = vpack.c.b16 %v1623, %v1615
    %v2488 = vpack.c.b16 %v1624, %v1616
    %v2489 = vpack.c.b16 %v1625, %v1617
    %v2490 = vpack.c.b16 %v1626, %v1618
    %v2491 = vpack.c.b16 %v1627, %v1619
    %v2492 = vpack.c.b16 %v1636, %v1628
    %v2493 = vpack.c.b16 %v1637, %v1629
    %v2494 = vpack.c.b16 %v1638, %v1630
    %v2495 = vpack.c.b16 %v1639, %v1631
    %v2496 = vpack.c.b16 %v1640, %v1632
    %v2497 = vpack.c.b16 %v1641, %v1633
    %v2498 = vpack.c.b16 %v1642, %v1634
    %v2499 = vpack.c.b16 %v1643, %v1635
    %v2500 = vpack.c.b16 %v1652, %v1644
    %v2501 = vpack.c.b16 %v1653, %v1645
    %v2502 = vpack.c.b16 %v1654, %v1646
    %v2503 = vpack.c.b16 %v1655, %v1647
    %v2504 = vpack.c.b16 %v1656, %v1648
    %v2505 = vpack.c.b16 %v1657, %v1649
    %v2506 = vpack.c.b16 %v1658, %v1650
    %v2507 = vpack.c.b16 %v1659, %v1651
    %v2508 = vpack.c.b16 %v1668, %v1660
    %v2509 = vpack.c.b16 %v1669, %v1661
    %v2510 = vpack.c.b16 %v1670, %v1662
    %v2511 = vpack.c.b16 %v1671, %v1663
    %v2512 = vpack.c.b16 %v1672, %v1664
    %v2513 = vpack.c.b16 %v1673, %v1665
    %v2514 = vpack.c.b16 %v1674, %v1666
    %v2515 = vpack.c.b16 %v1675, %v1667
    %v2516 = vpack.c.b16 %v1684, %v1676
    %v2517 = vpack.c.b16 %v1685, %v1677
    %v2518 = vpack.c.b16 %v1686, %v1678
    %v2519 = vpack.c.b16 %v1687, %v1679
    %v2520 = vpack.c.b16 %v1688, %v1680
    %v2521 = vpack.c.b16 %v1689, %v1681
    %v2522 = vpack.c.b16 %v1690, %v1682
    %v2523 = vpack.c.b16 %v1691, %v1683
    %v2524 = vpack.c.b16 %v1700, %v1692
    %v2525 = vpack.c.b16 %v1701, %v1693
    %v2526 = vpack.c.b16 %v1702, %v1694
    %v2527 = vpack.c.b16 %v1703, %v1695
    %v2528 = vpack.c.b16 %v1704, %v1696
    %v2529 = vpack.c.b16 %v1705, %v1697
    %v2530 = vpack.c.b16 %v1706, %v1698
    %v2531 = vpack.c.b16 %v1707, %v1699
    %v2532 = vpack.c.b16 %v1716, %v1708
    %v2533 = vpack.c.b16 %v1717, %v1709
    %v2534 = vpack.c.b16 %v1718, %v1710
    %v2535 = vpack.c.b16 %v1719, %v1711
    %v2536 = vpack.c.b16 %v1720, %v1712
    %v2537 = vpack.c.b16 %v1721, %v1713
    %v2538 = vpack.c.b16 %v1722, %v1714
    %v2539 = vpack.c.b16 %v1723, %v1715
    %v2540 = vpack.c.b16 %v1732, %v1724
    %v2541 = vpack.c.b16 %v1733, %v1725
    %v2542 = vpack.c.b16 %v1734, %v1726
    %v2543 = vpack.c.b16 %v1735, %v1727
    %v2544 = vpack.c.b16 %v1736, %v1728
    %v2545 = vpack.c.b16 %v1737, %v1729
    %v2546 = vpack.c.b16 %v1738, %v1730
    %v2547 = vpack.c.b16 %v1739, %v1731
    %v2548 = vpack.c.b16 %v1748, %v1740
    %v2549 = vpack.c.b16 %v1749, %v1741
    %v2550 = vpack.c.b16 %v1750, %v1742
    %v2551 = vpack.c.b16 %v1751, %v1743
    %v2552 = vpack.c.b16 %v1752, %v1744
    %v2553 = vpack.c.b16 %v1753, %v1745
    %v2554 = vpack.c.b16 %v1754, %v1746
    %v2555 = vpack.c.b16 %v1755, %v1747
    %v2556 = vpack.c.b16 %v1764, %v1756
    %v2557 = vpack.c.b16 %v1765, %v1757
    %v2558 = vpack.c.b16 %v1766, %v1758
    %v2559 = vpack.c.b16 %v1767, %v1759
    %v2560 = vpack.c.b16 %v1768, %v1760
    %v2561 = vpack.c.b16 %v1769, %v1761
    %v2562 = vpack.c.b16 %v1770, %v1762
    %v2563 = vpack.c.b16 %v1771, %v1763
    %v2564 = vpack.c.b16 %v1780, %v1772
    %v2565 = vpack.c.b16 %v1781, %v1773
    %v2566 = vpack.c.b16 %v1782, %v1774
    %v2567 = vpack.c.b16 %v1783, %v1775
    %v2568 = vpack.c.b16 %v1784, %v1776
    %v2569 = vpack.c.b16 %v1785, %v1777
    %v2570 = vpack.c.b16 %v1786, %v1778
    %v2571 = vpack.c.b16 %v1787, %v1779
    %v2572 = vpack.c.b16 %v1796, %v1788
    %v2573 = vpack.c.b16 %v1797, %v1789
    %v2574 = vpack.c.b16 %v1798, %v1790
    %v2575 = vpack.c.b16 %v1799, %v1791
    %v2576 = vpack.c.b16 %v1800, %v1792
    %v2577 = vpack.c.b16 %v1801, %v1793
    %v2578 = vpack.c.b16 %v1802, %v1794
    %v2579 = vpack.c.b16 %v1803, %v1795
    %v2580 = vpack.c.b16 %v1812, %v1804
    %v2581 = vpack.c.b16 %v1813, %v1805
    %v2582 = vpack.c.b16 %v1814, %v1806
    %v2583 = vpack.c.b16 %v1815, %v1807
    %v2584 = vpack.c.b16 %v1816, %v1808
    %v2585 = vpack.c.b16 %v1817, %v1809
    %v2586 = vpack.c.b16 %v1818, %v1810
    %v2587 = vpack.c.b16 %v1819, %v1811
    %v2588 = vpack.c.b16 %v1828, %v1820
    %v2589 = vpack.c.b16 %v1829, %v1821
    %v2590 = vpack.c.b16 %v1830, %v1822
    %v2591 = vpack.c.b16 %v1831, %v1823
    %v2592 = vpack.c.b16 %v1832, %v1824
    %v2593 = vpack.c.b16 %v1833, %v1825
    %v2594 = vpack.c.b16 %v1834, %v1826
    %v2595 = vpack.c.b16 %v1835, %v1827
    %v2596 = vpack.c.b16 %v1844, %v1836
    %v2597 = vpack.c.b16 %v1845, %v1837
    %v2598 = vpack.c.b16 %v1846, %v1838
    %v2599 = vpack.c.b16 %v1847, %v1839
    %v2600 = vpack.c.b16 %v1848, %v1840
    %v2601 = vpack.c.b16 %v1849, %v1841
    %v2602 = vpack.c.b16 %v1850, %v1842
    %v2603 = vpack.c.b16 %v1851, %v1843
    %v2604 = vpack.c.b16 %v1860, %v1852
    %v2605 = vpack.c.b16 %v1861, %v1853
    %v2606 = vpack.c.b16 %v1862, %v1854
    %v2607 = vpack.c.b16 %v1863, %v1855
    %v2608 = vpack.c.b16 %v1864, %v1856
    %v2609 = vpack.c.b16 %v1865, %v1857
    %v2610 = vpack.c.b16 %v1866, %v1858
    %v2611 = vpack.c.b16 %v1867, %v1859
    %v2612 = vpack.c.b16 %v1876, %v1868
    %v2613 = vpack.c.b16 %v1877, %v1869
    %v2614 = vpack.c.b16 %v1878, %v1870
    %v2615 = vpack.c.b16 %v1879, %v1871
    %v2616 = vpack.c.b16 %v1880, %v1872
    %v2617 = vpack.c.b16 %v1881, %v1873
    %v2618 = vpack.c.b16 %v1882, %v1874
    %v2619 = vpack.c.b16 %v1883, %v1875
    %v2620 = vpack.c.b16 %v1892, %v1884
    %v2621 = vpack.c.b16 %v1893, %v1885
    %v2622 = vpack.c.b16 %v1894, %v1886
    %v2623 = vpack.c.b16 %v1895, %v1887
    %v2624 = vpack.c.b16 %v1896, %v1888
    %v2625 = vpack.c.b16 %v1897, %v1889
    %v2626 = vpack.c.b16 %v1898, %v1890
    %v2627 = vpack.c.b16 %v1899, %v1891
    %v2628 = vpack.c.b16 %v1908, %v1900
    %v2629 = vpack.c.b16 %v1909, %v1901
    %v2630 = vpack.c.b16 %v1910, %v1902
    %v2631 = vpack.c.b16 %v1911, %v1903
    %v2632 = vpack.c.b16 %v1912, %v1904
    %v2633 = vpack.c.b16 %v1913, %v1905
    %v2634 = vpack.c.b16 %v1914, %v1906
    %v2635 = vpack.c.b16 %v1915, %v1907
    %v2636 = vpack.c.b16 %v1924, %v1916
    %v2637 = vpack.c.b16 %v1925, %v1917
    %v2638 = vpack.c.b16 %v1926, %v1918
    %v2639 = vpack.c.b16 %v1927, %v1919
    %v2640 = vpack.c.b16 %v1928, %v1920
    %v2641 = vpack.c.b16 %v1929, %v1921
    %v2642 = vpack.c.b16 %v1930, %v1922
    %v2643 = vpack.c.b16 %v1931, %v1923
    %v2644 = vpack.c.b16 %v1940, %v1932
    %v2645 = vpack.c.b16 %v1941, %v1933
    %v2646 = vpack.c.b16 %v1942, %v1934
    %v2647 = vpack.c.b16 %v1943, %v1935
    %v2648 = vpack.c.b16 %v1944, %v1936
    %v2649 = vpack.c.b16 %v1945, %v1937
    %v2650 = vpack.c.b16 %v1946, %v1938
    %v2651 = vpack.c.b16 %v1947, %v1939
    %v2652 = vpack.c.b16 %v1956, %v1948
    %v2653 = vpack.c.b16 %v1957, %v1949
    %v2654 = vpack.c.b16 %v1958, %v1950
    %v2655 = vpack.c.b16 %v1959, %v1951
    %v2656 = vpack.c.b16 %v1960, %v1952
    %v2657 = vpack.c.b16 %v1961, %v1953
    %v2658 = vpack.c.b16 %v1962, %v1954
    %v2659 = vpack.c.b16 %v1963, %v1955
    %v2660 = vpack.c.b16 %v1972, %v1964
    %v2661 = vpack.c.b16 %v1973, %v1965
    %v2662 = vpack.c.b16 %v1974, %v1966
    %v2663 = vpack.c.b16 %v1975, %v1967
    %v2664 = vpack.c.b16 %v1976, %v1968
    %v2665 = vpack.c.b16 %v1977, %v1969
    %v2666 = vpack.c.b16 %v1978, %v1970
    %v2667 = vpack.c.b16 %v1979, %v1971
    %v2668 = vpack.c.b16 %v1988, %v1980
    %v2669 = vpack.c.b16 %v1989, %v1981
    %v2670 = vpack.c.b16 %v1990, %v1982
    %v2671 = vpack.c.b16 %v1991, %v1983
    %v2672 = vpack.c.b16 %v1992, %v1984
    %v2673 = vpack.c.b16 %v1993, %v1985
    %v2674 = vpack.c.b16 %v1994, %v1986
    %v2675 = vpack.c.b16 %v1995, %v1987
    %v2676 = vpack.c.b16 %v2004, %v1996
    %v2677 = vpack.c.b16 %v2005, %v1997
    %v2678 = vpack.c.b16 %v2006, %v1998
    %v2679 = vpack.c.b16 %v2007, %v1999
    %v2680 = vpack.c.b16 %v2008, %v2000
    %v2681 = vpack.c.b16 %v2009, %v2001
    %v2682 = vpack.c.b16 %v2010, %v2002
    %v2683 = vpack.c.b16 %v2011, %v2003
    %v2684 = vpack.c.b16 %v2020, %v2012
    %v2685 = vpack.c.b16 %v2021, %v2013
    %v2686 = vpack.c.b16 %v2022, %v2014
    %v2687 = vpack.c.b16 %v2023, %v2015
    %v2688 = vpack.c.b16 %v2024, %v2016
    %v2689 = vpack.c.b16 %v2025, %v2017
    %v2690 = vpack.c.b16 %v2026, %v2018
    %v2691 = vpack.c.b16 %v2027, %v2019
    %v2692 = vpack.c.b16 %v2036, %v2028
    %v2693 = vpack.c.b16 %v2037, %v2029
    %v2694 = vpack.c.b16 %v2038, %v2030
    %v2695 = vpack.c.b16 %v2039, %v2031
    %v2696 = vpack.c.b16 %v2040, %v2032
    %v2697 = vpack.c.b16 %v2041, %v2033
    %v2698 = vpack.c.b16 %v2042, %v2034
    %v2699 = vpack.c.b16 %v2043, %v2035
    %v2700 = vpack.c.b16 %v2052, %v2044
    %v2701 = vpack.c.b16 %v2053, %v2045
    %v2702 = vpack.c.b16 %v2054, %v2046
    %v2703 = vpack.c.b16 %v2055, %v2047
    %v2704 = vpack.c.b16 %v2056, %v2048
    %v2705 = vpack.c.b16 %v2057, %v2049
    %v2706 = vpack.c.b16 %v2058, %v2050
    %v2707 = vpack.c.b16 %v2059, %v2051
    %v2708 = vpack.c.b16 %v2068, %v2060
    %v2709 = vpack.c.b16 %v2069, %v2061
    %v2710 = vpack.c.b16 %v2070, %v2062
    %v2711 = vpack.c.b16 %v2071, %v2063
    %v2712 = vpack.c.b16 %v2072, %v2064
    %v2713 = vpack.c.b16 %v2073, %v2065
    %v2714 = vpack.c.b16 %v2074, %v2066
    %v2715 = vpack.c.b16 %v2075, %v2067
    %v2716 = vpack.c.b16 %v2084, %v2076
    %v2717 = vpack.c.b16 %v2085, %v2077
    %v2718 = vpack.c.b16 %v2086, %v2078
    %v2719 = vpack.c.b16 %v2087, %v2079
    %v2720 = vpack.c.b16 %v2088, %v2080
    %v2721 = vpack.c.b16 %v2089, %v2081
    %v2722 = vpack.c.b16 %v2090, %v2082
    %v2723 = vpack.c.b16 %v2091, %v2083
    %v2724 = vpack.c.b16 %v2100, %v2092
    %v2725 = vpack.c.b16 %v2101, %v2093
    %v2726 = vpack.c.b16 %v2102, %v2094
    %v2727 = vpack.c.b16 %v2103, %v2095
    %v2728 = vpack.c.b16 %v2104, %v2096
    %v2729 = vpack.c.b16 %v2105, %v2097
    %v2730 = vpack.c.b16 %v2106, %v2098
    %v2731 = vpack.c.b16 %v2107, %v2099
    %v2732 = vpack.c.b16 %v2116, %v2108
    %v2733 = vpack.c.b16 %v2117, %v2109
    %v2734 = vpack.c.b16 %v2118, %v2110
    %v2735 = vpack.c.b16 %v2119, %v2111
    %v2736 = vpack.c.b16 %v2120, %v2112
    %v2737 = vpack.c.b16 %v2121, %v2113
    %v2738 = vpack.c.b16 %v2122, %v2114
    %v2739 = vpack.c.b16 %v2123, %v2115
    %v2740 = vpack.c.b16 %v2132, %v2124
    %v2741 = vpack.c.b16 %v2133, %v2125
    %v2742 = vpack.c.b16 %v2134, %v2126
    %v2743 = vpack.c.b16 %v2135, %v2127
    %v2744 = vpack.c.b16 %v2136, %v2128
    %v2745 = vpack.c.b16 %v2137, %v2129
    %v2746 = vpack.c.b16 %v2138, %v2130
    %v2747 = vpack.c.b16 %v2139, %v2131
    %v2748 = vpack.c.b16 %v2148, %v2140
    %v2749 = vpack.c.b16 %v2149, %v2141
    %v2750 = vpack.c.b16 %v2150, %v2142
    %v2751 = vpack.c.b16 %v2151, %v2143
    %v2752 = vpack.c.b16 %v2152, %v2144
    %v2753 = vpack.c.b16 %v2153, %v2145
    %v2754 = vpack.c.b16 %v2154, %v2146
    %v2755 = vpack.c.b16 %v2155, %v2147
    %v2756 = vpack.c.b16 %v2164, %v2156
    %v2757 = vpack.c.b16 %v2165, %v2157
    %v2758 = vpack.c.b16 %v2166, %v2158
    %v2759 = vpack.c.b16 %v2167, %v2159
    %v2760 = vpack.c.b16 %v2168, %v2160
    %v2761 = vpack.c.b16 %v2169, %v2161
    %v2762 = vpack.c.b16 %v2170, %v2162
    %v2763 = vpack.c.b16 %v2171, %v2163
    %v2764 = vpack.c.b16 %v2180, %v2172
    %v2765 = vpack.c.b16 %v2181, %v2173
    %v2766 = vpack.c.b16 %v2182, %v2174
    %v2767 = vpack.c.b16 %v2183, %v2175
    %v2768 = vpack.c.b16 %v2184, %v2176
    %v2769 = vpack.c.b16 %v2185, %v2177
    %v2770 = vpack.c.b16 %v2186, %v2178
    %v2771 = vpack.c.b16 %v2187, %v2179
    %v2772 = vpack.c.b16 %v2196, %v2188
    %v2773 = vpack.c.b16 %v2197, %v2189
    %v2774 = vpack.c.b16 %v2198, %v2190
    %v2775 = vpack.c.b16 %v2199, %v2191
    %v2776 = vpack.c.b16 %v2200, %v2192
    %v2777 = vpack.c.b16 %v2201, %v2193
    %v2778 = vpack.c.b16 %v2202, %v2194
    %v2779 = vpack.c.b16 %v2203, %v2195
    %v2780 = vpack.c.b16 %v2212, %v2204
    %v2781 = vpack.c.b16 %v2213, %v2205
    %v2782 = vpack.c.b16 %v2214, %v2206
    %v2783 = vpack.c.b16 %v2215, %v2207
    %v2784 = vpack.c.b16 %v2216, %v2208
    %v2785 = vpack.c.b16 %v2217, %v2209
    %v2786 = vpack.c.b16 %v2218, %v2210
    %v2787 = vpack.c.b16 %v2219, %v2211
    %v2788 = vpack.c.b16 %v2228, %v2220
    %v2789 = vpack.c.b16 %v2229, %v2221
    %v2790 = vpack.c.b16 %v2230, %v2222
    %v2791 = vpack.c.b16 %v2231, %v2223
    %v2792 = vpack.c.b16 %v2232, %v2224
    %v2793 = vpack.c.b16 %v2233, %v2225
    %v2794 = vpack.c.b16 %v2234, %v2226
    %v2795 = vpack.c.b16 %v2235, %v2227
    %v2796 = vpack.c.b16 %v2244, %v2236
    %v2797 = vpack.c.b16 %v2245, %v2237
    %v2798 = vpack.c.b16 %v2246, %v2238
    %v2799 = vpack.c.b16 %v2247, %v2239
    %v2800 = vpack.c.b16 %v2248, %v2240
    %v2801 = vpack.c.b16 %v2249, %v2241
    %v2802 = vpack.c.b16 %v2250, %v2242
    %v2803 = vpack.c.b16 %v2251, %v2243
    %v2804 = vpack.c.b16 %v2260, %v2252
    %v2805 = vpack.c.b16 %v2261, %v2253
    %v2806 = vpack.c.b16 %v2262, %v2254
    %v2807 = vpack.c.b16 %v2263, %v2255
    %v2808 = vpack.c.b16 %v2264, %v2256
    %v2809 = vpack.c.b16 %v2265, %v2257
    %v2810 = vpack.c.b16 %v2266, %v2258
    %v2811 = vpack.c.b16 %v2267, %v2259
    %v2812 = vpack.c.b16 %v2276, %v2268
    %v2813 = vpack.c.b16 %v2277, %v2269
    %v2814 = vpack.c.b16 %v2278, %v2270
    %v2815 = vpack.c.b16 %v2279, %v2271
    %v2816 = vpack.c.b16 %v2280, %v2272
    %v2817 = vpack.c.b16 %v2281, %v2273
    %v2818 = vpack.c.b16 %v2282, %v2274
    %v2819 = vpack.c.b16 %v2283, %v2275
    %v2820 = vpack.c.b16 %v2292, %v2284
    %v2821 = vpack.c.b16 %v2293, %v2285
    %v2822 = vpack.c.b16 %v2294, %v2286
    %v2823 = vpack.c.b16 %v2295, %v2287
    %v2824 = vpack.c.b16 %v2296, %v2288
    %v2825 = vpack.c.b16 %v2297, %v2289
    %v2826 = vpack.c.b16 %v2298, %v2290
    %v2827 = vpack.c.b16 %v2299, %v2291
    %v2828 = vpack.c.b16 %v2308, %v2300
    %v2829 = vpack.c.b16 %v2309, %v2301
    %v2830 = vpack.c.b16 %v2310, %v2302
    %v2831 = vpack.c.b16 %v2311, %v2303
    %v2832 = vpack.c.b16 %v2312, %v2304
    %v2833 = vpack.c.b16 %v2313, %v2305
    %v2834 = vpack.c.b16 %v2314, %v2306
    %v2835 = vpack.c.b16 %v2315, %v2307
    %v2836 = vpack.c.b16 %v2324, %v2316
    %v2837 = vpack.c.b16 %v2325, %v2317
    %v2838 = vpack.c.b16 %v2326, %v2318
    %v2839 = vpack.c.b16 %v2327, %v2319
    %v2840 = vpack.c.b16 %v2328, %v2320
    %v2841 = vpack.c.b16 %v2329, %v2321
    %v2842 = vpack.c.b16 %v2330, %v2322
    %v2843 = vpack.c.b16 %v2331, %v2323
    %3356 = vmatprep.subr.bf16.mxu0 %v2333
    %3357 = vmatpush1.bf16.msra.mxu0 %v2332
    %3358 = vmatprep.subr.bf16.mxu0 %v2341
    %3359 = vmatpush1.bf16.msra.mxu0 %v2340
    %3360 = vmatprep.subr.bf16.mxu0 %v2349
    %3361 = vmatpush1.bf16.msra.mxu0 %v2348
    %3362 = vmatprep.subr.bf16.mxu0 %v2357
    %3363 = vmatpush1.bf16.msra.mxu0 %v2356
    %3364 = vmatprep.subr.bf16.mxu0 %v2365
    %3365 = vmatpush1.bf16.msra.mxu0 %v2364
    %3366 = vmatprep.subr.bf16.mxu0 %v2373
    %3367 = vmatpush1.bf16.msra.mxu0 %v2372
    %3368 = vmatprep.subr.bf16.mxu0 %v2381
    %3369 = vmatpush1.bf16.msra.mxu0 %v2380
    %3370 = vmatprep.subr.bf16.mxu0 %v2389
    %3371 = vmatpush1.bf16.msra.mxu0 %v2388
    %3372 = vmatprep.subr.bf16.mxu0 %v2397
    %3373 = vmatpush1.bf16.msra.mxu0 %v2396
    %3374 = vmatprep.subr.bf16.mxu0 %v2405
    %3375 = vmatpush1.bf16.msra.mxu0 %v2404
    %3376 = vmatprep.subr.bf16.mxu0 %v2413
    %3377 = vmatpush1.bf16.msra.mxu0 %v2412
    %3378 = vmatprep.subr.bf16.mxu0 %v2421
    %3379 = vmatpush1.bf16.msra.mxu0 %v2420
    %3380 = vmatprep.subr.bf16.mxu0 %v2429
    %3381 = vmatpush1.bf16.msra.mxu0 %v2428
    %3382 = vmatprep.subr.bf16.mxu0 %v2437
    %3383 = vmatpush1.bf16.msra.mxu0 %v2436
    %3384 = vmatprep.subr.bf16.mxu0 %v2445
    %3385 = vmatpush1.bf16.msra.mxu0 %v2444
    %3386 = vmatprep.subr.bf16.mxu0 %v2453
    %3387 = vmatpush1.bf16.msra.mxu0 %v2452
    %3388 = vmatprep.mubr.bf16.mxu0 %v781
    %3389 = vmatmul.mubr.bf16.gmra.mrb[0].mxu0 %v780
    %v3390 = vpop.f32.mrb[0].mxu0
    %v3391 = vadd.f32 %v727, %v3390
    %v3392 = vpop.f32.mrb[0].mxu0
    %v3393 = vadd.f32 %v731, %v3392
    %v3394 = vpop.f32.mrb[0].mxu0
    %v3395 = vadd.f32 %v727, %v3394
    %v3396 = vpop.f32.mrb[0].mxu0
    %v3397 = vadd.f32 %v731, %v3396
    %3398 = vdwg.mxu0
    %3399 = vmatprep.subr.bf16.mxu0 %v2461
    %3400 = vmatpush1.bf16.msra.mxu0 %v2460
    %3401 = vmatprep.subr.bf16.mxu0 %v2469
    %3402 = vmatpush1.bf16.msra.mxu0 %v2468
    %3403 = vmatprep.subr.bf16.mxu0 %v2477
    %3404 = vmatpush1.bf16.msra.mxu0 %v2476
    %3405 = vmatprep.subr.bf16.mxu0 %v2485
    %3406 = vmatpush1.bf16.msra.mxu0 %v2484
    %3407 = vmatprep.subr.bf16.mxu0 %v2493
    %3408 = vmatpush1.bf16.msra.mxu0 %v2492
    %3409 = vmatprep.subr.bf16.mxu0 %v2501
    %3410 = vmatpush1.bf16.msra.mxu0 %v2500
    %3411 = vmatprep.subr.bf16.mxu0 %v2509
    %3412 = vmatpush1.bf16.msra.mxu0 %v2508
    %3413 = vmatprep.subr.bf16.mxu0 %v2517
    %3414 = vmatpush1.bf16.msra.mxu0 %v2516
    %3415 = vmatprep.subr.bf16.mxu0 %v2525
    %3416 = vmatpush1.bf16.msra.mxu0 %v2524
    %3417 = vmatprep.subr.bf16.mxu0 %v2533
    %3418 = vmatpush1.bf16.msra.mxu0 %v2532
    %3419 = vmatprep.subr.bf16.mxu0 %v2541
    %3420 = vmatpush1.bf16.msra.mxu0 %v2540
    %3421 = vmatprep.subr.bf16.mxu0 %v2549
    %3422 = vmatpush1.bf16.msra.mxu0 %v2548
    %3423 = vmatprep.subr.bf16.mxu0 %v2557
    %3424 = vmatpush1.bf16.msra.mxu0 %v2556
    %3425 = vmatprep.subr.bf16.mxu0 %v2565
    %3426 = vmatpush1.bf16.msra.mxu0 %v2564
    %3427 = vmatprep.subr.bf16.mxu0 %v2573
    %3428 = vmatpush1.bf16.msra.mxu0 %v2572
    %3429 = vmatprep.subr.bf16.mxu0 %v2581
    %3430 = vmatpush1.bf16.msra.mxu0 %v2580
    %3431 = vmatprep.mubr.bf16.mxu0 %v783
    %3432 = vmatmul.mubr.bf16.gmra.mrb[0].mxu0 %v782
    %v3433 = vpop.f32.mrb[0].mxu0
    %v3434 = vadd.f32 %v3391, %v3433
    %v3435 = vpop.f32.mrb[0].mxu0
    %v3436 = vadd.f32 %v3393, %v3435
    %v3437 = vpop.f32.mrb[0].mxu0
    %v3438 = vadd.f32 %v3395, %v3437
    %v3439 = vpop.f32.mrb[0].mxu0
    %v3440 = vadd.f32 %v3397, %v3439
    %3441 = vdwg.mxu0
    %3442 = vmatprep.subr.bf16.mxu0 %v2589
    %3443 = vmatpush1.bf16.msra.mxu0 %v2588
    %3444 = vmatprep.subr.bf16.mxu0 %v2597
    %3445 = vmatpush1.bf16.msra.mxu0 %v2596
    %3446 = vmatprep.subr.bf16.mxu0 %v2605
    %3447 = vmatpush1.bf16.msra.mxu0 %v2604
    %3448 = vmatprep.subr.bf16.mxu0 %v2613
    %3449 = vmatpush1.bf16.msra.mxu0 %v2612
    %3450 = vmatprep.subr.bf16.mxu0 %v2621
    %3451 = vmatpush1.bf16.msra.mxu0 %v2620
    %3452 = vmatprep.subr.bf16.mxu0 %v2629
    %3453 = vmatpush1.bf16.msra.mxu0 %v2628
    %3454 = vmatprep.subr.bf16.mxu0 %v2637
    %3455 = vmatpush1.bf16.msra.mxu0 %v2636
    %3456 = vmatprep.subr.bf16.mxu0 %v2645
    %3457 = vmatpush1.bf16.msra.mxu0 %v2644
    %3458 = vmatprep.subr.bf16.mxu0 %v2653
    %3459 = vmatpush1.bf16.msra.mxu0 %v2652
    %3460 = vmatprep.subr.bf16.mxu0 %v2661
    %3461 = vmatpush1.bf16.msra.mxu0 %v2660
    %3462 = vmatprep.subr.bf16.mxu0 %v2669
    %3463 = vmatpush1.bf16.msra.mxu0 %v2668
    %3464 = vmatprep.subr.bf16.mxu0 %v2677
    %3465 = vmatpush1.bf16.msra.mxu0 %v2676
    %3466 = vmatprep.subr.bf16.mxu0 %v2685
    %3467 = vmatpush1.bf16.msra.mxu0 %v2684
    %3468 = vmatprep.subr.bf16.mxu0 %v2693
    %3469 = vmatpush1.bf16.msra.mxu0 %v2692
    %3470 = vmatprep.subr.bf16.mxu0 %v2701
    %3471 = vmatpush1.bf16.msra.mxu0 %v2700
    %3472 = vmatprep.subr.bf16.mxu0 %v2709
    %3473 = vmatpush1.bf16.msra.mxu0 %v2708
    %3474 = vmatprep.mubr.bf16.mxu0 %v785
    %3475 = vmatmul.mubr.bf16.gmra.mrb[0].mxu0 %v784
    %v3476 = vpop.f32.mrb[0].mxu0
    %v3477 = vadd.f32 %v3434, %v3476
    %v3478 = vpop.f32.mrb[0].mxu0
    %v3479 = vadd.f32 %v3436, %v3478
    %v3480 = vpop.f32.mrb[0].mxu0
    %v3481 = vadd.f32 %v3438, %v3480
    %v3482 = vpop.f32.mrb[0].mxu0
    %v3483 = vadd.f32 %v3440, %v3482
    %3484 = vdwg.mxu0
    %3485 = vmatprep.subr.bf16.mxu0 %v2717
    %3486 = vmatpush1.bf16.msra.mxu0 %v2716
    %3487 = vmatprep.subr.bf16.mxu0 %v2725
    %3488 = vmatpush1.bf16.msra.mxu0 %v2724
    %3489 = vmatprep.subr.bf16.mxu0 %v2733
    %3490 = vmatpush1.bf16.msra.mxu0 %v2732
    %3491 = vmatprep.subr.bf16.mxu0 %v2741
    %3492 = vmatpush1.bf16.msra.mxu0 %v2740
    %3493 = vmatprep.subr.bf16.mxu0 %v2749
    %3494 = vmatpush1.bf16.msra.mxu0 %v2748
    %3495 = vmatprep.subr.bf16.mxu0 %v2757
    %3496 = vmatpush1.bf16.msra.mxu0 %v2756
    %3497 = vmatprep.subr.bf16.mxu0 %v2765
    %3498 = vmatpush1.bf16.msra.mxu0 %v2764
    %3499 = vmatprep.subr.bf16.mxu0 %v2773
    %3500 = vmatpush1.bf16.msra.mxu0 %v2772
    %3501 = vmatprep.subr.bf16.mxu0 %v2781
    %3502 = vmatpush1.bf16.msra.mxu0 %v2780
    %3503 = vmatprep.subr.bf16.mxu0 %v2789
    %3504 = vmatpush1.bf16.msra.mxu0 %v2788
    %3505 = vmatprep.subr.bf16.mxu0 %v2797
    %3506 = vmatpush1.bf16.msra.mxu0 %v2796
    %3507 = vmatprep.subr.bf16.mxu0 %v2805
    %3508 = vmatpush1.bf16.msra.mxu0 %v2804
    %3509 = vmatprep.subr.bf16.mxu0 %v2813
    %3510 = vmatpush1.bf16.msra.mxu0 %v2812
    %3511 = vmatprep.subr.bf16.mxu0 %v2821
    %3512 = vmatpush1.bf16.msra.mxu0 %v2820
    %3513 = vmatprep.subr.bf16.mxu0 %v2829
    %3514 = vmatpush1.bf16.msra.mxu0 %v2828
    %3515 = vmatprep.subr.bf16.mxu0 %v2837
    %3516 = vmatpush1.bf16.msra.mxu0 %v2836
    %3517 = vmatprep.mubr.bf16.mxu0 %v787
    %3518 = vmatmul.mubr.bf16.gmra.mrb[0].mxu0 %v786
    %v3519 = vpop.f32.mrb[0].mxu0
    %v3520 = vadd.f32 %v3477, %v3519
    %v3521 = vpop.f32.mrb[0].mxu0
    %v3522 = vadd.f32 %v3479, %v3521
    %v3523 = vpop.f32.mrb[0].mxu0
    %v3524 = vadd.f32 %v3481, %v3523
    %v3525 = vpop.f32.mrb[0].mxu0
    %v3526 = vadd.f32 %v3483, %v3525
    %3527 = vdwg.mxu0
    %3528 = vmatprep.subr.bf16.mxu0 %v2335
    %3529 = vmatpush1.bf16.msra.mxu0 %v2334
    %3530 = vmatprep.subr.bf16.mxu0 %v2343
    %3531 = vmatpush1.bf16.msra.mxu0 %v2342
    %3532 = vmatprep.subr.bf16.mxu0 %v2351
    %3533 = vmatpush1.bf16.msra.mxu0 %v2350
    %3534 = vmatprep.subr.bf16.mxu0 %v2359
    %3535 = vmatpush1.bf16.msra.mxu0 %v2358
    %3536 = vmatprep.subr.bf16.mxu0 %v2367
    %3537 = vmatpush1.bf16.msra.mxu0 %v2366
    %3538 = vmatprep.subr.bf16.mxu0 %v2375
    %3539 = vmatpush1.bf16.msra.mxu0 %v2374
    %3540 = vmatprep.subr.bf16.mxu0 %v2383
    %3541 = vmatpush1.bf16.msra.mxu0 %v2382
    %3542 = vmatprep.subr.bf16.mxu0 %v2391
    %3543 = vmatpush1.bf16.msra.mxu0 %v2390
    %3544 = vmatprep.subr.bf16.mxu0 %v2399
    %3545 = vmatpush1.bf16.msra.mxu0 %v2398
    %3546 = vmatprep.subr.bf16.mxu0 %v2407
    %3547 = vmatpush1.bf16.msra.mxu0 %v2406
    %3548 = vmatprep.subr.bf16.mxu0 %v2415
    %3549 = vmatpush1.bf16.msra.mxu0 %v2414
    %3550 = vmatprep.subr.bf16.mxu0 %v2423
    %3551 = vmatpush1.bf16.msra.mxu0 %v2422
    %3552 = vmatprep.subr.bf16.mxu0 %v2431
    %3553 = vmatpush1.bf16.msra.mxu0 %v2430
    %3554 = vmatprep.subr.bf16.mxu0 %v2439
    %3555 = vmatpush1.bf16.msra.mxu0 %v2438
    %3556 = vmatprep.subr.bf16.mxu0 %v2447
    %3557 = vmatpush1.bf16.msra.mxu0 %v2446
    %3558 = vmatprep.subr.bf16.mxu0 %v2455
    %3559 = vmatpush1.bf16.msra.mxu0 %v2454
    %3560 = vmatprep.mubr.bf16.mxu0 %v781
    %3561 = vmatmul.mubr.bf16.gmra.mrb[0].mxu0 %v780
    %v3562 = vpop.f32.mrb[0].mxu0
    %v3563 = vadd.f32 %v735, %v3562
    %v3564 = vpop.f32.mrb[0].mxu0
    %v3565 = vadd.f32 %v739, %v3564
    %v3566 = vpop.f32.mrb[0].mxu0
    %v3567 = vadd.f32 %v735, %v3566
    %v3568 = vpop.f32.mrb[0].mxu0
    %v3569 = vadd.f32 %v739, %v3568
    %3570 = vdwg.mxu0
    %3571 = vmatprep.subr.bf16.mxu0 %v2463
    %3572 = vmatpush1.bf16.msra.mxu0 %v2462
    %3573 = vmatprep.subr.bf16.mxu0 %v2471
    %3574 = vmatpush1.bf16.msra.mxu0 %v2470
    %3575 = vmatprep.subr.bf16.mxu0 %v2479
    %3576 = vmatpush1.bf16.msra.mxu0 %v2478
    %3577 = vmatprep.subr.bf16.mxu0 %v2487
    %3578 = vmatpush1.bf16.msra.mxu0 %v2486
    %3579 = vmatprep.subr.bf16.mxu0 %v2495
    %3580 = vmatpush1.bf16.msra.mxu0 %v2494
    %3581 = vmatprep.subr.bf16.mxu0 %v2503
    %3582 = vmatpush1.bf16.msra.mxu0 %v2502
    %3583 = vmatprep.subr.bf16.mxu0 %v2511
    %3584 = vmatpush1.bf16.msra.mxu0 %v2510
    %3585 = vmatprep.subr.bf16.mxu0 %v2519
    %3586 = vmatpush1.bf16.msra.mxu0 %v2518
    %3587 = vmatprep.subr.bf16.mxu0 %v2527
    %3588 = vmatpush1.bf16.msra.mxu0 %v2526
    %3589 = vmatprep.subr.bf16.mxu0 %v2535
    %3590 = vmatpush1.bf16.msra.mxu0 %v2534
    %3591 = vmatprep.subr.bf16.mxu0 %v2543
    %3592 = vmatpush1.bf16.msra.mxu0 %v2542
    %3593 = vmatprep.subr.bf16.mxu0 %v2551
    %3594 = vmatpush1.bf16.msra.mxu0 %v2550
    %3595 = vmatprep.subr.bf16.mxu0 %v2559
    %3596 = vmatpush1.bf16.msra.mxu0 %v2558
    %3597 = vmatprep.subr.bf16.mxu0 %v2567
    %3598 = vmatpush1.bf16.msra.mxu0 %v2566
    %3599 = vmatprep.subr.bf16.mxu0 %v2575
    %3600 = vmatpush1.bf16.msra.mxu0 %v2574
    %3601 = vmatprep.subr.bf16.mxu0 %v2583
    %3602 = vmatpush1.bf16.msra.mxu0 %v2582
    %3603 = vmatprep.mubr.bf16.mxu0 %v783
    %3604 = vmatmul.mubr.bf16.gmra.mrb[0].mxu0 %v782
    %v3605 = vpop.f32.mrb[0].mxu0
    %v3606 = vadd.f32 %v3563, %v3605
    %v3607 = vpop.f32.mrb[0].mxu0
    %v3608 = vadd.f32 %v3565, %v3607
    %v3609 = vpop.f32.mrb[0].mxu0
    %v3610 = vadd.f32 %v3567, %v3609
    %v3611 = vpop.f32.mrb[0].mxu0
    %v3612 = vadd.f32 %v3569, %v3611
    %3613 = vdwg.mxu0
    %3614 = vmatprep.subr.bf16.mxu0 %v2591
    %3615 = vmatpush1.bf16.msra.mxu0 %v2590
    %3616 = vmatprep.subr.bf16.mxu0 %v2599
    %3617 = vmatpush1.bf16.msra.mxu0 %v2598
    %3618 = vmatprep.subr.bf16.mxu0 %v2607
    %3619 = vmatpush1.bf16.msra.mxu0 %v2606
    %3620 = vmatprep.subr.bf16.mxu0 %v2615
    %3621 = vmatpush1.bf16.msra.mxu0 %v2614
    %3622 = vmatprep.subr.bf16.mxu0 %v2623
    %3623 = vmatpush1.bf16.msra.mxu0 %v2622
    %3624 = vmatprep.subr.bf16.mxu0 %v2631
    %3625 = vmatpush1.bf16.msra.mxu0 %v2630
    %3626 = vmatprep.subr.bf16.mxu0 %v2639
    %3627 = vmatpush1.bf16.msra.mxu0 %v2638
    %3628 = vmatprep.subr.bf16.mxu0 %v2647
    %3629 = vmatpush1.bf16.msra.mxu0 %v2646
    %3630 = vmatprep.subr.bf16.mxu0 %v2655
    %3631 = vmatpush1.bf16.msra.mxu0 %v2654
    %3632 = vmatprep.subr.bf16.mxu0 %v2663
    %3633 = vmatpush1.bf16.msra.mxu0 %v2662
    %3634 = vmatprep.subr.bf16.mxu0 %v2671
    %3635 = vmatpush1.bf16.msra.mxu0 %v2670
    %3636 = vmatprep.subr.bf16.mxu0 %v2679
    %3637 = vmatpush1.bf16.msra.mxu0 %v2678
    %3638 = vmatprep.subr.bf16.mxu0 %v2687
    %3639 = vmatpush1.bf16.msra.mxu0 %v2686
    %3640 = vmatprep.subr.bf16.mxu0 %v2695
    %3641 = vmatpush1.bf16.msra.mxu0 %v2694
    %3642 = vmatprep.subr.bf16.mxu0 %v2703
    %3643 = vmatpush1.bf16.msra.mxu0 %v2702
    %3644 = vmatprep.subr.bf16.mxu0 %v2711
    %3645 = vmatpush1.bf16.msra.mxu0 %v2710
    %3646 = vmatprep.mubr.bf16.mxu0 %v785
    %3647 = vmatmul.mubr.bf16.gmra.mrb[0].mxu0 %v784
    %v3648 = vpop.f32.mrb[0].mxu0
    %v3649 = vadd.f32 %v3606, %v3648
    %v3650 = vpop.f32.mrb[0].mxu0
    %v3651 = vadd.f32 %v3608, %v3650
    %v3652 = vpop.f32.mrb[0].mxu0
    %v3653 = vadd.f32 %v3610, %v3652
    %v3654 = vpop.f32.mrb[0].mxu0
    %v3655 = vadd.f32 %v3612, %v3654
    %3656 = vdwg.mxu0
    %3657 = vmatprep.subr.bf16.mxu0 %v2719
    %3658 = vmatpush1.bf16.msra.mxu0 %v2718
    %3659 = vmatprep.subr.bf16.mxu0 %v2727
    %3660 = vmatpush1.bf16.msra.mxu0 %v2726
    %3661 = vmatprep.subr.bf16.mxu0 %v2735
    %3662 = vmatpush1.bf16.msra.mxu0 %v2734
    %3663 = vmatprep.subr.bf16.mxu0 %v2743
    %3664 = vmatpush1.bf16.msra.mxu0 %v2742
    %3665 = vmatprep.subr.bf16.mxu0 %v2751
    %3666 = vmatpush1.bf16.msra.mxu0 %v2750
    %3667 = vmatprep.subr.bf16.mxu0 %v2759
    %3668 = vmatpush1.bf16.msra.mxu0 %v2758
    %3669 = vmatprep.subr.bf16.mxu0 %v2767
    %3670 = vmatpush1.bf16.msra.mxu0 %v2766
    %3671 = vmatprep.subr.bf16.mxu0 %v2775
    %3672 = vmatpush1.bf16.msra.mxu0 %v2774
    %3673 = vmatprep.subr.bf16.mxu0 %v2783
    %3674 = vmatpush1.bf16.msra.mxu0 %v2782
    %3675 = vmatprep.subr.bf16.mxu0 %v2791
    %3676 = vmatpush1.bf16.msra.mxu0 %v2790
    %3677 = vmatprep.subr.bf16.mxu0 %v2799
    %3678 = vmatpush1.bf16.msra.mxu0 %v2798
    %3679 = vmatprep.subr.bf16.mxu0 %v2807
    %3680 = vmatpush1.bf16.msra.mxu0 %v2806
    %3681 = vmatprep.subr.bf16.mxu0 %v2815
    %3682 = vmatpush1.bf16.msra.mxu0 %v2814
    %3683 = vmatprep.subr.bf16.mxu0 %v2823
    %3684 = vmatpush1.bf16.msra.mxu0 %v2822
    %3685 = vmatprep.subr.bf16.mxu0 %v2831
    %3686 = vmatpush1.bf16.msra.mxu0 %v2830
    %3687 = vmatprep.subr.bf16.mxu0 %v2839
    %3688 = vmatpush1.bf16.msra.mxu0 %v2838
    %3689 = vmatprep.mubr.bf16.mxu0 %v787
    %3690 = vmatmul.mubr.bf16.gmra.mrb[0].mxu0 %v786
    %v3691 = vpop.f32.mrb[0].mxu0
    %v3692 = vadd.f32 %v3649, %v3691
    %v3693 = vpop.f32.mrb[0].mxu0
    %v3694 = vadd.f32 %v3651, %v3693
    %v3695 = vpop.f32.mrb[0].mxu0
    %v3696 = vadd.f32 %v3653, %v3695
    %v3697 = vpop.f32.mrb[0].mxu0
    %v3698 = vadd.f32 %v3655, %v3697
    %3699 = vdwg.mxu0
    %3700 = vmatprep.subr.bf16.mxu0 %v2337
    %3701 = vmatpush1.bf16.msra.mxu0 %v2336
    %3702 = vmatprep.subr.bf16.mxu0 %v2345
    %3703 = vmatpush1.bf16.msra.mxu0 %v2344
    %3704 = vmatprep.subr.bf16.mxu0 %v2353
    %3705 = vmatpush1.bf16.msra.mxu0 %v2352
    %3706 = vmatprep.subr.bf16.mxu0 %v2361
    %3707 = vmatpush1.bf16.msra.mxu0 %v2360
    %3708 = vmatprep.subr.bf16.mxu0 %v2369
    %3709 = vmatpush1.bf16.msra.mxu0 %v2368
    %3710 = vmatprep.subr.bf16.mxu0 %v2377
    %3711 = vmatpush1.bf16.msra.mxu0 %v2376
    %3712 = vmatprep.subr.bf16.mxu0 %v2385
    %3713 = vmatpush1.bf16.msra.mxu0 %v2384
    %3714 = vmatprep.subr.bf16.mxu0 %v2393
    %3715 = vmatpush1.bf16.msra.mxu0 %v2392
    %3716 = vmatprep.subr.bf16.mxu0 %v2401
    %3717 = vmatpush1.bf16.msra.mxu0 %v2400
    %3718 = vmatprep.subr.bf16.mxu0 %v2409
    %3719 = vmatpush1.bf16.msra.mxu0 %v2408
    %3720 = vmatprep.subr.bf16.mxu0 %v2417
    %3721 = vmatpush1.bf16.msra.mxu0 %v2416
    %3722 = vmatprep.subr.bf16.mxu0 %v2425
    %3723 = vmatpush1.bf16.msra.mxu0 %v2424
    %3724 = vmatprep.subr.bf16.mxu0 %v2433
    %3725 = vmatpush1.bf16.msra.mxu0 %v2432
    %3726 = vmatprep.subr.bf16.mxu0 %v2441
    %3727 = vmatpush1.bf16.msra.mxu0 %v2440
    %3728 = vmatprep.subr.bf16.mxu0 %v2449
    %3729 = vmatpush1.bf16.msra.mxu0 %v2448
    %3730 = vmatprep.subr.bf16.mxu0 %v2457
    %3731 = vmatpush1.bf16.msra.mxu0 %v2456
    %3732 = vmatprep.mubr.bf16.mxu0 %v781
    %3733 = vmatmul.mubr.bf16.gmra.mrb[0].mxu0 %v780
    %v3734 = vpop.f32.mrb[0].mxu0
    %v3735 = vadd.f32 %v743, %v3734
    %v3736 = vpop.f32.mrb[0].mxu0
    %v3737 = vadd.f32 %v747, %v3736
    %v3738 = vpop.f32.mrb[0].mxu0
    %v3739 = vadd.f32 %v743, %v3738
    %v3740 = vpop.f32.mrb[0].mxu0
    %v3741 = vadd.f32 %v747, %v3740
    %3742 = vdwg.mxu0
    %3743 = vmatprep.subr.bf16.mxu0 %v2465
    %3744 = vmatpush1.bf16.msra.mxu0 %v2464
    %3745 = vmatprep.subr.bf16.mxu0 %v2473
    %3746 = vmatpush1.bf16.msra.mxu0 %v2472
    %3747 = vmatprep.subr.bf16.mxu0 %v2481
    %3748 = vmatpush1.bf16.msra.mxu0 %v2480
    %3749 = vmatprep.subr.bf16.mxu0 %v2489
    %3750 = vmatpush1.bf16.msra.mxu0 %v2488
    %3751 = vmatprep.subr.bf16.mxu0 %v2497
    %3752 = vmatpush1.bf16.msra.mxu0 %v2496
    %3753 = vmatprep.subr.bf16.mxu0 %v2505
    %3754 = vmatpush1.bf16.msra.mxu0 %v2504
    %3755 = vmatprep.subr.bf16.mxu0 %v2513
    %3756 = vmatpush1.bf16.msra.mxu0 %v2512
    %3757 = vmatprep.subr.bf16.mxu0 %v2521
    %3758 = vmatpush1.bf16.msra.mxu0 %v2520
    %3759 = vmatprep.subr.bf16.mxu0 %v2529
    %3760 = vmatpush1.bf16.msra.mxu0 %v2528
    %3761 = vmatprep.subr.bf16.mxu0 %v2537
    %3762 = vmatpush1.bf16.msra.mxu0 %v2536
    %3763 = vmatprep.subr.bf16.mxu0 %v2545
    %3764 = vmatpush1.bf16.msra.mxu0 %v2544
    %3765 = vmatprep.subr.bf16.mxu0 %v2553
    %3766 = vmatpush1.bf16.msra.mxu0 %v2552
    %3767 = vmatprep.subr.bf16.mxu0 %v2561
    %3768 = vmatpush1.bf16.msra.mxu0 %v2560
    %3769 = vmatprep.subr.bf16.mxu0 %v2569
    %3770 = vmatpush1.bf16.msra.mxu0 %v2568
    %3771 = vmatprep.subr.bf16.mxu0 %v2577
    %3772 = vmatpush1.bf16.msra.mxu0 %v2576
    %3773 = vmatprep.subr.bf16.mxu0 %v2585
    %3774 = vmatpush1.bf16.msra.mxu0 %v2584
    %3775 = vmatprep.mubr.bf16.mxu0 %v783
    %3776 = vmatmul.mubr.bf16.gmra.mrb[0].mxu0 %v782
    %v3777 = vpop.f32.mrb[0].mxu0
    %v3778 = vadd.f32 %v3735, %v3777
    %v3779 = vpop.f32.mrb[0].mxu0
    %v3780 = vadd.f32 %v3737, %v3779
    %v3781 = vpop.f32.mrb[0].mxu0
    %v3782 = vadd.f32 %v3739, %v3781
    %v3783 = vpop.f32.mrb[0].mxu0
    %v3784 = vadd.f32 %v3741, %v3783
    %3785 = vdwg.mxu0
    %3786 = vmatprep.subr.bf16.mxu0 %v2593
    %3787 = vmatpush1.bf16.msra.mxu0 %v2592
    %3788 = vmatprep.subr.bf16.mxu0 %v2601
    %3789 = vmatpush1.bf16.msra.mxu0 %v2600
    %3790 = vmatprep.subr.bf16.mxu0 %v2609
    %3791 = vmatpush1.bf16.msra.mxu0 %v2608
    %3792 = vmatprep.subr.bf16.mxu0 %v2617
    %3793 = vmatpush1.bf16.msra.mxu0 %v2616
    %3794 = vmatprep.subr.bf16.mxu0 %v2625
    %3795 = vmatpush1.bf16.msra.mxu0 %v2624
    %3796 = vmatprep.subr.bf16.mxu0 %v2633
    %3797 = vmatpush1.bf16.msra.mxu0 %v2632
    %3798 = vmatprep.subr.bf16.mxu0 %v2641
    %3799 = vmatpush1.bf16.msra.mxu0 %v2640
    %3800 = vmatprep.subr.bf16.mxu0 %v2649
    %3801 = vmatpush1.bf16.msra.mxu0 %v2648
    %3802 = vmatprep.subr.bf16.mxu0 %v2657
    %3803 = vmatpush1.bf16.msra.mxu0 %v2656
    %3804 = vmatprep.subr.bf16.mxu0 %v2665
    %3805 = vmatpush1.bf16.msra.mxu0 %v2664
    %3806 = vmatprep.subr.bf16.mxu0 %v2673
    %3807 = vmatpush1.bf16.msra.mxu0 %v2672
    %3808 = vmatprep.subr.bf16.mxu0 %v2681
    %3809 = vmatpush1.bf16.msra.mxu0 %v2680
    %3810 = vmatprep.subr.bf16.mxu0 %v2689
    %3811 = vmatpush1.bf16.msra.mxu0 %v2688
    %3812 = vmatprep.subr.bf16.mxu0 %v2697
    %3813 = vmatpush1.bf16.msra.mxu0 %v2696
    %3814 = vmatprep.subr.bf16.mxu0 %v2705
    %3815 = vmatpush1.bf16.msra.mxu0 %v2704
    %3816 = vmatprep.subr.bf16.mxu0 %v2713
    %3817 = vmatpush1.bf16.msra.mxu0 %v2712
    %3818 = vmatprep.mubr.bf16.mxu0 %v785
    %3819 = vmatmul.mubr.bf16.gmra.mrb[0].mxu0 %v784
    %v3820 = vpop.f32.mrb[0].mxu0
    %v3821 = vadd.f32 %v3778, %v3820
    %v3822 = vpop.f32.mrb[0].mxu0
    %v3823 = vadd.f32 %v3780, %v3822
    %v3824 = vpop.f32.mrb[0].mxu0
    %v3825 = vadd.f32 %v3782, %v3824
    %v3826 = vpop.f32.mrb[0].mxu0
    %v3827 = vadd.f32 %v3784, %v3826
    %3828 = vdwg.mxu0
    %3829 = vmatprep.subr.bf16.mxu0 %v2721
    %3830 = vmatpush1.bf16.msra.mxu0 %v2720
    %3831 = vmatprep.subr.bf16.mxu0 %v2729
    %3832 = vmatpush1.bf16.msra.mxu0 %v2728
    %3833 = vmatprep.subr.bf16.mxu0 %v2737
    %3834 = vmatpush1.bf16.msra.mxu0 %v2736
    %3835 = vmatprep.subr.bf16.mxu0 %v2745
    %3836 = vmatpush1.bf16.msra.mxu0 %v2744
    %3837 = vmatprep.subr.bf16.mxu0 %v2753
    %3838 = vmatpush1.bf16.msra.mxu0 %v2752
    %3839 = vmatprep.subr.bf16.mxu0 %v2761
    %3840 = vmatpush1.bf16.msra.mxu0 %v2760
    %3841 = vmatprep.subr.bf16.mxu0 %v2769
    %3842 = vmatpush1.bf16.msra.mxu0 %v2768
    %3843 = vmatprep.subr.bf16.mxu0 %v2777
    %3844 = vmatpush1.bf16.msra.mxu0 %v2776
    %3845 = vmatprep.subr.bf16.mxu0 %v2785
    %3846 = vmatpush1.bf16.msra.mxu0 %v2784
    %3847 = vmatprep.subr.bf16.mxu0 %v2793
    %3848 = vmatpush1.bf16.msra.mxu0 %v2792
    %3849 = vmatprep.subr.bf16.mxu0 %v2801
    %3850 = vmatpush1.bf16.msra.mxu0 %v2800
    %3851 = vmatprep.subr.bf16.mxu0 %v2809
    %3852 = vmatpush1.bf16.msra.mxu0 %v2808
    %3853 = vmatprep.subr.bf16.mxu0 %v2817
    %3854 = vmatpush1.bf16.msra.mxu0 %v2816
    %3855 = vmatprep.subr.bf16.mxu0 %v2825
    %3856 = vmatpush1.bf16.msra.mxu0 %v2824
    %3857 = vmatprep.subr.bf16.mxu0 %v2833
    %3858 = vmatpush1.bf16.msra.mxu0 %v2832
    %3859 = vmatprep.subr.bf16.mxu0 %v2841
    %3860 = vmatpush1.bf16.msra.mxu0 %v2840
    %3861 = vmatprep.mubr.bf16.mxu0 %v787
    %3862 = vmatmul.mubr.bf16.gmra.mrb[0].mxu0 %v786
    %v3863 = vpop.f32.mrb[0].mxu0
    %v3864 = vadd.f32 %v3821, %v3863
    %v3865 = vpop.f32.mrb[0].mxu0
    %v3866 = vadd.f32 %v3823, %v3865
    %v3867 = vpop.f32.mrb[0].mxu0
    %v3868 = vadd.f32 %v3825, %v3867
    %v3869 = vpop.f32.mrb[0].mxu0
    %v3870 = vadd.f32 %v3827, %v3869
    %3871 = vdwg.mxu0
    %3872 = vmatprep.subr.bf16.mxu0 %v2339
    %3873 = vmatpush1.bf16.msra.mxu0 %v2338
    %3874 = vmatprep.subr.bf16.mxu0 %v2347
    %3875 = vmatpush1.bf16.msra.mxu0 %v2346
    %3876 = vmatprep.subr.bf16.mxu0 %v2355
    %3877 = vmatpush1.bf16.msra.mxu0 %v2354
    %3878 = vmatprep.subr.bf16.mxu0 %v2363
    %3879 = vmatpush1.bf16.msra.mxu0 %v2362
    %3880 = vmatprep.subr.bf16.mxu0 %v2371
    %3881 = vmatpush1.bf16.msra.mxu0 %v2370
    %3882 = vmatprep.subr.bf16.mxu0 %v2379
    %3883 = vmatpush1.bf16.msra.mxu0 %v2378
    %3884 = vmatprep.subr.bf16.mxu0 %v2387
    %3885 = vmatpush1.bf16.msra.mxu0 %v2386
    %3886 = vmatprep.subr.bf16.mxu0 %v2395
    %3887 = vmatpush1.bf16.msra.mxu0 %v2394
    %3888 = vmatprep.subr.bf16.mxu0 %v2403
    %3889 = vmatpush1.bf16.msra.mxu0 %v2402
    %3890 = vmatprep.subr.bf16.mxu0 %v2411
    %3891 = vmatpush1.bf16.msra.mxu0 %v2410
    %3892 = vmatprep.subr.bf16.mxu0 %v2419
    %3893 = vmatpush1.bf16.msra.mxu0 %v2418
    %3894 = vmatprep.subr.bf16.mxu0 %v2427
    %3895 = vmatpush1.bf16.msra.mxu0 %v2426
    %3896 = vmatprep.subr.bf16.mxu0 %v2435
    %3897 = vmatpush1.bf16.msra.mxu0 %v2434
    %3898 = vmatprep.subr.bf16.mxu0 %v2443
    %3899 = vmatpush1.bf16.msra.mxu0 %v2442
    %3900 = vmatprep.subr.bf16.mxu0 %v2451
    %3901 = vmatpush1.bf16.msra.mxu0 %v2450
    %3902 = vmatprep.subr.bf16.mxu0 %v2459
    %3903 = vmatpush1.bf16.msra.mxu0 %v2458
    %3904 = vmatprep.mubr.bf16.mxu0 %v781
    %3905 = vmatmul.mubr.bf16.gmra.mrb[0].mxu0 %v780
    %v3906 = vpop.f32.mrb[0].mxu0
    %v3907 = vadd.f32 %v751, %v3906
    %v3908 = vpop.f32.mrb[0].mxu0
    %v3909 = vadd.f32 %v755, %v3908
    %v3910 = vpop.f32.mrb[0].mxu0
    %v3911 = vadd.f32 %v751, %v3910
    %v3912 = vpop.f32.mrb[0].mxu0
    %v3913 = vadd.f32 %v755, %v3912
    %3914 = vdwg.mxu0
    %3915 = vmatprep.subr.bf16.mxu0 %v2467
    %3916 = vmatpush1.bf16.msra.mxu0 %v2466
    %3917 = vmatprep.subr.bf16.mxu0 %v2475
    %3918 = vmatpush1.bf16.msra.mxu0 %v2474
    %3919 = vmatprep.subr.bf16.mxu0 %v2483
    %3920 = vmatpush1.bf16.msra.mxu0 %v2482
    %3921 = vmatprep.subr.bf16.mxu0 %v2491
    %3922 = vmatpush1.bf16.msra.mxu0 %v2490
    %3923 = vmatprep.subr.bf16.mxu0 %v2499
    %3924 = vmatpush1.bf16.msra.mxu0 %v2498
    %3925 = vmatprep.subr.bf16.mxu0 %v2507
    %3926 = vmatpush1.bf16.msra.mxu0 %v2506
    %3927 = vmatprep.subr.bf16.mxu0 %v2515
    %3928 = vmatpush1.bf16.msra.mxu0 %v2514
    %3929 = vmatprep.subr.bf16.mxu0 %v2523
    %3930 = vmatpush1.bf16.msra.mxu0 %v2522
    %3931 = vmatprep.subr.bf16.mxu0 %v2531
    %3932 = vmatpush1.bf16.msra.mxu0 %v2530
    %3933 = vmatprep.subr.bf16.mxu0 %v2539
    %3934 = vmatpush1.bf16.msra.mxu0 %v2538
    %3935 = vmatprep.subr.bf16.mxu0 %v2547
    %3936 = vmatpush1.bf16.msra.mxu0 %v2546
    %3937 = vmatprep.subr.bf16.mxu0 %v2555
    %3938 = vmatpush1.bf16.msra.mxu0 %v2554
    %3939 = vmatprep.subr.bf16.mxu0 %v2563
    %3940 = vmatpush1.bf16.msra.mxu0 %v2562
    %3941 = vmatprep.subr.bf16.mxu0 %v2571
    %3942 = vmatpush1.bf16.msra.mxu0 %v2570
    %3943 = vmatprep.subr.bf16.mxu0 %v2579
    %3944 = vmatpush1.bf16.msra.mxu0 %v2578
    %3945 = vmatprep.subr.bf16.mxu0 %v2587
    %3946 = vmatpush1.bf16.msra.mxu0 %v2586
    %3947 = vmatprep.mubr.bf16.mxu0 %v783
    %3948 = vmatmul.mubr.bf16.gmra.mrb[0].mxu0 %v782
    %v3949 = vpop.f32.mrb[0].mxu0
    %v3950 = vadd.f32 %v3907, %v3949
    %v3951 = vpop.f32.mrb[0].mxu0
    %v3952 = vadd.f32 %v3909, %v3951
    %v3953 = vpop.f32.mrb[0].mxu0
    %v3954 = vadd.f32 %v3911, %v3953
    %v3955 = vpop.f32.mrb[0].mxu0
    %v3956 = vadd.f32 %v3913, %v3955
    %3957 = vdwg.mxu0
    %3958 = vmatprep.subr.bf16.mxu0 %v2595
    %3959 = vmatpush1.bf16.msra.mxu0 %v2594
    %3960 = vmatprep.subr.bf16.mxu0 %v2603
    %3961 = vmatpush1.bf16.msra.mxu0 %v2602
    %3962 = vmatprep.subr.bf16.mxu0 %v2611
    %3963 = vmatpush1.bf16.msra.mxu0 %v2610
    %3964 = vmatprep.subr.bf16.mxu0 %v2619
    %3965 = vmatpush1.bf16.msra.mxu0 %v2618
    %3966 = vmatprep.subr.bf16.mxu0 %v2627
    %3967 = vmatpush1.bf16.msra.mxu0 %v2626
    %3968 = vmatprep.subr.bf16.mxu0 %v2635
    %3969 = vmatpush1.bf16.msra.mxu0 %v2634
    %3970 = vmatprep.subr.bf16.mxu0 %v2643
    %3971 = vmatpush1.bf16.msra.mxu0 %v2642
    %3972 = vmatprep.subr.bf16.mxu0 %v2651
    %3973 = vmatpush1.bf16.msra.mxu0 %v2650
    %3974 = vmatprep.subr.bf16.mxu0 %v2659
    %3975 = vmatpush1.bf16.msra.mxu0 %v2658
    %3976 = vmatprep.subr.bf16.mxu0 %v2667
    %3977 = vmatpush1.bf16.msra.mxu0 %v2666
    %3978 = vmatprep.subr.bf16.mxu0 %v2675
    %3979 = vmatpush1.bf16.msra.mxu0 %v2674
    %3980 = vmatprep.subr.bf16.mxu0 %v2683
    %3981 = vmatpush1.bf16.msra.mxu0 %v2682
    %3982 = vmatprep.subr.bf16.mxu0 %v2691
    %3983 = vmatpush1.bf16.msra.mxu0 %v2690
    %3984 = vmatprep.subr.bf16.mxu0 %v2699
    %3985 = vmatpush1.bf16.msra.mxu0 %v2698
    %3986 = vmatprep.subr.bf16.mxu0 %v2707
    %3987 = vmatpush1.bf16.msra.mxu0 %v2706
    %3988 = vmatprep.subr.bf16.mxu0 %v2715
    %3989 = vmatpush1.bf16.msra.mxu0 %v2714
    %3990 = vmatprep.mubr.bf16.mxu0 %v785
    %3991 = vmatmul.mubr.bf16.gmra.mrb[0].mxu0 %v784
    %v3992 = vpop.f32.mrb[0].mxu0
    %v3993 = vadd.f32 %v3950, %v3992
    %v3994 = vpop.f32.mrb[0].mxu0
    %v3995 = vadd.f32 %v3952, %v3994
    %v3996 = vpop.f32.mrb[0].mxu0
    %v3997 = vadd.f32 %v3954, %v3996
    %v3998 = vpop.f32.mrb[0].mxu0
    %v3999 = vadd.f32 %v3956, %v3998
    %4000 = vdwg.mxu0
    %4001 = vmatprep.subr.bf16.mxu0 %v2723
    %4002 = vmatpush1.bf16.msra.mxu0 %v2722
    %4003 = vmatprep.subr.bf16.mxu0 %v2731
    %4004 = vmatpush1.bf16.msra.mxu0 %v2730
    %4005 = vmatprep.subr.bf16.mxu0 %v2739
    %4006 = vmatpush1.bf16.msra.mxu0 %v2738
    %4007 = vmatprep.subr.bf16.mxu0 %v2747
    %4008 = vmatpush1.bf16.msra.mxu0 %v2746
    %4009 = vmatprep.subr.bf16.mxu0 %v2755
    %4010 = vmatpush1.bf16.msra.mxu0 %v2754
    %4011 = vmatprep.subr.bf16.mxu0 %v2763
    %4012 = vmatpush1.bf16.msra.mxu0 %v2762
    %4013 = vmatprep.subr.bf16.mxu0 %v2771
    %4014 = vmatpush1.bf16.msra.mxu0 %v2770
    %4015 = vmatprep.subr.bf16.mxu0 %v2779
    %4016 = vmatpush1.bf16.msra.mxu0 %v2778
    %4017 = vmatprep.subr.bf16.mxu0 %v2787
    %4018 = vmatpush1.bf16.msra.mxu0 %v2786
    %4019 = vmatprep.subr.bf16.mxu0 %v2795
    %4020 = vmatpush1.bf16.msra.mxu0 %v2794
    %4021 = vmatprep.subr.bf16.mxu0 %v2803
    %4022 = vmatpush1.bf16.msra.mxu0 %v2802
    %4023 = vmatprep.subr.bf16.mxu0 %v2811
    %4024 = vmatpush1.bf16.msra.mxu0 %v2810
    %4025 = vmatprep.subr.bf16.mxu0 %v2819
    %4026 = vmatpush1.bf16.msra.mxu0 %v2818
    %4027 = vmatprep.subr.bf16.mxu0 %v2827
    %4028 = vmatpush1.bf16.msra.mxu0 %v2826
    %4029 = vmatprep.subr.bf16.mxu0 %v2835
    %4030 = vmatpush1.bf16.msra.mxu0 %v2834
    %4031 = vmatprep.subr.bf16.mxu0 %v2843
    %4032 = vmatpush1.bf16.msra.mxu0 %v2842
    %4033 = vmatprep.mubr.bf16.mxu0 %v787
    %4034 = vmatmul.mubr.bf16.gmra.mrb[0].mxu0 %v786
    %v4035 = vpop.f32.mrb[0].mxu0
    %v4036 = vadd.f32 %v3993, %v4035
    %v4037 = vpop.f32.mrb[0].mxu0
    %v4038 = vadd.f32 %v3995, %v4037
    %v4039 = vpop.f32.mrb[0].mxu0
    %v4040 = vadd.f32 %v3997, %v4039
    %v4041 = vpop.f32.mrb[0].mxu0
    %v4042 = vadd.f32 %v3999, %v4041
    %4043 = vdwg.mxu0
    %v4044 = vadd.f32 %v3520, %v3522
    %v4045 = vadd.f32 %v4044, %v3692
    %v4046 = vadd.f32 %v4045, %v3694
    %v4047 = vadd.f32 %v4046, %v3864
    %v4048 = vadd.f32 %v4047, %v3866
    %v4049 = vadd.f32 %v4048, %v4036
    %v4050 = vadd.f32 %v4049, %v4038
    %4051 = vadd.xlane.f32.xlu0 %v4050
    %v4052 = vpop.xlane.xlu0 %4051
    %v4053 = vadd.f32 %v3524, %v3526
    %v4054 = vadd.f32 %v4053, %v3696
    %v4055 = vadd.f32 %v4054, %v3698
    %v4056 = vadd.f32 %v4055, %v3868
    %v4057 = vadd.f32 %v4056, %v3870
    %v4058 = vadd.f32 %v4057, %v4040
    %v4059 = vadd.f32 %v4058, %v4042
    %4060 = vadd.xlane.f32.xlu0 %v4059
    %v4061 = vpop.xlane.xlu0 %4060
    %v4062 = vrcp.pop 1024.0
    %v4063 = vmul.f32 %v4052, %v4062
    %v4064 = vmul.f32 %v4061, %v4062
    %v4065 = vmul.f32 %v3520, %v3520
    %v4066 = vmul.f32 %v3522, %v3522
    %v4067 = vmul.f32 %v3692, %v3692
    %v4068 = vmul.f32 %v3694, %v3694
    %v4069 = vmul.f32 %v3864, %v3864
    %v4070 = vmul.f32 %v3866, %v3866
    %v4071 = vmul.f32 %v4036, %v4036
    %v4072 = vmul.f32 %v4038, %v4038
    %v4073 = vmul.f32 %v3524, %v3524
    %v4074 = vmul.f32 %v3526, %v3526
    %v4075 = vmul.f32 %v3696, %v3696
    %v4076 = vmul.f32 %v3698, %v3698
    %v4077 = vmul.f32 %v3868, %v3868
    %v4078 = vmul.f32 %v3870, %v3870
    %v4079 = vmul.f32 %v4040, %v4040
    %v4080 = vmul.f32 %v4042, %v4042
    %v4081 = vadd.f32 %v4065, %v4066
    %v4082 = vadd.f32 %v4081, %v4067
    %v4083 = vadd.f32 %v4082, %v4068
    %v4084 = vadd.f32 %v4083, %v4069
    %v4085 = vadd.f32 %v4084, %v4070
    %v4086 = vadd.f32 %v4085, %v4071
    %v4087 = vadd.f32 %v4086, %v4072
    %4088 = vadd.xlane.f32.xlu0 %v4087
    %v4089 = vpop.xlane.xlu0 %4088
    %v4090 = vadd.f32 %v4073, %v4074
    %v4091 = vadd.f32 %v4090, %v4075
    %v4092 = vadd.f32 %v4091, %v4076
    %v4093 = vadd.f32 %v4092, %v4077
    %v4094 = vadd.f32 %v4093, %v4078
    %v4095 = vadd.f32 %v4094, %v4079
    %v4096 = vadd.f32 %v4095, %v4080
    %4097 = vadd.xlane.f32.xlu0 %v4096
    %v4098 = vpop.xlane.xlu0 %4097
    %v4099 = vmul.f32 %v4089, %v4062
    %v4100 = vmul.f32 %v4098, %v4062
    %v4101 = vsub.f32 %v3520, %v4063
    %v4102 = vsub.f32 %v3522, %v4063
    %v4103 = vsub.f32 %v3692, %v4063
    %v4104 = vsub.f32 %v3694, %v4063
    %v4105 = vsub.f32 %v3864, %v4063
    %v4106 = vsub.f32 %v3866, %v4063
    %v4107 = vsub.f32 %v4036, %v4063
    %v4108 = vsub.f32 %v4038, %v4063
    %v4109 = vsub.f32 %v3524, %v4064
    %v4110 = vsub.f32 %v3526, %v4064
    %v4111 = vsub.f32 %v3696, %v4064
    %v4112 = vsub.f32 %v3698, %v4064
    %v4113 = vsub.f32 %v3868, %v4064
    %v4114 = vsub.f32 %v3870, %v4064
    %v4115 = vsub.f32 %v4040, %v4064
    %v4116 = vsub.f32 %v4042, %v4064
    %v4117 = vmul.f32 %v4063, %v4063
    %v4118 = vmul.f32 %v4064, %v4064
    %v4119 = vsub.f32 %v4099, %v4117
    %v4120 = vsub.f32 %v4100, %v4118
    %v4121 = vadd.f32 %v4119, 1e-05
    %v4122 = vadd.f32 %v4120, 1e-05
    %v4123 = vrsqrt.pop %v4121
    %v4124 = vrsqrt.pop %v4122
    %v4125 = vmul.f32 %v4101, %v4123
    %v4126 = vmul.f32 %v4102, %v4123
    %v4127 = vmul.f32 %v4103, %v4123
    %v4128 = vmul.f32 %v4104, %v4123
    %v4129 = vmul.f32 %v4105, %v4123
    %v4130 = vmul.f32 %v4106, %v4123
    %v4131 = vmul.f32 %v4107, %v4123
    %v4132 = vmul.f32 %v4108, %v4123
    %v4133 = vmul.f32 %v4109, %v4124
    %v4134 = vmul.f32 %v4110, %v4124
    %v4135 = vmul.f32 %v4111, %v4124
    %v4136 = vmul.f32 %v4112, %v4124
    %v4137 = vmul.f32 %v4113, %v4124
    %v4138 = vmul.f32 %v4114, %v4124
    %v4139 = vmul.f32 %v4115, %v4124
    %v4140 = vmul.f32 %v4116, %v4124
    %v4141 = vlaneseq
    %v4142 = vshrl.u32 %v4141, 7
    %v4143 = vsub.s32 1, %v4142
    %v4144 = vrot.slane %v676, %v4143
    %v4145 = vlaneseq
    %v4146 = vshrl.u32 %v4145, 7
    %v4147 = vsub.s32 5, %v4146
    %v4148 = vrot.slane %v676, %v4147
    %v4149 = vlaneseq
    %v4150 = vshrl.u32 %v4149, 7
    %v4151 = vsub.s32 1, %v4150
    %v4152 = vrot.slane %v677, %v4151
    %v4153 = vlaneseq
    %v4154 = vshrl.u32 %v4153, 7
    %v4155 = vsub.s32 5, %v4154
    %v4156 = vrot.slane %v677, %v4155
    %v4157 = vlaneseq
    %v4158 = vshrl.u32 %v4157, 7
    %v4159 = vsub.s32 1, %v4158
    %v4160 = vrot.slane %v678, %v4159
    %v4161 = vlaneseq
    %v4162 = vshrl.u32 %v4161, 7
    %v4163 = vsub.s32 5, %v4162
    %v4164 = vrot.slane %v678, %v4163
    %v4165 = vlaneseq
    %v4166 = vshrl.u32 %v4165, 7
    %v4167 = vsub.s32 1, %v4166
    %v4168 = vrot.slane %v679, %v4167
    %v4169 = vlaneseq
    %v4170 = vshrl.u32 %v4169, 7
    %v4171 = vsub.s32 5, %v4170
    %v4172 = vrot.slane %v679, %v4171
    %v4181 = vlaneseq
    %v4182 = vshrl.u32 %v4181, 7
    %v4183 = vsub.s32 1, %v4182
    %v4184 = vrot.slane %v4144, %v4183
    %v4185 = vlaneseq
    %v4186 = vshrl.u32 %v4185, 7
    %v4187 = vsub.s32 1, %v4186
    %v4188 = vrot.slane %v4148, %v4187
    %v4189 = vlaneseq
    %v4190 = vshrl.u32 %v4189, 7
    %v4191 = vsub.s32 1, %v4190
    %v4192 = vrot.slane %v4152, %v4191
    %v4193 = vlaneseq
    %v4194 = vshrl.u32 %v4193, 7
    %v4195 = vsub.s32 1, %v4194
    %v4196 = vrot.slane %v4156, %v4195
    %v4197 = vlaneseq
    %v4198 = vshrl.u32 %v4197, 7
    %v4199 = vsub.s32 1, %v4198
    %v4200 = vrot.slane %v4160, %v4199
    %v4201 = vlaneseq
    %v4202 = vshrl.u32 %v4201, 7
    %v4203 = vsub.s32 1, %v4202
    %v4204 = vrot.slane %v4164, %v4203
    %v4205 = vlaneseq
    %v4206 = vshrl.u32 %v4205, 7
    %v4207 = vsub.s32 1, %v4206
    %v4208 = vrot.slane %v4168, %v4207
    %v4209 = vlaneseq
    %v4210 = vshrl.u32 %v4209, 7
    %v4211 = vsub.s32 1, %v4210
    %v4212 = vrot.slane %v4172, %v4211
    %v4213 = vmul.f32 %v4125, %v4184
    %v4214 = vmul.f32 %v4126, %v4188
    %v4215 = vmul.f32 %v4127, %v4192
    %v4216 = vmul.f32 %v4128, %v4196
    %v4217 = vmul.f32 %v4129, %v4200
    %v4218 = vmul.f32 %v4130, %v4204
    %v4219 = vmul.f32 %v4131, %v4208
    %v4220 = vmul.f32 %v4132, %v4212
    %v4221 = vmul.f32 %v4133, %v4184
    %v4222 = vmul.f32 %v4134, %v4188
    %v4223 = vmul.f32 %v4135, %v4192
    %v4224 = vmul.f32 %v4136, %v4196
    %v4225 = vmul.f32 %v4137, %v4200
    %v4226 = vmul.f32 %v4138, %v4204
    %v4227 = vmul.f32 %v4139, %v4208
    %v4228 = vmul.f32 %v4140, %v4212
    %v4229 = vlaneseq
    %v4230 = vshrl.u32 %v4229, 7
    %v4231 = vsub.s32 2, %v4230
    %v4232 = vrot.slane %v676, %v4231
    %v4233 = vlaneseq
    %v4234 = vshrl.u32 %v4233, 7
    %v4235 = vsub.s32 6, %v4234
    %v4236 = vrot.slane %v676, %v4235
    %v4237 = vlaneseq
    %v4238 = vshrl.u32 %v4237, 7
    %v4239 = vsub.s32 2, %v4238
    %v4240 = vrot.slane %v677, %v4239
    %v4241 = vlaneseq
    %v4242 = vshrl.u32 %v4241, 7
    %v4243 = vsub.s32 6, %v4242
    %v4244 = vrot.slane %v677, %v4243
    %v4245 = vlaneseq
    %v4246 = vshrl.u32 %v4245, 7
    %v4247 = vsub.s32 2, %v4246
    %v4248 = vrot.slane %v678, %v4247
    %v4249 = vlaneseq
    %v4250 = vshrl.u32 %v4249, 7
    %v4251 = vsub.s32 6, %v4250
    %v4252 = vrot.slane %v678, %v4251
    %v4253 = vlaneseq
    %v4254 = vshrl.u32 %v4253, 7
    %v4255 = vsub.s32 2, %v4254
    %v4256 = vrot.slane %v679, %v4255
    %v4257 = vlaneseq
    %v4258 = vshrl.u32 %v4257, 7
    %v4259 = vsub.s32 6, %v4258
    %v4260 = vrot.slane %v679, %v4259
    %v4269 = vlaneseq
    %v4270 = vshrl.u32 %v4269, 7
    %v4271 = vsub.s32 2, %v4270
    %v4272 = vrot.slane %v4232, %v4271
    %v4273 = vlaneseq
    %v4274 = vshrl.u32 %v4273, 7
    %v4275 = vsub.s32 2, %v4274
    %v4276 = vrot.slane %v4236, %v4275
    %v4277 = vlaneseq
    %v4278 = vshrl.u32 %v4277, 7
    %v4279 = vsub.s32 2, %v4278
    %v4280 = vrot.slane %v4240, %v4279
    %v4281 = vlaneseq
    %v4282 = vshrl.u32 %v4281, 7
    %v4283 = vsub.s32 2, %v4282
    %v4284 = vrot.slane %v4244, %v4283
    %v4285 = vlaneseq
    %v4286 = vshrl.u32 %v4285, 7
    %v4287 = vsub.s32 2, %v4286
    %v4288 = vrot.slane %v4248, %v4287
    %v4289 = vlaneseq
    %v4290 = vshrl.u32 %v4289, 7
    %v4291 = vsub.s32 2, %v4290
    %v4292 = vrot.slane %v4252, %v4291
    %v4293 = vlaneseq
    %v4294 = vshrl.u32 %v4293, 7
    %v4295 = vsub.s32 2, %v4294
    %v4296 = vrot.slane %v4256, %v4295
    %v4297 = vlaneseq
    %v4298 = vshrl.u32 %v4297, 7
    %v4299 = vsub.s32 2, %v4298
    %v4300 = vrot.slane %v4260, %v4299
    %v4301 = vadd.f32 %v4213, %v4272
    %v4302 = vadd.f32 %v4214, %v4276
    %v4303 = vadd.f32 %v4215, %v4280
    %v4304 = vadd.f32 %v4216, %v4284
    %v4305 = vadd.f32 %v4217, %v4288
    %v4306 = vadd.f32 %v4218, %v4292
    %v4307 = vadd.f32 %v4219, %v4296
    %v4308 = vadd.f32 %v4220, %v4300
    %v4309 = vadd.f32 %v4221, %v4272
    %v4310 = vadd.f32 %v4222, %v4276
    %v4311 = vadd.f32 %v4223, %v4280
    %v4312 = vadd.f32 %v4224, %v4284
    %v4313 = vadd.f32 %v4225, %v4288
    %v4314 = vadd.f32 %v4226, %v4292
    %v4315 = vadd.f32 %v4227, %v4296
    %v4316 = vadd.f32 %v4228, %v4300
    %v4317 = vpack.c.bf16 %v4309, %v4301
    %v4318 = vpack.c.bf16 %v4310, %v4302
    %v4319 = vpack.c.bf16 %v4311, %v4303
    %v4320 = vpack.c.bf16 %v4312, %v4304
    %v4321 = vpack.c.bf16 %v4313, %v4305
    %v4322 = vpack.c.bf16 %v4314, %v4306
    %v4323 = vpack.c.bf16 %v4315, %v4307
    %v4324 = vpack.c.bf16 %v4316, %v4308
    %v4325 = vxor.u32 %v4317, 2147516416
    %v4326 = vxor.u32 %v4318, 2147516416
    %v4327 = vxor.u32 %v4319, 2147516416
    %v4328 = vxor.u32 %v4320, 2147516416
    %v4329 = vxor.u32 %v4321, 2147516416
    %v4330 = vxor.u32 %v4322, 2147516416
    %v4331 = vxor.u32 %v4323, 2147516416
    %v4332 = vxor.u32 %v4324, 2147516416
    %v4334 = vmul.bf16 %v4325, 1069105081
    %v4335 = vpow.bf16.pop %v4334
    %v4337 = vmul.bf16 %v4326, 1069105081
    %v4338 = vpow.bf16.pop %v4337
    %v4340 = vmul.bf16 %v4327, 1069105081
    %v4341 = vpow.bf16.pop %v4340
    %v4343 = vmul.bf16 %v4328, 1069105081
    %v4344 = vpow.bf16.pop %v4343
    %v4346 = vmul.bf16 %v4329, 1069105081
    %v4347 = vpow.bf16.pop %v4346
    %v4349 = vmul.bf16 %v4330, 1069105081
    %v4350 = vpow.bf16.pop %v4349
    %v4352 = vmul.bf16 %v4331, 1069105081
    %v4353 = vpow.bf16.pop %v4352
    %v4355 = vmul.bf16 %v4332, 1069105081
    %v4356 = vpow.bf16.pop %v4355
    %v4357 = vadd.bf16 %v4335, 1065369472
    %v4358 = vadd.bf16 %v4338, 1065369472
    %v4359 = vadd.bf16 %v4341, 1065369472
    %v4360 = vadd.bf16 %v4344, 1065369472
    %v4361 = vadd.bf16 %v4347, 1065369472
    %v4362 = vadd.bf16 %v4350, 1065369472
    %v4363 = vadd.bf16 %v4353, 1065369472
    %v4364 = vadd.bf16 %v4356, 1065369472
    %v4365 = vrcp.bf16.pop %v4357
    %v4366 = vmul.bf16 1065369472, %v4365
    %v4367 = vrcp.bf16.pop %v4358
    %v4368 = vmul.bf16 1065369472, %v4367
    %v4369 = vrcp.bf16.pop %v4359
    %v4370 = vmul.bf16 1065369472, %v4369
    %v4371 = vrcp.bf16.pop %v4360
    %v4372 = vmul.bf16 1065369472, %v4371
    %v4373 = vrcp.bf16.pop %v4361
    %v4374 = vmul.bf16 1065369472, %v4373
    %v4375 = vrcp.bf16.pop %v4362
    %v4376 = vmul.bf16 1065369472, %v4375
    %v4377 = vrcp.bf16.pop %v4363
    %v4378 = vmul.bf16 1065369472, %v4377
    %v4379 = vrcp.bf16.pop %v4364
    %v4380 = vmul.bf16 1065369472, %v4379
    %v4381 = vmul.bf16 %v4317, %v4366
    %v4382 = vmul.bf16 %v4318, %v4368
    %v4383 = vmul.bf16 %v4319, %v4370
    %v4384 = vmul.bf16 %v4320, %v4372
    %v4385 = vmul.bf16 %v4321, %v4374
    %v4386 = vmul.bf16 %v4322, %v4376
    %v4387 = vmul.bf16 %v4323, %v4378
    %v4388 = vmul.bf16 %v4324, %v4380
    %s4389 = smul.u32 4, 128
    %s4390 = smul.u32 %s4389, 6
    %s4391 = sshll.u32 %s4390, 4
    %4392 = dma.done [#allocation4], %s4391
    %v4393 = vld [vmem:[#allocation2] sm:$0xff]
    %v4394 = vld [vmem:[#allocation2 + $0x8] sm:$0xff]
    %v4395 = vld [vmem:[#allocation2 + $0x10] sm:$0xff]
    %v4396 = vld [vmem:[#allocation2 + $0x18] sm:$0xff]
    %v4397 = vld [vmem:[#allocation2 + $0x20] sm:$0xff]
    %v4398 = vld [vmem:[#allocation2 + $0x28] sm:$0xff]
    %v4399 = vld [vmem:[#allocation2 + $0x30] sm:$0xff]
    %v4400 = vld [vmem:[#allocation2 + $0x38] sm:$0xff]
    %v4401 = vld [vmem:[#allocation2 + $0x40] sm:$0xff]
    %v4402 = vld [vmem:[#allocation2 + $0x48] sm:$0xff]
    %v4403 = vld [vmem:[#allocation2 + $0x50] sm:$0xff]
    %v4404 = vld [vmem:[#allocation2 + $0x58] sm:$0xff]
    %v4405 = vld [vmem:[#allocation2 + $0x60] sm:$0xff]
    %v4406 = vld [vmem:[#allocation2 + $0x68] sm:$0xff]
    %v4407 = vld [vmem:[#allocation2 + $0x70] sm:$0xff]
    %v4408 = vld [vmem:[#allocation2 + $0x78] sm:$0xff]
    %v4409 = vld [vmem:[#allocation2 + $0x80] sm:$0xff]
    %v4410 = vld [vmem:[#allocation2 + $0x88] sm:$0xff]
    %v4411 = vld [vmem:[#allocation2 + $0x90] sm:$0xff]
    %v4412 = vld [vmem:[#allocation2 + $0x98] sm:$0xff]
    %v4413 = vld [vmem:[#allocation2 + $0xa0] sm:$0xff]
    %v4414 = vld [vmem:[#allocation2 + $0xa8] sm:$0xff]
    %v4415 = vld [vmem:[#allocation2 + $0xb0] sm:$0xff]
    %v4416 = vld [vmem:[#allocation2 + $0xb8] sm:$0xff]
    %v4417 = vld [vmem:[#allocation2 + $0xc0] sm:$0xff]
    %v4418 = vld [vmem:[#allocation2 + $0xc8] sm:$0xff]
    %v4419 = vld [vmem:[#allocation2 + $0xd0] sm:$0xff]
    %v4420 = vld [vmem:[#allocation2 + $0xd8] sm:$0xff]
    %v4421 = vld [vmem:[#allocation2 + $0xe0] sm:$0xff]
    %v4422 = vld [vmem:[#allocation2 + $0xe8] sm:$0xff]
    %v4423 = vld [vmem:[#allocation2 + $0xf0] sm:$0xff]
    %v4424 = vld [vmem:[#allocation2 + $0xf8] sm:$0xff]
    %v4425 = vld [vmem:[#allocation2 + $0x100] sm:$0xff]
    %v4426 = vld [vmem:[#allocation2 + $0x108] sm:$0xff]
    %v4427 = vld [vmem:[#allocation2 + $0x110] sm:$0xff]
    %v4428 = vld [vmem:[#allocation2 + $0x118] sm:$0xff]
    %v4429 = vld [vmem:[#allocation2 + $0x120] sm:$0xff]
    %v4430 = vld [vmem:[#allocation2 + $0x128] sm:$0xff]
    %v4431 = vld [vmem:[#allocation2 + $0x130] sm:$0xff]
    %v4432 = vld [vmem:[#allocation2 + $0x138] sm:$0xff]
    %v4433 = vld [vmem:[#allocation2 + $0x140] sm:$0xff]
    %v4434 = vld [vmem:[#allocation2 + $0x148] sm:$0xff]
    %v4435 = vld [vmem:[#allocation2 + $0x150] sm:$0xff]
    %v4436 = vld [vmem:[#allocation2 + $0x158] sm:$0xff]
    %v4437 = vld [vmem:[#allocation2 + $0x160] sm:$0xff]
    %v4438 = vld [vmem:[#allocation2 + $0x168] sm:$0xff]
    %v4439 = vld [vmem:[#allocation2 + $0x170] sm:$0xff]
    %v4440 = vld [vmem:[#allocation2 + $0x178] sm:$0xff]
    %v4441 = vld [vmem:[#allocation2 + $0x180] sm:$0xff]
    %v4442 = vld [vmem:[#allocation2 + $0x188] sm:$0xff]
    %v4443 = vld [vmem:[#allocation2 + $0x190] sm:$0xff]
    %v4444 = vld [vmem:[#allocation2 + $0x198] sm:$0xff]
    %v4445 = vld [vmem:[#allocation2 + $0x1a0] sm:$0xff]
    %v4446 = vld [vmem:[#allocation2 + $0x1a8] sm:$0xff]
    %v4447 = vld [vmem:[#allocation2 + $0x1b0] sm:$0xff]
    %v4448 = vld [vmem:[#allocation2 + $0x1b8] sm:$0xff]
    %v4449 = vld [vmem:[#allocation2 + $0x1c0] sm:$0xff]
    %v4450 = vld [vmem:[#allocation2 + $0x1c8] sm:$0xff]
    %v4451 = vld [vmem:[#allocation2 + $0x1d0] sm:$0xff]
    %v4452 = vld [vmem:[#allocation2 + $0x1d8] sm:$0xff]
    %v4453 = vld [vmem:[#allocation2 + $0x1e0] sm:$0xff]
    %v4454 = vld [vmem:[#allocation2 + $0x1e8] sm:$0xff]
    %v4455 = vld [vmem:[#allocation2 + $0x1f0] sm:$0xff]
    %v4456 = vld [vmem:[#allocation2 + $0x1f8] sm:$0xff]
    %v4457 = vld [vmem:[#allocation2 + $0x200] sm:$0xff]
    %v4458 = vld [vmem:[#allocation2 + $0x208] sm:$0xff]
    %v4459 = vld [vmem:[#allocation2 + $0x210] sm:$0xff]
    %v4460 = vld [vmem:[#allocation2 + $0x218] sm:$0xff]
    %v4461 = vld [vmem:[#allocation2 + $0x220] sm:$0xff]
    %v4462 = vld [vmem:[#allocation2 + $0x228] sm:$0xff]
    %v4463 = vld [vmem:[#allocation2 + $0x230] sm:$0xff]
    %v4464 = vld [vmem:[#allocation2 + $0x238] sm:$0xff]
    %v4465 = vld [vmem:[#allocation2 + $0x240] sm:$0xff]
    %v4466 = vld [vmem:[#allocation2 + $0x248] sm:$0xff]
    %v4467 = vld [vmem:[#allocation2 + $0x250] sm:$0xff]
    %v4468 = vld [vmem:[#allocation2 + $0x258] sm:$0xff]
    %v4469 = vld [vmem:[#allocation2 + $0x260] sm:$0xff]
    %v4470 = vld [vmem:[#allocation2 + $0x268] sm:$0xff]
    %v4471 = vld [vmem:[#allocation2 + $0x270] sm:$0xff]
    %v4472 = vld [vmem:[#allocation2 + $0x278] sm:$0xff]
    %v4473 = vld [vmem:[#allocation2 + $0x280] sm:$0xff]
    %v4474 = vld [vmem:[#allocation2 + $0x288] sm:$0xff]
    %v4475 = vld [vmem:[#allocation2 + $0x290] sm:$0xff]
    %v4476 = vld [vmem:[#allocation2 + $0x298] sm:$0xff]
    %v4477 = vld [vmem:[#allocation2 + $0x2a0] sm:$0xff]
    %v4478 = vld [vmem:[#allocation2 + $0x2a8] sm:$0xff]
    %v4479 = vld [vmem:[#allocation2 + $0x2b0] sm:$0xff]
    %v4480 = vld [vmem:[#allocation2 + $0x2b8] sm:$0xff]
    %v4481 = vld [vmem:[#allocation2 + $0x2c0] sm:$0xff]
    %v4482 = vld [vmem:[#allocation2 + $0x2c8] sm:$0xff]
    %v4483 = vld [vmem:[#allocation2 + $0x2d0] sm:$0xff]
    %v4484 = vld [vmem:[#allocation2 + $0x2d8] sm:$0xff]
    %v4485 = vld [vmem:[#allocation2 + $0x2e0] sm:$0xff]
    %v4486 = vld [vmem:[#allocation2 + $0x2e8] sm:$0xff]
    %v4487 = vld [vmem:[#allocation2 + $0x2f0] sm:$0xff]
    %v4488 = vld [vmem:[#allocation2 + $0x2f8] sm:$0xff]
    %v4489 = vld [vmem:[#allocation2 + $0x300] sm:$0xff]
    %v4490 = vld [vmem:[#allocation2 + $0x308] sm:$0xff]
    %v4491 = vld [vmem:[#allocation2 + $0x310] sm:$0xff]
    %v4492 = vld [vmem:[#allocation2 + $0x318] sm:$0xff]
    %v4493 = vld [vmem:[#allocation2 + $0x320] sm:$0xff]
    %v4494 = vld [vmem:[#allocation2 + $0x328] sm:$0xff]
    %v4495 = vld [vmem:[#allocation2 + $0x330] sm:$0xff]
    %v4496 = vld [vmem:[#allocation2 + $0x338] sm:$0xff]
    %v4497 = vld [vmem:[#allocation2 + $0x340] sm:$0xff]
    %v4498 = vld [vmem:[#allocation2 + $0x348] sm:$0xff]
    %v4499 = vld [vmem:[#allocation2 + $0x350] sm:$0xff]
    %v4500 = vld [vmem:[#allocation2 + $0x358] sm:$0xff]
    %v4501 = vld [vmem:[#allocation2 + $0x360] sm:$0xff]
    %v4502 = vld [vmem:[#allocation2 + $0x368] sm:$0xff]
    %v4503 = vld [vmem:[#allocation2 + $0x370] sm:$0xff]
    %v4504 = vld [vmem:[#allocation2 + $0x378] sm:$0xff]
    %v4505 = vld [vmem:[#allocation2 + $0x380] sm:$0xff]
    %v4506 = vld [vmem:[#allocation2 + $0x388] sm:$0xff]
    %v4507 = vld [vmem:[#allocation2 + $0x390] sm:$0xff]
    %v4508 = vld [vmem:[#allocation2 + $0x398] sm:$0xff]
    %v4509 = vld [vmem:[#allocation2 + $0x3a0] sm:$0xff]
    %v4510 = vld [vmem:[#allocation2 + $0x3a8] sm:$0xff]
    %v4511 = vld [vmem:[#allocation2 + $0x3b0] sm:$0xff]
    %v4512 = vld [vmem:[#allocation2 + $0x3b8] sm:$0xff]
    %v4513 = vld [vmem:[#allocation2 + $0x3c0] sm:$0xff]
    %v4514 = vld [vmem:[#allocation2 + $0x3c8] sm:$0xff]
    %v4515 = vld [vmem:[#allocation2 + $0x3d0] sm:$0xff]
    %v4516 = vld [vmem:[#allocation2 + $0x3d8] sm:$0xff]
    %v4517 = vld [vmem:[#allocation2 + $0x3e0] sm:$0xff]
    %v4518 = vld [vmem:[#allocation2 + $0x3e8] sm:$0xff]
    %v4519 = vld [vmem:[#allocation2 + $0x3f0] sm:$0xff]
    %v4520 = vld [vmem:[#allocation2 + $0x3f8] sm:$0xff]
    %v4521 = vld [vmem:[#allocation2 + $0x400] sm:$0xff]
    %v4522 = vld [vmem:[#allocation2 + $0x408] sm:$0xff]
    %v4523 = vld [vmem:[#allocation2 + $0x410] sm:$0xff]
    %v4524 = vld [vmem:[#allocation2 + $0x418] sm:$0xff]
    %v4525 = vld [vmem:[#allocation2 + $0x420] sm:$0xff]
    %v4526 = vld [vmem:[#allocation2 + $0x428] sm:$0xff]
    %v4527 = vld [vmem:[#allocation2 + $0x430] sm:$0xff]
    %v4528 = vld [vmem:[#allocation2 + $0x438] sm:$0xff]
    %v4529 = vld [vmem:[#allocation2 + $0x440] sm:$0xff]
    %v4530 = vld [vmem:[#allocation2 + $0x448] sm:$0xff]
    %v4531 = vld [vmem:[#allocation2 + $0x450] sm:$0xff]
    %v4532 = vld [vmem:[#allocation2 + $0x458] sm:$0xff]
    %v4533 = vld [vmem:[#allocation2 + $0x460] sm:$0xff]
    %v4534 = vld [vmem:[#allocation2 + $0x468] sm:$0xff]
    %v4535 = vld [vmem:[#allocation2 + $0x470] sm:$0xff]
    %v4536 = vld [vmem:[#allocation2 + $0x478] sm:$0xff]
    %v4537 = vld [vmem:[#allocation2 + $0x480] sm:$0xff]
    %v4538 = vld [vmem:[#allocation2 + $0x488] sm:$0xff]
    %v4539 = vld [vmem:[#allocation2 + $0x490] sm:$0xff]
    %v4540 = vld [vmem:[#allocation2 + $0x498] sm:$0xff]
    %v4541 = vld [vmem:[#allocation2 + $0x4a0] sm:$0xff]
    %v4542 = vld [vmem:[#allocation2 + $0x4a8] sm:$0xff]
    %v4543 = vld [vmem:[#allocation2 + $0x4b0] sm:$0xff]
    %v4544 = vld [vmem:[#allocation2 + $0x4b8] sm:$0xff]
    %v4545 = vld [vmem:[#allocation2 + $0x4c0] sm:$0xff]
    %v4546 = vld [vmem:[#allocation2 + $0x4c8] sm:$0xff]
    %v4547 = vld [vmem:[#allocation2 + $0x4d0] sm:$0xff]
    %v4548 = vld [vmem:[#allocation2 + $0x4d8] sm:$0xff]
    %v4549 = vld [vmem:[#allocation2 + $0x4e0] sm:$0xff]
    %v4550 = vld [vmem:[#allocation2 + $0x4e8] sm:$0xff]
    %v4551 = vld [vmem:[#allocation2 + $0x4f0] sm:$0xff]
    %v4552 = vld [vmem:[#allocation2 + $0x4f8] sm:$0xff]
    %v4553 = vld [vmem:[#allocation2 + $0x500] sm:$0xff]
    %v4554 = vld [vmem:[#allocation2 + $0x508] sm:$0xff]
    %v4555 = vld [vmem:[#allocation2 + $0x510] sm:$0xff]
    %v4556 = vld [vmem:[#allocation2 + $0x518] sm:$0xff]
    %v4557 = vld [vmem:[#allocation2 + $0x520] sm:$0xff]
    %v4558 = vld [vmem:[#allocation2 + $0x528] sm:$0xff]
    %v4559 = vld [vmem:[#allocation2 + $0x530] sm:$0xff]
    %v4560 = vld [vmem:[#allocation2 + $0x538] sm:$0xff]
    %v4561 = vld [vmem:[#allocation2 + $0x540] sm:$0xff]
    %v4562 = vld [vmem:[#allocation2 + $0x548] sm:$0xff]
    %v4563 = vld [vmem:[#allocation2 + $0x550] sm:$0xff]
    %v4564 = vld [vmem:[#allocation2 + $0x558] sm:$0xff]
    %v4565 = vld [vmem:[#allocation2 + $0x560] sm:$0xff]
    %v4566 = vld [vmem:[#allocation2 + $0x568] sm:$0xff]
    %v4567 = vld [vmem:[#allocation2 + $0x570] sm:$0xff]
    %v4568 = vld [vmem:[#allocation2 + $0x578] sm:$0xff]
    %v4569 = vld [vmem:[#allocation2 + $0x580] sm:$0xff]
    %v4570 = vld [vmem:[#allocation2 + $0x588] sm:$0xff]
    %v4571 = vld [vmem:[#allocation2 + $0x590] sm:$0xff]
    %v4572 = vld [vmem:[#allocation2 + $0x598] sm:$0xff]
    %v4573 = vld [vmem:[#allocation2 + $0x5a0] sm:$0xff]
    %v4574 = vld [vmem:[#allocation2 + $0x5a8] sm:$0xff]
    %v4575 = vld [vmem:[#allocation2 + $0x5b0] sm:$0xff]
    %v4576 = vld [vmem:[#allocation2 + $0x5b8] sm:$0xff]
    %v4577 = vld [vmem:[#allocation2 + $0x5c0] sm:$0xff]
    %v4578 = vld [vmem:[#allocation2 + $0x5c8] sm:$0xff]
    %v4579 = vld [vmem:[#allocation2 + $0x5d0] sm:$0xff]
    %v4580 = vld [vmem:[#allocation2 + $0x5d8] sm:$0xff]
    %v4581 = vld [vmem:[#allocation2 + $0x5e0] sm:$0xff]
    %v4582 = vld [vmem:[#allocation2 + $0x5e8] sm:$0xff]
    %v4583 = vld [vmem:[#allocation2 + $0x5f0] sm:$0xff]
    %v4584 = vld [vmem:[#allocation2 + $0x5f8] sm:$0xff]
    %v4585 = vld [vmem:[#allocation2 + $0x600] sm:$0xff]
    %v4586 = vld [vmem:[#allocation2 + $0x608] sm:$0xff]
    %v4587 = vld [vmem:[#allocation2 + $0x610] sm:$0xff]
    %v4588 = vld [vmem:[#allocation2 + $0x618] sm:$0xff]
    %v4589 = vld [vmem:[#allocation2 + $0x620] sm:$0xff]
    %v4590 = vld [vmem:[#allocation2 + $0x628] sm:$0xff]
    %v4591 = vld [vmem:[#allocation2 + $0x630] sm:$0xff]
    %v4592 = vld [vmem:[#allocation2 + $0x638] sm:$0xff]
    %v4593 = vld [vmem:[#allocation2 + $0x640] sm:$0xff]
    %v4594 = vld [vmem:[#allocation2 + $0x648] sm:$0xff]
    %v4595 = vld [vmem:[#allocation2 + $0x650] sm:$0xff]
    %v4596 = vld [vmem:[#allocation2 + $0x658] sm:$0xff]
    %v4597 = vld [vmem:[#allocation2 + $0x660] sm:$0xff]
    %v4598 = vld [vmem:[#allocation2 + $0x668] sm:$0xff]
    %v4599 = vld [vmem:[#allocation2 + $0x670] sm:$0xff]
    %v4600 = vld [vmem:[#allocation2 + $0x678] sm:$0xff]
    %v4601 = vld [vmem:[#allocation2 + $0x680] sm:$0xff]
    %v4602 = vld [vmem:[#allocation2 + $0x688] sm:$0xff]
    %v4603 = vld [vmem:[#allocation2 + $0x690] sm:$0xff]
    %v4604 = vld [vmem:[#allocation2 + $0x698] sm:$0xff]
    %v4605 = vld [vmem:[#allocation2 + $0x6a0] sm:$0xff]
    %v4606 = vld [vmem:[#allocation2 + $0x6a8] sm:$0xff]
    %v4607 = vld [vmem:[#allocation2 + $0x6b0] sm:$0xff]
    %v4608 = vld [vmem:[#allocation2 + $0x6b8] sm:$0xff]
    %v4609 = vld [vmem:[#allocation2 + $0x6c0] sm:$0xff]
    %v4610 = vld [vmem:[#allocation2 + $0x6c8] sm:$0xff]
    %v4611 = vld [vmem:[#allocation2 + $0x6d0] sm:$0xff]
    %v4612 = vld [vmem:[#allocation2 + $0x6d8] sm:$0xff]
    %v4613 = vld [vmem:[#allocation2 + $0x6e0] sm:$0xff]
    %v4614 = vld [vmem:[#allocation2 + $0x6e8] sm:$0xff]
    %v4615 = vld [vmem:[#allocation2 + $0x6f0] sm:$0xff]
    %v4616 = vld [vmem:[#allocation2 + $0x6f8] sm:$0xff]
    %v4617 = vld [vmem:[#allocation2 + $0x700] sm:$0xff]
    %v4618 = vld [vmem:[#allocation2 + $0x708] sm:$0xff]
    %v4619 = vld [vmem:[#allocation2 + $0x710] sm:$0xff]
    %v4620 = vld [vmem:[#allocation2 + $0x718] sm:$0xff]
    %v4621 = vld [vmem:[#allocation2 + $0x720] sm:$0xff]
    %v4622 = vld [vmem:[#allocation2 + $0x728] sm:$0xff]
    %v4623 = vld [vmem:[#allocation2 + $0x730] sm:$0xff]
    %v4624 = vld [vmem:[#allocation2 + $0x738] sm:$0xff]
    %v4625 = vld [vmem:[#allocation2 + $0x740] sm:$0xff]
    %v4626 = vld [vmem:[#allocation2 + $0x748] sm:$0xff]
    %v4627 = vld [vmem:[#allocation2 + $0x750] sm:$0xff]
    %v4628 = vld [vmem:[#allocation2 + $0x758] sm:$0xff]
    %v4629 = vld [vmem:[#allocation2 + $0x760] sm:$0xff]
    %v4630 = vld [vmem:[#allocation2 + $0x768] sm:$0xff]
    %v4631 = vld [vmem:[#allocation2 + $0x770] sm:$0xff]
    %v4632 = vld [vmem:[#allocation2 + $0x778] sm:$0xff]
    %v4633 = vld [vmem:[#allocation2 + $0x780] sm:$0xff]
    %v4634 = vld [vmem:[#allocation2 + $0x788] sm:$0xff]
    %v4635 = vld [vmem:[#allocation2 + $0x790] sm:$0xff]
    %v4636 = vld [vmem:[#allocation2 + $0x798] sm:$0xff]
    %v4637 = vld [vmem:[#allocation2 + $0x7a0] sm:$0xff]
    %v4638 = vld [vmem:[#allocation2 + $0x7a8] sm:$0xff]
    %v4639 = vld [vmem:[#allocation2 + $0x7b0] sm:$0xff]
    %v4640 = vld [vmem:[#allocation2 + $0x7b8] sm:$0xff]
    %v4641 = vld [vmem:[#allocation2 + $0x7c0] sm:$0xff]
    %v4642 = vld [vmem:[#allocation2 + $0x7c8] sm:$0xff]
    %v4643 = vld [vmem:[#allocation2 + $0x7d0] sm:$0xff]
    %v4644 = vld [vmem:[#allocation2 + $0x7d8] sm:$0xff]
    %v4645 = vld [vmem:[#allocation2 + $0x7e0] sm:$0xff]
    %v4646 = vld [vmem:[#allocation2 + $0x7e8] sm:$0xff]
    %v4647 = vld [vmem:[#allocation2 + $0x7f0] sm:$0xff]
    %v4648 = vld [vmem:[#allocation2 + $0x7f8] sm:$0xff]
    %v4649 = vld [vmem:[#allocation2 + $0x800] sm:$0xff]
    %v4650 = vld [vmem:[#allocation2 + $0x808] sm:$0xff]
    %v4651 = vld [vmem:[#allocation2 + $0x810] sm:$0xff]
    %v4652 = vld [vmem:[#allocation2 + $0x818] sm:$0xff]
    %v4653 = vld [vmem:[#allocation2 + $0x820] sm:$0xff]
    %v4654 = vld [vmem:[#allocation2 + $0x828] sm:$0xff]
    %v4655 = vld [vmem:[#allocation2 + $0x830] sm:$0xff]
    %v4656 = vld [vmem:[#allocation2 + $0x838] sm:$0xff]
    %v4657 = vld [vmem:[#allocation2 + $0x840] sm:$0xff]
    %v4658 = vld [vmem:[#allocation2 + $0x848] sm:$0xff]
    %v4659 = vld [vmem:[#allocation2 + $0x850] sm:$0xff]
    %v4660 = vld [vmem:[#allocation2 + $0x858] sm:$0xff]
    %v4661 = vld [vmem:[#allocation2 + $0x860] sm:$0xff]
    %v4662 = vld [vmem:[#allocation2 + $0x868] sm:$0xff]
    %v4663 = vld [vmem:[#allocation2 + $0x870] sm:$0xff]
    %v4664 = vld [vmem:[#allocation2 + $0x878] sm:$0xff]
    %v4665 = vld [vmem:[#allocation2 + $0x880] sm:$0xff]
    %v4666 = vld [vmem:[#allocation2 + $0x888] sm:$0xff]
    %v4667 = vld [vmem:[#allocation2 + $0x890] sm:$0xff]
    %v4668 = vld [vmem:[#allocation2 + $0x898] sm:$0xff]
    %v4669 = vld [vmem:[#allocation2 + $0x8a0] sm:$0xff]
    %v4670 = vld [vmem:[#allocation2 + $0x8a8] sm:$0xff]
    %v4671 = vld [vmem:[#allocation2 + $0x8b0] sm:$0xff]
    %v4672 = vld [vmem:[#allocation2 + $0x8b8] sm:$0xff]
    %v4673 = vld [vmem:[#allocation2 + $0x8c0] sm:$0xff]
    %v4674 = vld [vmem:[#allocation2 + $0x8c8] sm:$0xff]
    %v4675 = vld [vmem:[#allocation2 + $0x8d0] sm:$0xff]
    %v4676 = vld [vmem:[#allocation2 + $0x8d8] sm:$0xff]
    %v4677 = vld [vmem:[#allocation2 + $0x8e0] sm:$0xff]
    %v4678 = vld [vmem:[#allocation2 + $0x8e8] sm:$0xff]
    %v4679 = vld [vmem:[#allocation2 + $0x8f0] sm:$0xff]
    %v4680 = vld [vmem:[#allocation2 + $0x8f8] sm:$0xff]
    %v4681 = vld [vmem:[#allocation2 + $0x900] sm:$0xff]
    %v4682 = vld [vmem:[#allocation2 + $0x908] sm:$0xff]
    %v4683 = vld [vmem:[#allocation2 + $0x910] sm:$0xff]
    %v4684 = vld [vmem:[#allocation2 + $0x918] sm:$0xff]
    %v4685 = vld [vmem:[#allocation2 + $0x920] sm:$0xff]
    %v4686 = vld [vmem:[#allocation2 + $0x928] sm:$0xff]
    %v4687 = vld [vmem:[#allocation2 + $0x930] sm:$0xff]
    %v4688 = vld [vmem:[#allocation2 + $0x938] sm:$0xff]
    %v4689 = vld [vmem:[#allocation2 + $0x940] sm:$0xff]
    %v4690 = vld [vmem:[#allocation2 + $0x948] sm:$0xff]
    %v4691 = vld [vmem:[#allocation2 + $0x950] sm:$0xff]
    %v4692 = vld [vmem:[#allocation2 + $0x958] sm:$0xff]
    %v4693 = vld [vmem:[#allocation2 + $0x960] sm:$0xff]
    %v4694 = vld [vmem:[#allocation2 + $0x968] sm:$0xff]
    %v4695 = vld [vmem:[#allocation2 + $0x970] sm:$0xff]
    %v4696 = vld [vmem:[#allocation2 + $0x978] sm:$0xff]
    %v4697 = vld [vmem:[#allocation2 + $0x980] sm:$0xff]
    %v4698 = vld [vmem:[#allocation2 + $0x988] sm:$0xff]
    %v4699 = vld [vmem:[#allocation2 + $0x990] sm:$0xff]
    %v4700 = vld [vmem:[#allocation2 + $0x998] sm:$0xff]
    %v4701 = vld [vmem:[#allocation2 + $0x9a0] sm:$0xff]
    %v4702 = vld [vmem:[#allocation2 + $0x9a8] sm:$0xff]
    %v4703 = vld [vmem:[#allocation2 + $0x9b0] sm:$0xff]
    %v4704 = vld [vmem:[#allocation2 + $0x9b8] sm:$0xff]
    %v4705 = vld [vmem:[#allocation2 + $0x9c0] sm:$0xff]
    %v4706 = vld [vmem:[#allocation2 + $0x9c8] sm:$0xff]
    %v4707 = vld [vmem:[#allocation2 + $0x9d0] sm:$0xff]
    %v4708 = vld [vmem:[#allocation2 + $0x9d8] sm:$0xff]
    %v4709 = vld [vmem:[#allocation2 + $0x9e0] sm:$0xff]
    %v4710 = vld [vmem:[#allocation2 + $0x9e8] sm:$0xff]
    %v4711 = vld [vmem:[#allocation2 + $0x9f0] sm:$0xff]
    %v4712 = vld [vmem:[#allocation2 + $0x9f8] sm:$0xff]
    %v4713 = vld [vmem:[#allocation2 + $0xa00] sm:$0xff]
    %v4714 = vld [vmem:[#allocation2 + $0xa08] sm:$0xff]
    %v4715 = vld [vmem:[#allocation2 + $0xa10] sm:$0xff]
    %v4716 = vld [vmem:[#allocation2 + $0xa18] sm:$0xff]
    %v4717 = vld [vmem:[#allocation2 + $0xa20] sm:$0xff]
    %v4718 = vld [vmem:[#allocation2 + $0xa28] sm:$0xff]
    %v4719 = vld [vmem:[#allocation2 + $0xa30] sm:$0xff]
    %v4720 = vld [vmem:[#allocation2 + $0xa38] sm:$0xff]
    %v4721 = vld [vmem:[#allocation2 + $0xa40] sm:$0xff]
    %v4722 = vld [vmem:[#allocation2 + $0xa48] sm:$0xff]
    %v4723 = vld [vmem:[#allocation2 + $0xa50] sm:$0xff]
    %v4724 = vld [vmem:[#allocation2 + $0xa58] sm:$0xff]
    %v4725 = vld [vmem:[#allocation2 + $0xa60] sm:$0xff]
    %v4726 = vld [vmem:[#allocation2 + $0xa68] sm:$0xff]
    %v4727 = vld [vmem:[#allocation2 + $0xa70] sm:$0xff]
    %v4728 = vld [vmem:[#allocation2 + $0xa78] sm:$0xff]
    %v4729 = vld [vmem:[#allocation2 + $0xa80] sm:$0xff]
    %v4730 = vld [vmem:[#allocation2 + $0xa88] sm:$0xff]
    %v4731 = vld [vmem:[#allocation2 + $0xa90] sm:$0xff]
    %v4732 = vld [vmem:[#allocation2 + $0xa98] sm:$0xff]
    %v4733 = vld [vmem:[#allocation2 + $0xaa0] sm:$0xff]
    %v4734 = vld [vmem:[#allocation2 + $0xaa8] sm:$0xff]
    %v4735 = vld [vmem:[#allocation2 + $0xab0] sm:$0xff]
    %v4736 = vld [vmem:[#allocation2 + $0xab8] sm:$0xff]
    %v4737 = vld [vmem:[#allocation2 + $0xac0] sm:$0xff]
    %v4738 = vld [vmem:[#allocation2 + $0xac8] sm:$0xff]
    %v4739 = vld [vmem:[#allocation2 + $0xad0] sm:$0xff]
    %v4740 = vld [vmem:[#allocation2 + $0xad8] sm:$0xff]
    %v4741 = vld [vmem:[#allocation2 + $0xae0] sm:$0xff]
    %v4742 = vld [vmem:[#allocation2 + $0xae8] sm:$0xff]
    %v4743 = vld [vmem:[#allocation2 + $0xaf0] sm:$0xff]
    %v4744 = vld [vmem:[#allocation2 + $0xaf8] sm:$0xff]
    %v4745 = vld [vmem:[#allocation2 + $0xb00] sm:$0xff]
    %v4746 = vld [vmem:[#allocation2 + $0xb08] sm:$0xff]
    %v4747 = vld [vmem:[#allocation2 + $0xb10] sm:$0xff]
    %v4748 = vld [vmem:[#allocation2 + $0xb18] sm:$0xff]
    %v4749 = vld [vmem:[#allocation2 + $0xb20] sm:$0xff]
    %v4750 = vld [vmem:[#allocation2 + $0xb28] sm:$0xff]
    %v4751 = vld [vmem:[#allocation2 + $0xb30] sm:$0xff]
    %v4752 = vld [vmem:[#allocation2 + $0xb38] sm:$0xff]
    %v4753 = vld [vmem:[#allocation2 + $0xb40] sm:$0xff]
    %v4754 = vld [vmem:[#allocation2 + $0xb48] sm:$0xff]
    %v4755 = vld [vmem:[#allocation2 + $0xb50] sm:$0xff]
    %v4756 = vld [vmem:[#allocation2 + $0xb58] sm:$0xff]
    %v4757 = vld [vmem:[#allocation2 + $0xb60] sm:$0xff]
    %v4758 = vld [vmem:[#allocation2 + $0xb68] sm:$0xff]
    %v4759 = vld [vmem:[#allocation2 + $0xb70] sm:$0xff]
    %v4760 = vld [vmem:[#allocation2 + $0xb78] sm:$0xff]
    %v4761 = vld [vmem:[#allocation2 + $0xb80] sm:$0xff]
    %v4762 = vld [vmem:[#allocation2 + $0xb88] sm:$0xff]
    %v4763 = vld [vmem:[#allocation2 + $0xb90] sm:$0xff]
    %v4764 = vld [vmem:[#allocation2 + $0xb98] sm:$0xff]
    %v4765 = vld [vmem:[#allocation2 + $0xba0] sm:$0xff]
    %v4766 = vld [vmem:[#allocation2 + $0xba8] sm:$0xff]
    %v4767 = vld [vmem:[#allocation2 + $0xbb0] sm:$0xff]
    %v4768 = vld [vmem:[#allocation2 + $0xbb8] sm:$0xff]
    %v4769 = vld [vmem:[#allocation2 + $0xbc0] sm:$0xff]
    %v4770 = vld [vmem:[#allocation2 + $0xbc8] sm:$0xff]
    %v4771 = vld [vmem:[#allocation2 + $0xbd0] sm:$0xff]
    %v4772 = vld [vmem:[#allocation2 + $0xbd8] sm:$0xff]
    %v4773 = vld [vmem:[#allocation2 + $0xbe0] sm:$0xff]
    %v4774 = vld [vmem:[#allocation2 + $0xbe8] sm:$0xff]
    %v4775 = vld [vmem:[#allocation2 + $0xbf0] sm:$0xff]
    %v4776 = vld [vmem:[#allocation2 + $0xbf8] sm:$0xff]
    %v4777 = vld [vmem:[#allocation11] sm:$0x77]
    %v4778 = vld [vmem:[#allocation11 + $0x8] sm:$0x77]
    %v4779 = vld [vmem:[#allocation11 + $0x10] sm:$0x77]
    %v4783 = vlaneseq
    %v4784 = vshrl.u32 %v4783, 7
    %v4785 = vsub.s32 0, %v4784
    %v4786 = vrot.slane %v4777, %v4785
    %v4787 = vlaneseq
    %v4788 = vshrl.u32 %v4787, 7
    %v4789 = vsub.s32 4, %v4788
    %v4790 = vrot.slane %v4777, %v4789
    %v4791 = vlaneseq
    %v4792 = vshrl.u32 %v4791, 7
    %v4793 = vsub.s32 0, %v4792
    %v4794 = vrot.slane %v4778, %v4793
    %v4795 = vlaneseq
    %v4796 = vshrl.u32 %v4795, 7
    %v4797 = vsub.s32 4, %v4796
    %v4798 = vrot.slane %v4778, %v4797
    %v4799 = vlaneseq
    %v4800 = vshrl.u32 %v4799, 7
    %v4801 = vsub.s32 0, %v4800
    %v4802 = vrot.slane %v4779, %v4801
    %v4803 = vlaneseq
    %v4804 = vshrl.u32 %v4803, 7
    %v4805 = vsub.s32 4, %v4804
    %v4806 = vrot.slane %v4779, %v4805
    %v4813 = vlaneseq
    %v4814 = vshrl.u32 %v4813, 7
    %v4815 = vsub.s32 0, %v4814
    %v4816 = vrot.slane %v4786, %v4815
    %v4817 = vlaneseq
    %v4818 = vshrl.u32 %v4817, 7
    %v4819 = vsub.s32 0, %v4818
    %v4820 = vrot.slane %v4790, %v4819
    %v4821 = vlaneseq
    %v4822 = vshrl.u32 %v4821, 7
    %v4823 = vsub.s32 0, %v4822
    %v4824 = vrot.slane %v4794, %v4823
    %v4825 = vlaneseq
    %v4826 = vshrl.u32 %v4825, 7
    %v4827 = vsub.s32 0, %v4826
    %v4828 = vrot.slane %v4798, %v4827
    %v4829 = vlaneseq
    %v4830 = vshrl.u32 %v4829, 7
    %v4831 = vsub.s32 0, %v4830
    %v4832 = vrot.slane %v4802, %v4831
    %v4833 = vlaneseq
    %v4834 = vshrl.u32 %v4833, 7
    %v4835 = vsub.s32 0, %v4834
    %v4836 = vrot.slane %v4806, %v4835
    %4837 = vmatprep.subr.bf16.mxu0 %v4394
    %4838 = vmatpush1.bf16.msra.mxu0 %v4393
    %4839 = vmatprep.subr.bf16.mxu0 %v4400
    %4840 = vmatpush1.bf16.msra.mxu0 %v4399
    %4841 = vmatprep.subr.bf16.mxu0 %v4406
    %4842 = vmatpush1.bf16.msra.mxu0 %v4405
    %4843 = vmatprep.subr.bf16.mxu0 %v4412
    %4844 = vmatpush1.bf16.msra.mxu0 %v4411
    %4845 = vmatprep.subr.bf16.mxu0 %v4418
    %4846 = vmatpush1.bf16.msra.mxu0 %v4417
    %4847 = vmatprep.subr.bf16.mxu0 %v4424
    %4848 = vmatpush1.bf16.msra.mxu0 %v4423
    %4849 = vmatprep.subr.bf16.mxu0 %v4430
    %4850 = vmatpush1.bf16.msra.mxu0 %v4429
    %4851 = vmatprep.subr.bf16.mxu0 %v4436
    %4852 = vmatpush1.bf16.msra.mxu0 %v4435
    %4853 = vmatprep.subr.bf16.mxu0 %v4442
    %4854 = vmatpush1.bf16.msra.mxu0 %v4441
    %4855 = vmatprep.subr.bf16.mxu0 %v4448
    %4856 = vmatpush1.bf16.msra.mxu0 %v4447
    %4857 = vmatprep.subr.bf16.mxu0 %v4454
    %4858 = vmatpush1.bf16.msra.mxu0 %v4453
    %4859 = vmatprep.subr.bf16.mxu0 %v4460
    %4860 = vmatpush1.bf16.msra.mxu0 %v4459
    %4861 = vmatprep.subr.bf16.mxu0 %v4466
    %4862 = vmatpush1.bf16.msra.mxu0 %v4465
    %4863 = vmatprep.subr.bf16.mxu0 %v4472
    %4864 = vmatpush1.bf16.msra.mxu0 %v4471
    %4865 = vmatprep.subr.bf16.mxu0 %v4478
    %4866 = vmatpush1.bf16.msra.mxu0 %v4477
    %4867 = vmatprep.subr.bf16.mxu0 %v4484
    %4868 = vmatpush1.bf16.msra.mxu0 %v4483
    %4869 = vmatprep.mubr.bf16.mxu0 %v4382
    %4870 = vmatmul.mubr.bf16.gmra.mrb[0].mxu0 %v4381
    %v4871 = vpop.f32.mrb[0].mxu0
    %v4872 = vadd.f32 %v4816, %v4871
    %v4873 = vpop.f32.mrb[0].mxu0
    %v4874 = vadd.f32 %v4820, %v4873
    %v4875 = vpop.f32.mrb[0].mxu0
    %v4876 = vadd.f32 %v4816, %v4875
    %v4877 = vpop.f32.mrb[0].mxu0
    %v4878 = vadd.f32 %v4820, %v4877
    %4879 = vdwg.mxu0
    %4880 = vmatprep.subr.bf16.mxu0 %v4490
    %4881 = vmatpush1.bf16.msra.mxu0 %v4489
    %4882 = vmatprep.subr.bf16.mxu0 %v4496
    %4883 = vmatpush1.bf16.msra.mxu0 %v4495
    %4884 = vmatprep.subr.bf16.mxu0 %v4502
    %4885 = vmatpush1.bf16.msra.mxu0 %v4501
    %4886 = vmatprep.subr.bf16.mxu0 %v4508
    %4887 = vmatpush1.bf16.msra.mxu0 %v4507
    %4888 = vmatprep.subr.bf16.mxu0 %v4514
    %4889 = vmatpush1.bf16.msra.mxu0 %v4513
    %4890 = vmatprep.subr.bf16.mxu0 %v4520
    %4891 = vmatpush1.bf16.msra.mxu0 %v4519
    %4892 = vmatprep.subr.bf16.mxu0 %v4526
    %4893 = vmatpush1.bf16.msra.mxu0 %v4525
    %4894 = vmatprep.subr.bf16.mxu0 %v4532
    %4895 = vmatpush1.bf16.msra.mxu0 %v4531
    %4896 = vmatprep.subr.bf16.mxu0 %v4538
    %4897 = vmatpush1.bf16.msra.mxu0 %v4537
    %4898 = vmatprep.subr.bf16.mxu0 %v4544
    %4899 = vmatpush1.bf16.msra.mxu0 %v4543
    %4900 = vmatprep.subr.bf16.mxu0 %v4550
    %4901 = vmatpush1.bf16.msra.mxu0 %v4549
    %4902 = vmatprep.subr.bf16.mxu0 %v4556
    %4903 = vmatpush1.bf16.msra.mxu0 %v4555
    %4904 = vmatprep.subr.bf16.mxu0 %v4562
    %4905 = vmatpush1.bf16.msra.mxu0 %v4561
    %4906 = vmatprep.subr.bf16.mxu0 %v4568
    %4907 = vmatpush1.bf16.msra.mxu0 %v4567
    %4908 = vmatprep.subr.bf16.mxu0 %v4574
    %4909 = vmatpush1.bf16.msra.mxu0 %v4573
    %4910 = vmatprep.subr.bf16.mxu0 %v4580
    %4911 = vmatpush1.bf16.msra.mxu0 %v4579
    %4912 = vmatprep.mubr.bf16.mxu0 %v4384
    %4913 = vmatmul.mubr.bf16.gmra.mrb[0].mxu0 %v4383
    %v4914 = vpop.f32.mrb[0].mxu0
    %v4915 = vadd.f32 %v4872, %v4914
    %v4916 = vpop.f32.mrb[0].mxu0
    %v4917 = vadd.f32 %v4874, %v4916
    %v4918 = vpop.f32.mrb[0].mxu0
    %v4919 = vadd.f32 %v4876, %v4918
    %v4920 = vpop.f32.mrb[0].mxu0
    %v4921 = vadd.f32 %v4878, %v4920
    %4922 = vdwg.mxu0
    %4923 = vmatprep.subr.bf16.mxu0 %v4586
    %4924 = vmatpush1.bf16.msra.mxu0 %v4585
    %4925 = vmatprep.subr.bf16.mxu0 %v4592
    %4926 = vmatpush1.bf16.msra.mxu0 %v4591
    %4927 = vmatprep.subr.bf16.mxu0 %v4598
    %4928 = vmatpush1.bf16.msra.mxu0 %v4597
    %4929 = vmatprep.subr.bf16.mxu0 %v4604
    %4930 = vmatpush1.bf16.msra.mxu0 %v4603
    %4931 = vmatprep.subr.bf16.mxu0 %v4610
    %4932 = vmatpush1.bf16.msra.mxu0 %v4609
    %4933 = vmatprep.subr.bf16.mxu0 %v4616
    %4934 = vmatpush1.bf16.msra.mxu0 %v4615
    %4935 = vmatprep.subr.bf16.mxu0 %v4622
    %4936 = vmatpush1.bf16.msra.mxu0 %v4621
    %4937 = vmatprep.subr.bf16.mxu0 %v4628
    %4938 = vmatpush1.bf16.msra.mxu0 %v4627
    %4939 = vmatprep.subr.bf16.mxu0 %v4634
    %4940 = vmatpush1.bf16.msra.mxu0 %v4633
    %4941 = vmatprep.subr.bf16.mxu0 %v4640
    %4942 = vmatpush1.bf16.msra.mxu0 %v4639
    %4943 = vmatprep.subr.bf16.mxu0 %v4646
    %4944 = vmatpush1.bf16.msra.mxu0 %v4645
    %4945 = vmatprep.subr.bf16.mxu0 %v4652
    %4946 = vmatpush1.bf16.msra.mxu0 %v4651
    %4947 = vmatprep.subr.bf16.mxu0 %v4658
    %4948 = vmatpush1.bf16.msra.mxu0 %v4657
    %4949 = vmatprep.subr.bf16.mxu0 %v4664
    %4950 = vmatpush1.bf16.msra.mxu0 %v4663
    %4951 = vmatprep.subr.bf16.mxu0 %v4670
    %4952 = vmatpush1.bf16.msra.mxu0 %v4669
    %4953 = vmatprep.subr.bf16.mxu0 %v4676
    %4954 = vmatpush1.bf16.msra.mxu0 %v4675
    %4955 = vmatprep.mubr.bf16.mxu0 %v4386
    %4956 = vmatmul.mubr.bf16.gmra.mrb[0].mxu0 %v4385
    %v4957 = vpop.f32.mrb[0].mxu0
    %v4958 = vadd.f32 %v4915, %v4957
    %v4959 = vpop.f32.mrb[0].mxu0
    %v4960 = vadd.f32 %v4917, %v4959
    %v4961 = vpop.f32.mrb[0].mxu0
    %v4962 = vadd.f32 %v4919, %v4961
    %v4963 = vpop.f32.mrb[0].mxu0
    %v4964 = vadd.f32 %v4921, %v4963
    %4965 = vdwg.mxu0
    %4966 = vmatprep.subr.bf16.mxu0 %v4682
    %4967 = vmatpush1.bf16.msra.mxu0 %v4681
    %4968 = vmatprep.subr.bf16.mxu0 %v4688
    %4969 = vmatpush1.bf16.msra.mxu0 %v4687
    %4970 = vmatprep.subr.bf16.mxu0 %v4694
    %4971 = vmatpush1.bf16.msra.mxu0 %v4693
    %4972 = vmatprep.subr.bf16.mxu0 %v4700
    %4973 = vmatpush1.bf16.msra.mxu0 %v4699
    %4974 = vmatprep.subr.bf16.mxu0 %v4706
    %4975 = vmatpush1.bf16.msra.mxu0 %v4705
    %4976 = vmatprep.subr.bf16.mxu0 %v4712
    %4977 = vmatpush1.bf16.msra.mxu0 %v4711
    %4978 = vmatprep.subr.bf16.mxu0 %v4718
    %4979 = vmatpush1.bf16.msra.mxu0 %v4717
    %4980 = vmatprep.subr.bf16.mxu0 %v4724
    %4981 = vmatpush1.bf16.msra.mxu0 %v4723
    %4982 = vmatprep.subr.bf16.mxu0 %v4730
    %4983 = vmatpush1.bf16.msra.mxu0 %v4729
    %4984 = vmatprep.subr.bf16.mxu0 %v4736
    %4985 = vmatpush1.bf16.msra.mxu0 %v4735
    %4986 = vmatprep.subr.bf16.mxu0 %v4742
    %4987 = vmatpush1.bf16.msra.mxu0 %v4741
    %4988 = vmatprep.subr.bf16.mxu0 %v4748
    %4989 = vmatpush1.bf16.msra.mxu0 %v4747
    %4990 = vmatprep.subr.bf16.mxu0 %v4754
    %4991 = vmatpush1.bf16.msra.mxu0 %v4753
    %4992 = vmatprep.subr.bf16.mxu0 %v4760
    %4993 = vmatpush1.bf16.msra.mxu0 %v4759
    %4994 = vmatprep.subr.bf16.mxu0 %v4766
    %4995 = vmatpush1.bf16.msra.mxu0 %v4765
    %4996 = vmatprep.subr.bf16.mxu0 %v4772
    %4997 = vmatpush1.bf16.msra.mxu0 %v4771
    %4998 = vmatprep.mubr.bf16.mxu0 %v4388
    %4999 = vmatmul.mubr.bf16.gmra.mrb[0].mxu0 %v4387
    %v5000 = vpop.f32.mrb[0].mxu0
    %v5001 = vadd.f32 %v4958, %v5000
    %v5002 = vpop.f32.mrb[0].mxu0
    %v5003 = vadd.f32 %v4960, %v5002
    %v5004 = vpop.f32.mrb[0].mxu0
    %v5005 = vadd.f32 %v4962, %v5004
    %v5006 = vpop.f32.mrb[0].mxu0
    %v5007 = vadd.f32 %v4964, %v5006
    %5008 = vdwg.mxu0
    %5009 = vmatprep.subr.bf16.mxu0 %v4396
    %5010 = vmatpush1.bf16.msra.mxu0 %v4395
    %5011 = vmatprep.subr.bf16.mxu0 %v4402
    %5012 = vmatpush1.bf16.msra.mxu0 %v4401
    %5013 = vmatprep.subr.bf16.mxu0 %v4408
    %5014 = vmatpush1.bf16.msra.mxu0 %v4407
    %5015 = vmatprep.subr.bf16.mxu0 %v4414
    %5016 = vmatpush1.bf16.msra.mxu0 %v4413
    %5017 = vmatprep.subr.bf16.mxu0 %v4420
    %5018 = vmatpush1.bf16.msra.mxu0 %v4419
    %5019 = vmatprep.subr.bf16.mxu0 %v4426
    %5020 = vmatpush1.bf16.msra.mxu0 %v4425
    %5021 = vmatprep.subr.bf16.mxu0 %v4432
    %5022 = vmatpush1.bf16.msra.mxu0 %v4431
    %5023 = vmatprep.subr.bf16.mxu0 %v4438
    %5024 = vmatpush1.bf16.msra.mxu0 %v4437
    %5025 = vmatprep.subr.bf16.mxu0 %v4444
    %5026 = vmatpush1.bf16.msra.mxu0 %v4443
    %5027 = vmatprep.subr.bf16.mxu0 %v4450
    %5028 = vmatpush1.bf16.msra.mxu0 %v4449
    %5029 = vmatprep.subr.bf16.mxu0 %v4456
    %5030 = vmatpush1.bf16.msra.mxu0 %v4455
    %5031 = vmatprep.subr.bf16.mxu0 %v4462
    %5032 = vmatpush1.bf16.msra.mxu0 %v4461
    %5033 = vmatprep.subr.bf16.mxu0 %v4468
    %5034 = vmatpush1.bf16.msra.mxu0 %v4467
    %5035 = vmatprep.subr.bf16.mxu0 %v4474
    %5036 = vmatpush1.bf16.msra.mxu0 %v4473
    %5037 = vmatprep.subr.bf16.mxu0 %v4480
    %5038 = vmatpush1.bf16.msra.mxu0 %v4479
    %5039 = vmatprep.subr.bf16.mxu0 %v4486
    %5040 = vmatpush1.bf16.msra.mxu0 %v4485
    %5041 = vmatprep.mubr.bf16.mxu0 %v4382
    %5042 = vmatmul.mubr.bf16.gmra.mrb[0].mxu0 %v4381
    %v5043 = vpop.f32.mrb[0].mxu0
    %v5044 = vadd.f32 %v4824, %v5043
    %v5045 = vpop.f32.mrb[0].mxu0
    %v5046 = vadd.f32 %v4828, %v5045
    %v5047 = vpop.f32.mrb[0].mxu0
    %v5048 = vadd.f32 %v4824, %v5047
    %v5049 = vpop.f32.mrb[0].mxu0
    %v5050 = vadd.f32 %v4828, %v5049
    %5051 = vdwg.mxu0
    %5052 = vmatprep.subr.bf16.mxu0 %v4492
    %5053 = vmatpush1.bf16.msra.mxu0 %v4491
    %5054 = vmatprep.subr.bf16.mxu0 %v4498
    %5055 = vmatpush1.bf16.msra.mxu0 %v4497
    %5056 = vmatprep.subr.bf16.mxu0 %v4504
    %5057 = vmatpush1.bf16.msra.mxu0 %v4503
    %5058 = vmatprep.subr.bf16.mxu0 %v4510
    %5059 = vmatpush1.bf16.msra.mxu0 %v4509
    %5060 = vmatprep.subr.bf16.mxu0 %v4516
    %5061 = vmatpush1.bf16.msra.mxu0 %v4515
    %5062 = vmatprep.subr.bf16.mxu0 %v4522
    %5063 = vmatpush1.bf16.msra.mxu0 %v4521
    %5064 = vmatprep.subr.bf16.mxu0 %v4528
    %5065 = vmatpush1.bf16.msra.mxu0 %v4527
    %5066 = vmatprep.subr.bf16.mxu0 %v4534
    %5067 = vmatpush1.bf16.msra.mxu0 %v4533
    %5068 = vmatprep.subr.bf16.mxu0 %v4540
    %5069 = vmatpush1.bf16.msra.mxu0 %v4539
    %5070 = vmatprep.subr.bf16.mxu0 %v4546
    %5071 = vmatpush1.bf16.msra.mxu0 %v4545
    %5072 = vmatprep.subr.bf16.mxu0 %v4552
    %5073 = vmatpush1.bf16.msra.mxu0 %v4551
    %5074 = vmatprep.subr.bf16.mxu0 %v4558
    %5075 = vmatpush1.bf16.msra.mxu0 %v4557
    %5076 = vmatprep.subr.bf16.mxu0 %v4564
    %5077 = vmatpush1.bf16.msra.mxu0 %v4563
    %5078 = vmatprep.subr.bf16.mxu0 %v4570
    %5079 = vmatpush1.bf16.msra.mxu0 %v4569
    %5080 = vmatprep.subr.bf16.mxu0 %v4576
    %5081 = vmatpush1.bf16.msra.mxu0 %v4575
    %5082 = vmatprep.subr.bf16.mxu0 %v4582
    %5083 = vmatpush1.bf16.msra.mxu0 %v4581
    %5084 = vmatprep.mubr.bf16.mxu0 %v4384
    %5085 = vmatmul.mubr.bf16.gmra.mrb[0].mxu0 %v4383
    %v5086 = vpop.f32.mrb[0].mxu0
    %v5087 = vadd.f32 %v5044, %v5086
    %v5088 = vpop.f32.mrb[0].mxu0
    %v5089 = vadd.f32 %v5046, %v5088
    %v5090 = vpop.f32.mrb[0].mxu0
    %v5091 = vadd.f32 %v5048, %v5090
    %v5092 = vpop.f32.mrb[0].mxu0
    %v5093 = vadd.f32 %v5050, %v5092
    %5094 = vdwg.mxu0
    %5095 = vmatprep.subr.bf16.mxu0 %v4588
    %5096 = vmatpush1.bf16.msra.mxu0 %v4587
    %5097 = vmatprep.subr.bf16.mxu0 %v4594
    %5098 = vmatpush1.bf16.msra.mxu0 %v4593
    %5099 = vmatprep.subr.bf16.mxu0 %v4600
    %5100 = vmatpush1.bf16.msra.mxu0 %v4599
    %5101 = vmatprep.subr.bf16.mxu0 %v4606
    %5102 = vmatpush1.bf16.msra.mxu0 %v4605
    %5103 = vmatprep.subr.bf16.mxu0 %v4612
    %5104 = vmatpush1.bf16.msra.mxu0 %v4611
    %5105 = vmatprep.subr.bf16.mxu0 %v4618
    %5106 = vmatpush1.bf16.msra.mxu0 %v4617
    %5107 = vmatprep.subr.bf16.mxu0 %v4624
    %5108 = vmatpush1.bf16.msra.mxu0 %v4623
    %5109 = vmatprep.subr.bf16.mxu0 %v4630
    %5110 = vmatpush1.bf16.msra.mxu0 %v4629
    %5111 = vmatprep.subr.bf16.mxu0 %v4636
    %5112 = vmatpush1.bf16.msra.mxu0 %v4635
    %5113 = vmatprep.subr.bf16.mxu0 %v4642
    %5114 = vmatpush1.bf16.msra.mxu0 %v4641
    %5115 = vmatprep.subr.bf16.mxu0 %v4648
    %5116 = vmatpush1.bf16.msra.mxu0 %v4647
    %5117 = vmatprep.subr.bf16.mxu0 %v4654
    %5118 = vmatpush1.bf16.msra.mxu0 %v4653
    %5119 = vmatprep.subr.bf16.mxu0 %v4660
    %5120 = vmatpush1.bf16.msra.mxu0 %v4659
    %5121 = vmatprep.subr.bf16.mxu0 %v4666
    %5122 = vmatpush1.bf16.msra.mxu0 %v4665
    %5123 = vmatprep.subr.bf16.mxu0 %v4672
    %5124 = vmatpush1.bf16.msra.mxu0 %v4671
    %5125 = vmatprep.subr.bf16.mxu0 %v4678
    %5126 = vmatpush1.bf16.msra.mxu0 %v4677
    %5127 = vmatprep.mubr.bf16.mxu0 %v4386
    %5128 = vmatmul.mubr.bf16.gmra.mrb[0].mxu0 %v4385
    %v5129 = vpop.f32.mrb[0].mxu0
    %v5130 = vadd.f32 %v5087, %v5129
    %v5131 = vpop.f32.mrb[0].mxu0
    %v5132 = vadd.f32 %v5089, %v5131
    %v5133 = vpop.f32.mrb[0].mxu0
    %v5134 = vadd.f32 %v5091, %v5133
    %v5135 = vpop.f32.mrb[0].mxu0
    %v5136 = vadd.f32 %v5093, %v5135
    %5137 = vdwg.mxu0
    %5138 = vmatprep.subr.bf16.mxu0 %v4684
    %5139 = vmatpush1.bf16.msra.mxu0 %v4683
    %5140 = vmatprep.subr.bf16.mxu0 %v4690
    %5141 = vmatpush1.bf16.msra.mxu0 %v4689
    %5142 = vmatprep.subr.bf16.mxu0 %v4696
    %5143 = vmatpush1.bf16.msra.mxu0 %v4695
    %5144 = vmatprep.subr.bf16.mxu0 %v4702
    %5145 = vmatpush1.bf16.msra.mxu0 %v4701
    %5146 = vmatprep.subr.bf16.mxu0 %v4708
    %5147 = vmatpush1.bf16.msra.mxu0 %v4707
    %5148 = vmatprep.subr.bf16.mxu0 %v4714
    %5149 = vmatpush1.bf16.msra.mxu0 %v4713
    %5150 = vmatprep.subr.bf16.mxu0 %v4720
    %5151 = vmatpush1.bf16.msra.mxu0 %v4719
    %5152 = vmatprep.subr.bf16.mxu0 %v4726
    %5153 = vmatpush1.bf16.msra.mxu0 %v4725
    %5154 = vmatprep.subr.bf16.mxu0 %v4732
    %5155 = vmatpush1.bf16.msra.mxu0 %v4731
    %5156 = vmatprep.subr.bf16.mxu0 %v4738
    %5157 = vmatpush1.bf16.msra.mxu0 %v4737
    %5158 = vmatprep.subr.bf16.mxu0 %v4744
    %5159 = vmatpush1.bf16.msra.mxu0 %v4743
    %5160 = vmatprep.subr.bf16.mxu0 %v4750
    %5161 = vmatpush1.bf16.msra.mxu0 %v4749
    %5162 = vmatprep.subr.bf16.mxu0 %v4756
    %5163 = vmatpush1.bf16.msra.mxu0 %v4755
    %5164 = vmatprep.subr.bf16.mxu0 %v4762
    %5165 = vmatpush1.bf16.msra.mxu0 %v4761
    %5166 = vmatprep.subr.bf16.mxu0 %v4768
    %5167 = vmatpush1.bf16.msra.mxu0 %v4767
    %5168 = vmatprep.subr.bf16.mxu0 %v4774
    %5169 = vmatpush1.bf16.msra.mxu0 %v4773
    %5170 = vmatprep.mubr.bf16.mxu0 %v4388
    %5171 = vmatmul.mubr.bf16.gmra.mrb[0].mxu0 %v4387
    %v5172 = vpop.f32.mrb[0].mxu0
    %v5173 = vadd.f32 %v5130, %v5172
    %v5174 = vpop.f32.mrb[0].mxu0
    %v5175 = vadd.f32 %v5132, %v5174
    %v5176 = vpop.f32.mrb[0].mxu0
    %v5177 = vadd.f32 %v5134, %v5176
    %v5178 = vpop.f32.mrb[0].mxu0
    %v5179 = vadd.f32 %v5136, %v5178
    %5180 = vdwg.mxu0
    %5181 = vmatprep.subr.bf16.mxu0 %v4398
    %5182 = vmatpush1.bf16.msra.mxu0 %v4397
    %5183 = vmatprep.subr.bf16.mxu0 %v4404
    %5184 = vmatpush1.bf16.msra.mxu0 %v4403
    %5185 = vmatprep.subr.bf16.mxu0 %v4410
    %5186 = vmatpush1.bf16.msra.mxu0 %v4409
    %5187 = vmatprep.subr.bf16.mxu0 %v4416
    %5188 = vmatpush1.bf16.msra.mxu0 %v4415
    %5189 = vmatprep.subr.bf16.mxu0 %v4422
    %5190 = vmatpush1.bf16.msra.mxu0 %v4421
    %5191 = vmatprep.subr.bf16.mxu0 %v4428
    %5192 = vmatpush1.bf16.msra.mxu0 %v4427
    %5193 = vmatprep.subr.bf16.mxu0 %v4434
    %5194 = vmatpush1.bf16.msra.mxu0 %v4433
    %5195 = vmatprep.subr.bf16.mxu0 %v4440
    %5196 = vmatpush1.bf16.msra.mxu0 %v4439
    %5197 = vmatprep.subr.bf16.mxu0 %v4446
    %5198 = vmatpush1.bf16.msra.mxu0 %v4445
    %5199 = vmatprep.subr.bf16.mxu0 %v4452
    %5200 = vmatpush1.bf16.msra.mxu0 %v4451
    %5201 = vmatprep.subr.bf16.mxu0 %v4458
    %5202 = vmatpush1.bf16.msra.mxu0 %v4457
    %5203 = vmatprep.subr.bf16.mxu0 %v4464
    %5204 = vmatpush1.bf16.msra.mxu0 %v4463
    %5205 = vmatprep.subr.bf16.mxu0 %v4470
    %5206 = vmatpush1.bf16.msra.mxu0 %v4469
    %5207 = vmatprep.subr.bf16.mxu0 %v4476
    %5208 = vmatpush1.bf16.msra.mxu0 %v4475
    %5209 = vmatprep.subr.bf16.mxu0 %v4482
    %5210 = vmatpush1.bf16.msra.mxu0 %v4481
    %5211 = vmatprep.subr.bf16.mxu0 %v4488
    %5212 = vmatpush1.bf16.msra.mxu0 %v4487
    %5213 = vmatprep.mubr.bf16.mxu0 %v4382
    %5214 = vmatmul.mubr.bf16.gmra.mrb[0].mxu0 %v4381
    %v5215 = vpop.f32.mrb[0].mxu0
    %v5216 = vadd.f32 %v4832, %v5215
    %v5217 = vpop.f32.mrb[0].mxu0
    %v5218 = vadd.f32 %v4836, %v5217
    %v5219 = vpop.f32.mrb[0].mxu0
    %v5220 = vadd.f32 %v4832, %v5219
    %v5221 = vpop.f32.mrb[0].mxu0
    %v5222 = vadd.f32 %v4836, %v5221
    %5223 = vdwg.mxu0
    %5224 = vmatprep.subr.bf16.mxu0 %v4494
    %5225 = vmatpush1.bf16.msra.mxu0 %v4493
    %5226 = vmatprep.subr.bf16.mxu0 %v4500
    %5227 = vmatpush1.bf16.msra.mxu0 %v4499
    %5228 = vmatprep.subr.bf16.mxu0 %v4506
    %5229 = vmatpush1.bf16.msra.mxu0 %v4505
    %5230 = vmatprep.subr.bf16.mxu0 %v4512
    %5231 = vmatpush1.bf16.msra.mxu0 %v4511
    %5232 = vmatprep.subr.bf16.mxu0 %v4518
    %5233 = vmatpush1.bf16.msra.mxu0 %v4517
    %5234 = vmatprep.subr.bf16.mxu0 %v4524
    %5235 = vmatpush1.bf16.msra.mxu0 %v4523
    %5236 = vmatprep.subr.bf16.mxu0 %v4530
    %5237 = vmatpush1.bf16.msra.mxu0 %v4529
    %5238 = vmatprep.subr.bf16.mxu0 %v4536
    %5239 = vmatpush1.bf16.msra.mxu0 %v4535
    %5240 = vmatprep.subr.bf16.mxu0 %v4542
    %5241 = vmatpush1.bf16.msra.mxu0 %v4541
    %5242 = vmatprep.subr.bf16.mxu0 %v4548
    %5243 = vmatpush1.bf16.msra.mxu0 %v4547
    %5244 = vmatprep.subr.bf16.mxu0 %v4554
    %5245 = vmatpush1.bf16.msra.mxu0 %v4553
    %5246 = vmatprep.subr.bf16.mxu0 %v4560
    %5247 = vmatpush1.bf16.msra.mxu0 %v4559
    %5248 = vmatprep.subr.bf16.mxu0 %v4566
    %5249 = vmatpush1.bf16.msra.mxu0 %v4565
    %5250 = vmatprep.subr.bf16.mxu0 %v4572
    %5251 = vmatpush1.bf16.msra.mxu0 %v4571
    %5252 = vmatprep.subr.bf16.mxu0 %v4578
    %5253 = vmatpush1.bf16.msra.mxu0 %v4577
    %5254 = vmatprep.subr.bf16.mxu0 %v4584
    %5255 = vmatpush1.bf16.msra.mxu0 %v4583
    %5256 = vmatprep.mubr.bf16.mxu0 %v4384
    %5257 = vmatmul.mubr.bf16.gmra.mrb[0].mxu0 %v4383
    %v5258 = vpop.f32.mrb[0].mxu0
    %v5259 = vadd.f32 %v5216, %v5258
    %v5260 = vpop.f32.mrb[0].mxu0
    %v5261 = vadd.f32 %v5218, %v5260
    %v5262 = vpop.f32.mrb[0].mxu0
    %v5263 = vadd.f32 %v5220, %v5262
    %v5264 = vpop.f32.mrb[0].mxu0
    %v5265 = vadd.f32 %v5222, %v5264
    %5266 = vdwg.mxu0
    %5267 = vmatprep.subr.bf16.mxu0 %v4590
    %5268 = vmatpush1.bf16.msra.mxu0 %v4589
    %5269 = vmatprep.subr.bf16.mxu0 %v4596
    %5270 = vmatpush1.bf16.msra.mxu0 %v4595
    %5271 = vmatprep.subr.bf16.mxu0 %v4602
    %5272 = vmatpush1.bf16.msra.mxu0 %v4601
    %5273 = vmatprep.subr.bf16.mxu0 %v4608
    %5274 = vmatpush1.bf16.msra.mxu0 %v4607
    %5275 = vmatprep.subr.bf16.mxu0 %v4614
    %5276 = vmatpush1.bf16.msra.mxu0 %v4613
    %5277 = vmatprep.subr.bf16.mxu0 %v4620
    %5278 = vmatpush1.bf16.msra.mxu0 %v4619
    %5279 = vmatprep.subr.bf16.mxu0 %v4626
    %5280 = vmatpush1.bf16.msra.mxu0 %v4625
    %5281 = vmatprep.subr.bf16.mxu0 %v4632
    %5282 = vmatpush1.bf16.msra.mxu0 %v4631
    %5283 = vmatprep.subr.bf16.mxu0 %v4638
    %5284 = vmatpush1.bf16.msra.mxu0 %v4637
    %5285 = vmatprep.subr.bf16.mxu0 %v4644
    %5286 = vmatpush1.bf16.msra.mxu0 %v4643
    %5287 = vmatprep.subr.bf16.mxu0 %v4650
    %5288 = vmatpush1.bf16.msra.mxu0 %v4649
    %5289 = vmatprep.subr.bf16.mxu0 %v4656
    %5290 = vmatpush1.bf16.msra.mxu0 %v4655
    %5291 = vmatprep.subr.bf16.mxu0 %v4662
    %5292 = vmatpush1.bf16.msra.mxu0 %v4661
    %5293 = vmatprep.subr.bf16.mxu0 %v4668
    %5294 = vmatpush1.bf16.msra.mxu0 %v4667
    %5295 = vmatprep.subr.bf16.mxu0 %v4674
    %5296 = vmatpush1.bf16.msra.mxu0 %v4673
    %5297 = vmatprep.subr.bf16.mxu0 %v4680
    %5298 = vmatpush1.bf16.msra.mxu0 %v4679
    %5299 = vmatprep.mubr.bf16.mxu0 %v4386
    %5300 = vmatmul.mubr.bf16.gmra.mrb[0].mxu0 %v4385
    %v5301 = vpop.f32.mrb[0].mxu0
    %v5302 = vadd.f32 %v5259, %v5301
    %v5303 = vpop.f32.mrb[0].mxu0
    %v5304 = vadd.f32 %v5261, %v5303
    %v5305 = vpop.f32.mrb[0].mxu0
    %v5306 = vadd.f32 %v5263, %v5305
    %v5307 = vpop.f32.mrb[0].mxu0
    %v5308 = vadd.f32 %v5265, %v5307
    %5309 = vdwg.mxu0
    %5310 = vmatprep.subr.bf16.mxu0 %v4686
    %5311 = vmatpush1.bf16.msra.mxu0 %v4685
    %5312 = vmatprep.subr.bf16.mxu0 %v4692
    %5313 = vmatpush1.bf16.msra.mxu0 %v4691
    %5314 = vmatprep.subr.bf16.mxu0 %v4698
    %5315 = vmatpush1.bf16.msra.mxu0 %v4697
    %5316 = vmatprep.subr.bf16.mxu0 %v4704
    %5317 = vmatpush1.bf16.msra.mxu0 %v4703
    %5318 = vmatprep.subr.bf16.mxu0 %v4710
    %5319 = vmatpush1.bf16.msra.mxu0 %v4709
    %5320 = vmatprep.subr.bf16.mxu0 %v4716
    %5321 = vmatpush1.bf16.msra.mxu0 %v4715
    %5322 = vmatprep.subr.bf16.mxu0 %v4722
    %5323 = vmatpush1.bf16.msra.mxu0 %v4721
    %5324 = vmatprep.subr.bf16.mxu0 %v4728
    %5325 = vmatpush1.bf16.msra.mxu0 %v4727
    %5326 = vmatprep.subr.bf16.mxu0 %v4734
    %5327 = vmatpush1.bf16.msra.mxu0 %v4733
    %5328 = vmatprep.subr.bf16.mxu0 %v4740
    %5329 = vmatpush1.bf16.msra.mxu0 %v4739
    %5330 = vmatprep.subr.bf16.mxu0 %v4746
    %5331 = vmatpush1.bf16.msra.mxu0 %v4745
    %5332 = vmatprep.subr.bf16.mxu0 %v4752
    %5333 = vmatpush1.bf16.msra.mxu0 %v4751
    %5334 = vmatprep.subr.bf16.mxu0 %v4758
    %5335 = vmatpush1.bf16.msra.mxu0 %v4757
    %5336 = vmatprep.subr.bf16.mxu0 %v4764
    %5337 = vmatpush1.bf16.msra.mxu0 %v4763
    %5338 = vmatprep.subr.bf16.mxu0 %v4770
    %5339 = vmatpush1.bf16.msra.mxu0 %v4769
    %5340 = vmatprep.subr.bf16.mxu0 %v4776
    %5341 = vmatpush1.bf16.msra.mxu0 %v4775
    %5342 = vmatprep.mubr.bf16.mxu0 %v4388
    %5343 = vmatmul.mubr.bf16.gmra.mrb[0].mxu0 %v4387
    %v5344 = vpop.f32.mrb[0].mxu0
    %v5345 = vadd.f32 %v5302, %v5344
    %v5346 = vpop.f32.mrb[0].mxu0
    %v5347 = vadd.f32 %v5304, %v5346
    %v5348 = vpop.f32.mrb[0].mxu0
    %v5349 = vadd.f32 %v5306, %v5348
    %v5350 = vpop.f32.mrb[0].mxu0
    %v5351 = vadd.f32 %v5308, %v5350
    %5352 = vdwg.mxu0
    %v5353 = vadd.f32 %v5001, %v5003
    %v5354 = vadd.f32 %v5353, %v5173
    %v5355 = vadd.f32 %v5354, %v5175
    %v5356 = vadd.f32 %v5355, %v5345
    %v5357 = vadd.f32 %v5356, %v5347
    %5358 = vadd.xlane.f32.xlu0 %v5357
    %v5359 = vpop.xlane.xlu0 %5358
    %v5360 = vadd.f32 %v5005, %v5007
    %v5361 = vadd.f32 %v5360, %v5177
    %v5362 = vadd.f32 %v5361, %v5179
    %v5363 = vadd.f32 %v5362, %v5349
    %v5364 = vadd.f32 %v5363, %v5351
    %5365 = vadd.xlane.f32.xlu0 %v5364
    %v5366 = vpop.xlane.xlu0 %5365
    %v5367 = vrcp.pop 768.0
    %v5368 = vmul.f32 %v5359, %v5367
    %v5369 = vmul.f32 %v5366, %v5367
    %v5370 = vmul.f32 %v5001, %v5001
    %v5371 = vmul.f32 %v5003, %v5003
    %v5372 = vmul.f32 %v5173, %v5173
    %v5373 = vmul.f32 %v5175, %v5175
    %v5374 = vmul.f32 %v5345, %v5345
    %v5375 = vmul.f32 %v5347, %v5347
    %v5376 = vmul.f32 %v5005, %v5005
    %v5377 = vmul.f32 %v5007, %v5007
    %v5378 = vmul.f32 %v5177, %v5177
    %v5379 = vmul.f32 %v5179, %v5179
    %v5380 = vmul.f32 %v5349, %v5349
    %v5381 = vmul.f32 %v5351, %v5351
    %v5382 = vadd.f32 %v5370, %v5371
    %v5383 = vadd.f32 %v5382, %v5372
    %v5384 = vadd.f32 %v5383, %v5373
    %v5385 = vadd.f32 %v5384, %v5374
    %v5386 = vadd.f32 %v5385, %v5375
    %5387 = vadd.xlane.f32.xlu0 %v5386
    %v5388 = vpop.xlane.xlu0 %5387
    %v5389 = vadd.f32 %v5376, %v5377
    %v5390 = vadd.f32 %v5389, %v5378
    %v5391 = vadd.f32 %v5390, %v5379
    %v5392 = vadd.f32 %v5391, %v5380
    %v5393 = vadd.f32 %v5392, %v5381
    %5394 = vadd.xlane.f32.xlu0 %v5393
    %v5395 = vpop.xlane.xlu0 %5394
    %v5396 = vmul.f32 %v5388, %v5367
    %v5397 = vmul.f32 %v5395, %v5367
    %v5398 = vsub.f32 %v5001, %v5368
    %v5399 = vsub.f32 %v5003, %v5368
    %v5400 = vsub.f32 %v5173, %v5368
    %v5401 = vsub.f32 %v5175, %v5368
    %v5402 = vsub.f32 %v5345, %v5368
    %v5403 = vsub.f32 %v5347, %v5368
    %v5404 = vsub.f32 %v5005, %v5369
    %v5405 = vsub.f32 %v5007, %v5369
    %v5406 = vsub.f32 %v5177, %v5369
    %v5407 = vsub.f32 %v5179, %v5369
    %v5408 = vsub.f32 %v5349, %v5369
    %v5409 = vsub.f32 %v5351, %v5369
    %v5410 = vmul.f32 %v5368, %v5368
    %v5411 = vmul.f32 %v5369, %v5369
    %v5412 = vsub.f32 %v5396, %v5410
    %v5413 = vsub.f32 %v5397, %v5411
    %v5414 = vadd.f32 %v5412, 1e-05
    %v5415 = vadd.f32 %v5413, 1e-05
    %v5416 = vrsqrt.pop %v5414
    %v5417 = vrsqrt.pop %v5415
    %v5418 = vmul.f32 %v5398, %v5416
    %v5419 = vmul.f32 %v5399, %v5416
    %v5420 = vmul.f32 %v5400, %v5416
    %v5421 = vmul.f32 %v5401, %v5416
    %v5422 = vmul.f32 %v5402, %v5416
    %v5423 = vmul.f32 %v5403, %v5416
    %v5424 = vmul.f32 %v5404, %v5417
    %v5425 = vmul.f32 %v5405, %v5417
    %v5426 = vmul.f32 %v5406, %v5417
    %v5427 = vmul.f32 %v5407, %v5417
    %v5428 = vmul.f32 %v5408, %v5417
    %v5429 = vmul.f32 %v5409, %v5417
    %v5430 = vlaneseq
    %v5431 = vshrl.u32 %v5430, 7
    %v5432 = vsub.s32 1, %v5431
    %v5433 = vrot.slane %v4777, %v5432
    %v5434 = vlaneseq
    %v5435 = vshrl.u32 %v5434, 7
    %v5436 = vsub.s32 5, %v5435
    %v5437 = vrot.slane %v4777, %v5436
    %v5438 = vlaneseq
    %v5439 = vshrl.u32 %v5438, 7
    %v5440 = vsub.s32 1, %v5439
    %v5441 = vrot.slane %v4778, %v5440
    %v5442 = vlaneseq
    %v5443 = vshrl.u32 %v5442, 7
    %v5444 = vsub.s32 5, %v5443
    %v5445 = vrot.slane %v4778, %v5444
    %v5446 = vlaneseq
    %v5447 = vshrl.u32 %v5446, 7
    %v5448 = vsub.s32 1, %v5447
    %v5449 = vrot.slane %v4779, %v5448
    %v5450 = vlaneseq
    %v5451 = vshrl.u32 %v5450, 7
    %v5452 = vsub.s32 5, %v5451
    %v5453 = vrot.slane %v4779, %v5452
    %v5460 = vlaneseq
    %v5461 = vshrl.u32 %v5460, 7
    %v5462 = vsub.s32 1, %v5461
    %v5463 = vrot.slane %v5433, %v5462
    %v5464 = vlaneseq
    %v5465 = vshrl.u32 %v5464, 7
    %v5466 = vsub.s32 1, %v5465
    %v5467 = vrot.slane %v5437, %v5466
    %v5468 = vlaneseq
    %v5469 = vshrl.u32 %v5468, 7
    %v5470 = vsub.s32 1, %v5469
    %v5471 = vrot.slane %v5441, %v5470
    %v5472 = vlaneseq
    %v5473 = vshrl.u32 %v5472, 7
    %v5474 = vsub.s32 1, %v5473
    %v5475 = vrot.slane %v5445, %v5474
    %v5476 = vlaneseq
    %v5477 = vshrl.u32 %v5476, 7
    %v5478 = vsub.s32 1, %v5477
    %v5479 = vrot.slane %v5449, %v5478
    %v5480 = vlaneseq
    %v5481 = vshrl.u32 %v5480, 7
    %v5482 = vsub.s32 1, %v5481
    %v5483 = vrot.slane %v5453, %v5482
    %v5484 = vmul.f32 %v5418, %v5463
    %v5485 = vmul.f32 %v5419, %v5467
    %v5486 = vmul.f32 %v5420, %v5471
    %v5487 = vmul.f32 %v5421, %v5475
    %v5488 = vmul.f32 %v5422, %v5479
    %v5489 = vmul.f32 %v5423, %v5483
    %v5490 = vmul.f32 %v5424, %v5463
    %v5491 = vmul.f32 %v5425, %v5467
    %v5492 = vmul.f32 %v5426, %v5471
    %v5493 = vmul.f32 %v5427, %v5475
    %v5494 = vmul.f32 %v5428, %v5479
    %v5495 = vmul.f32 %v5429, %v5483
    %v5496 = vlaneseq
    %v5497 = vshrl.u32 %v5496, 7
    %v5498 = vsub.s32 2, %v5497
    %v5499 = vrot.slane %v4777, %v5498
    %v5500 = vlaneseq
    %v5501 = vshrl.u32 %v5500, 7
    %v5502 = vsub.s32 6, %v5501
    %v5503 = vrot.slane %v4777, %v5502
    %v5504 = vlaneseq
    %v5505 = vshrl.u32 %v5504, 7
    %v5506 = vsub.s32 2, %v5505
    %v5507 = vrot.slane %v4778, %v5506
    %v5508 = vlaneseq
    %v5509 = vshrl.u32 %v5508, 7
    %v5510 = vsub.s32 6, %v5509
    %v5511 = vrot.slane %v4778, %v5510
    %v5512 = vlaneseq
    %v5513 = vshrl.u32 %v5512, 7
    %v5514 = vsub.s32 2, %v5513
    %v5515 = vrot.slane %v4779, %v5514
    %v5516 = vlaneseq
    %v5517 = vshrl.u32 %v5516, 7
    %v5518 = vsub.s32 6, %v5517
    %v5519 = vrot.slane %v4779, %v5518
    %v5526 = vlaneseq
    %v5527 = vshrl.u32 %v5526, 7
    %v5528 = vsub.s32 2, %v5527
    %v5529 = vrot.slane %v5499, %v5528
    %v5530 = vlaneseq
    %v5531 = vshrl.u32 %v5530, 7
    %v5532 = vsub.s32 2, %v5531
    %v5533 = vrot.slane %v5503, %v5532
    %v5534 = vlaneseq
    %v5535 = vshrl.u32 %v5534, 7
    %v5536 = vsub.s32 2, %v5535
    %v5537 = vrot.slane %v5507, %v5536
    %v5538 = vlaneseq
    %v5539 = vshrl.u32 %v5538, 7
    %v5540 = vsub.s32 2, %v5539
    %v5541 = vrot.slane %v5511, %v5540
    %v5542 = vlaneseq
    %v5543 = vshrl.u32 %v5542, 7
    %v5544 = vsub.s32 2, %v5543
    %v5545 = vrot.slane %v5515, %v5544
    %v5546 = vlaneseq
    %v5547 = vshrl.u32 %v5546, 7
    %v5548 = vsub.s32 2, %v5547
    %v5549 = vrot.slane %v5519, %v5548
    %v5550 = vadd.f32 %v5484, %v5529
    %v5551 = vadd.f32 %v5485, %v5533
    %v5552 = vadd.f32 %v5486, %v5537
    %v5553 = vadd.f32 %v5487, %v5541
    %v5554 = vadd.f32 %v5488, %v5545
    %v5555 = vadd.f32 %v5489, %v5549
    %v5556 = vadd.f32 %v5490, %v5529
    %v5557 = vadd.f32 %v5491, %v5533
    %v5558 = vadd.f32 %v5492, %v5537
    %v5559 = vadd.f32 %v5493, %v5541
    %v5560 = vadd.f32 %v5494, %v5545
    %v5561 = vadd.f32 %v5495, %v5549
    %v5562 = vpack.c.bf16 %v5556, %v5550
    %v5563 = vpack.c.bf16 %v5557, %v5551
    %v5564 = vpack.c.bf16 %v5558, %v5552
    %v5565 = vpack.c.bf16 %v5559, %v5553
    %v5566 = vpack.c.bf16 %v5560, %v5554
    %v5567 = vpack.c.bf16 %v5561, %v5555
    %v5568 = vxor.u32 %v5562, 2147516416
    %v5569 = vxor.u32 %v5563, 2147516416
    %v5570 = vxor.u32 %v5564, 2147516416
    %v5571 = vxor.u32 %v5565, 2147516416
    %v5572 = vxor.u32 %v5566, 2147516416
    %v5573 = vxor.u32 %v5567, 2147516416
    %v5575 = vmul.bf16 %v5568, 1069105081
    %v5576 = vpow.bf16.pop %v5575
    %v5578 = vmul.bf16 %v5569, 1069105081
    %v5579 = vpow.bf16.pop %v5578
    %v5581 = vmul.bf16 %v5570, 1069105081
    %v5582 = vpow.bf16.pop %v5581
    %v5584 = vmul.bf16 %v5571, 1069105081
    %v5585 = vpow.bf16.pop %v5584
    %v5587 = vmul.bf16 %v5572, 1069105081
    %v5588 = vpow.bf16.pop %v5587
    %v5590 = vmul.bf16 %v5573, 1069105081
    %v5591 = vpow.bf16.pop %v5590
    %v5592 = vadd.bf16 %v5576, 1065369472
    %v5593 = vadd.bf16 %v5579, 1065369472
    %v5594 = vadd.bf16 %v5582, 1065369472
    %v5595 = vadd.bf16 %v5585, 1065369472
    %v5596 = vadd.bf16 %v5588, 1065369472
    %v5597 = vadd.bf16 %v5591, 1065369472
    %v5598 = vrcp.bf16.pop %v5592
    %v5599 = vmul.bf16 1065369472, %v5598
    %v5600 = vrcp.bf16.pop %v5593
    %v5601 = vmul.bf16 1065369472, %v5600
    %v5602 = vrcp.bf16.pop %v5594
    %v5603 = vmul.bf16 1065369472, %v5602
    %v5604 = vrcp.bf16.pop %v5595
    %v5605 = vmul.bf16 1065369472, %v5604
    %v5606 = vrcp.bf16.pop %v5596
    %v5607 = vmul.bf16 1065369472, %v5606
    %v5608 = vrcp.bf16.pop %v5597
    %v5609 = vmul.bf16 1065369472, %v5608
    %v5610 = vmul.bf16 %v5562, %v5599
    %v5611 = vmul.bf16 %v5563, %v5601
    %v5612 = vmul.bf16 %v5564, %v5603
    %v5613 = vmul.bf16 %v5565, %v5605
    %v5614 = vmul.bf16 %v5566, %v5607
    %v5615 = vmul.bf16 %v5567, %v5609
    %s5616 = smul.u32 4, 96
    %s5617 = smul.u32 %s5616, 4
    %s5618 = sshll.u32 %s5617, 4
    %5619 = dma.done %s121, %s5618
    %v5620 = vld [vmem:[#allocation3] sm:$0xff]
    %v5621 = vld [vmem:[#allocation3 + $0x8] sm:$0xff]
    %v5622 = vld [vmem:[#allocation3 + $0x10] sm:$0xff]
    %v5623 = vld [vmem:[#allocation3 + $0x18] sm:$0xff]
    %v5624 = vld [vmem:[#allocation3 + $0x20] sm:$0xff]
    %v5625 = vld [vmem:[#allocation3 + $0x28] sm:$0xff]
    %v5626 = vld [vmem:[#allocation3 + $0x30] sm:$0xff]
    %v5627 = vld [vmem:[#allocation3 + $0x38] sm:$0xff]
    %v5628 = vld [vmem:[#allocation3 + $0x40] sm:$0xff]
    %v5629 = vld [vmem:[#allocation3 + $0x48] sm:$0xff]
    %v5630 = vld [vmem:[#allocation3 + $0x50] sm:$0xff]
    %v5631 = vld [vmem:[#allocation3 + $0x58] sm:$0xff]
    %v5632 = vld [vmem:[#allocation3 + $0x60] sm:$0xff]
    %v5633 = vld [vmem:[#allocation3 + $0x68] sm:$0xff]
    %v5634 = vld [vmem:[#allocation3 + $0x70] sm:$0xff]
    %v5635 = vld [vmem:[#allocation3 + $0x78] sm:$0xff]
    %v5636 = vld [vmem:[#allocation3 + $0x80] sm:$0xff]
    %v5637 = vld [vmem:[#allocation3 + $0x88] sm:$0xff]
    %v5638 = vld [vmem:[#allocation3 + $0x90] sm:$0xff]
    %v5639 = vld [vmem:[#allocation3 + $0x98] sm:$0xff]
    %v5640 = vld [vmem:[#allocation3 + $0xa0] sm:$0xff]
    %v5641 = vld [vmem:[#allocation3 + $0xa8] sm:$0xff]
    %v5642 = vld [vmem:[#allocation3 + $0xb0] sm:$0xff]
    %v5643 = vld [vmem:[#allocation3 + $0xb8] sm:$0xff]
    %v5644 = vld [vmem:[#allocation3 + $0xc0] sm:$0xff]
    %v5645 = vld [vmem:[#allocation3 + $0xc8] sm:$0xff]
    %v5646 = vld [vmem:[#allocation3 + $0xd0] sm:$0xff]
    %v5647 = vld [vmem:[#allocation3 + $0xd8] sm:$0xff]
    %v5648 = vld [vmem:[#allocation3 + $0xe0] sm:$0xff]
    %v5649 = vld [vmem:[#allocation3 + $0xe8] sm:$0xff]
    %v5650 = vld [vmem:[#allocation3 + $0xf0] sm:$0xff]
    %v5651 = vld [vmem:[#allocation3 + $0xf8] sm:$0xff]
    %v5652 = vld [vmem:[#allocation3 + $0x100] sm:$0xff]
    %v5653 = vld [vmem:[#allocation3 + $0x108] sm:$0xff]
    %v5654 = vld [vmem:[#allocation3 + $0x110] sm:$0xff]
    %v5655 = vld [vmem:[#allocation3 + $0x118] sm:$0xff]
    %v5656 = vld [vmem:[#allocation3 + $0x120] sm:$0xff]
    %v5657 = vld [vmem:[#allocation3 + $0x128] sm:$0xff]
    %v5658 = vld [vmem:[#allocation3 + $0x130] sm:$0xff]
    %v5659 = vld [vmem:[#allocation3 + $0x138] sm:$0xff]
    %v5660 = vld [vmem:[#allocation3 + $0x140] sm:$0xff]
    %v5661 = vld [vmem:[#allocation3 + $0x148] sm:$0xff]
    %v5662 = vld [vmem:[#allocation3 + $0x150] sm:$0xff]
    %v5663 = vld [vmem:[#allocation3 + $0x158] sm:$0xff]
    %v5664 = vld [vmem:[#allocation3 + $0x160] sm:$0xff]
    %v5665 = vld [vmem:[#allocation3 + $0x168] sm:$0xff]
    %v5666 = vld [vmem:[#allocation3 + $0x170] sm:$0xff]
    %v5667 = vld [vmem:[#allocation3 + $0x178] sm:$0xff]
    %v5668 = vld [vmem:[#allocation3 + $0x180] sm:$0xff]
    %v5669 = vld [vmem:[#allocation3 + $0x188] sm:$0xff]
    %v5670 = vld [vmem:[#allocation3 + $0x190] sm:$0xff]
    %v5671 = vld [vmem:[#allocation3 + $0x198] sm:$0xff]
    %v5672 = vld [vmem:[#allocation3 + $0x1a0] sm:$0xff]
    %v5673 = vld [vmem:[#allocation3 + $0x1a8] sm:$0xff]
    %v5674 = vld [vmem:[#allocation3 + $0x1b0] sm:$0xff]
    %v5675 = vld [vmem:[#allocation3 + $0x1b8] sm:$0xff]
    %v5676 = vld [vmem:[#allocation3 + $0x1c0] sm:$0xff]
    %v5677 = vld [vmem:[#allocation3 + $0x1c8] sm:$0xff]
    %v5678 = vld [vmem:[#allocation3 + $0x1d0] sm:$0xff]
    %v5679 = vld [vmem:[#allocation3 + $0x1d8] sm:$0xff]
    %v5680 = vld [vmem:[#allocation3 + $0x1e0] sm:$0xff]
    %v5681 = vld [vmem:[#allocation3 + $0x1e8] sm:$0xff]
    %v5682 = vld [vmem:[#allocation3 + $0x1f0] sm:$0xff]
    %v5683 = vld [vmem:[#allocation3 + $0x1f8] sm:$0xff]
    %v5684 = vld [vmem:[#allocation3 + $0x200] sm:$0xff]
    %v5685 = vld [vmem:[#allocation3 + $0x208] sm:$0xff]
    %v5686 = vld [vmem:[#allocation3 + $0x210] sm:$0xff]
    %v5687 = vld [vmem:[#allocation3 + $0x218] sm:$0xff]
    %v5688 = vld [vmem:[#allocation3 + $0x220] sm:$0xff]
    %v5689 = vld [vmem:[#allocation3 + $0x228] sm:$0xff]
    %v5690 = vld [vmem:[#allocation3 + $0x230] sm:$0xff]
    %v5691 = vld [vmem:[#allocation3 + $0x238] sm:$0xff]
    %v5692 = vld [vmem:[#allocation3 + $0x240] sm:$0xff]
    %v5693 = vld [vmem:[#allocation3 + $0x248] sm:$0xff]
    %v5694 = vld [vmem:[#allocation3 + $0x250] sm:$0xff]
    %v5695 = vld [vmem:[#allocation3 + $0x258] sm:$0xff]
    %v5696 = vld [vmem:[#allocation3 + $0x260] sm:$0xff]
    %v5697 = vld [vmem:[#allocation3 + $0x268] sm:$0xff]
    %v5698 = vld [vmem:[#allocation3 + $0x270] sm:$0xff]
    %v5699 = vld [vmem:[#allocation3 + $0x278] sm:$0xff]
    %v5700 = vld [vmem:[#allocation3 + $0x280] sm:$0xff]
    %v5701 = vld [vmem:[#allocation3 + $0x288] sm:$0xff]
    %v5702 = vld [vmem:[#allocation3 + $0x290] sm:$0xff]
    %v5703 = vld [vmem:[#allocation3 + $0x298] sm:$0xff]
    %v5704 = vld [vmem:[#allocation3 + $0x2a0] sm:$0xff]
    %v5705 = vld [vmem:[#allocation3 + $0x2a8] sm:$0xff]
    %v5706 = vld [vmem:[#allocation3 + $0x2b0] sm:$0xff]
    %v5707 = vld [vmem:[#allocation3 + $0x2b8] sm:$0xff]
    %v5708 = vld [vmem:[#allocation3 + $0x2c0] sm:$0xff]
    %v5709 = vld [vmem:[#allocation3 + $0x2c8] sm:$0xff]
    %v5710 = vld [vmem:[#allocation3 + $0x2d0] sm:$0xff]
    %v5711 = vld [vmem:[#allocation3 + $0x2d8] sm:$0xff]
    %v5712 = vld [vmem:[#allocation3 + $0x2e0] sm:$0xff]
    %v5713 = vld [vmem:[#allocation3 + $0x2e8] sm:$0xff]
    %v5714 = vld [vmem:[#allocation3 + $0x2f0] sm:$0xff]
    %v5715 = vld [vmem:[#allocation3 + $0x2f8] sm:$0xff]
    %v5716 = vld [vmem:[#allocation3 + $0x300] sm:$0xff]
    %v5717 = vld [vmem:[#allocation3 + $0x308] sm:$0xff]
    %v5718 = vld [vmem:[#allocation3 + $0x310] sm:$0xff]
    %v5719 = vld [vmem:[#allocation3 + $0x318] sm:$0xff]
    %v5720 = vld [vmem:[#allocation3 + $0x320] sm:$0xff]
    %v5721 = vld [vmem:[#allocation3 + $0x328] sm:$0xff]
    %v5722 = vld [vmem:[#allocation3 + $0x330] sm:$0xff]
    %v5723 = vld [vmem:[#allocation3 + $0x338] sm:$0xff]
    %v5724 = vld [vmem:[#allocation3 + $0x340] sm:$0xff]
    %v5725 = vld [vmem:[#allocation3 + $0x348] sm:$0xff]
    %v5726 = vld [vmem:[#allocation3 + $0x350] sm:$0xff]
    %v5727 = vld [vmem:[#allocation3 + $0x358] sm:$0xff]
    %v5728 = vld [vmem:[#allocation3 + $0x360] sm:$0xff]
    %v5729 = vld [vmem:[#allocation3 + $0x368] sm:$0xff]
    %v5730 = vld [vmem:[#allocation3 + $0x370] sm:$0xff]
    %v5731 = vld [vmem:[#allocation3 + $0x378] sm:$0xff]
    %v5732 = vld [vmem:[#allocation3 + $0x380] sm:$0xff]
    %v5733 = vld [vmem:[#allocation3 + $0x388] sm:$0xff]
    %v5734 = vld [vmem:[#allocation3 + $0x390] sm:$0xff]
    %v5735 = vld [vmem:[#allocation3 + $0x398] sm:$0xff]
    %v5736 = vld [vmem:[#allocation3 + $0x3a0] sm:$0xff]
    %v5737 = vld [vmem:[#allocation3 + $0x3a8] sm:$0xff]
    %v5738 = vld [vmem:[#allocation3 + $0x3b0] sm:$0xff]
    %v5739 = vld [vmem:[#allocation3 + $0x3b8] sm:$0xff]
    %v5740 = vld [vmem:[#allocation3 + $0x3c0] sm:$0xff]
    %v5741 = vld [vmem:[#allocation3 + $0x3c8] sm:$0xff]
    %v5742 = vld [vmem:[#allocation3 + $0x3d0] sm:$0xff]
    %v5743 = vld [vmem:[#allocation3 + $0x3d8] sm:$0xff]
    %v5744 = vld [vmem:[#allocation3 + $0x3e0] sm:$0xff]
    %v5745 = vld [vmem:[#allocation3 + $0x3e8] sm:$0xff]
    %v5746 = vld [vmem:[#allocation3 + $0x3f0] sm:$0xff]
    %v5747 = vld [vmem:[#allocation3 + $0x3f8] sm:$0xff]
    %v5748 = vld [vmem:[#allocation3 + $0x400] sm:$0xff]
    %v5749 = vld [vmem:[#allocation3 + $0x408] sm:$0xff]
    %v5750 = vld [vmem:[#allocation3 + $0x410] sm:$0xff]
    %v5751 = vld [vmem:[#allocation3 + $0x418] sm:$0xff]
    %v5752 = vld [vmem:[#allocation3 + $0x420] sm:$0xff]
    %v5753 = vld [vmem:[#allocation3 + $0x428] sm:$0xff]
    %v5754 = vld [vmem:[#allocation3 + $0x430] sm:$0xff]
    %v5755 = vld [vmem:[#allocation3 + $0x438] sm:$0xff]
    %v5756 = vld [vmem:[#allocation3 + $0x440] sm:$0xff]
    %v5757 = vld [vmem:[#allocation3 + $0x448] sm:$0xff]
    %v5758 = vld [vmem:[#allocation3 + $0x450] sm:$0xff]
    %v5759 = vld [vmem:[#allocation3 + $0x458] sm:$0xff]
    %v5760 = vld [vmem:[#allocation3 + $0x460] sm:$0xff]
    %v5761 = vld [vmem:[#allocation3 + $0x468] sm:$0xff]
    %v5762 = vld [vmem:[#allocation3 + $0x470] sm:$0xff]
    %v5763 = vld [vmem:[#allocation3 + $0x478] sm:$0xff]
    %v5764 = vld [vmem:[#allocation3 + $0x480] sm:$0xff]
    %v5765 = vld [vmem:[#allocation3 + $0x488] sm:$0xff]
    %v5766 = vld [vmem:[#allocation3 + $0x490] sm:$0xff]
    %v5767 = vld [vmem:[#allocation3 + $0x498] sm:$0xff]
    %v5768 = vld [vmem:[#allocation3 + $0x4a0] sm:$0xff]
    %v5769 = vld [vmem:[#allocation3 + $0x4a8] sm:$0xff]
    %v5770 = vld [vmem:[#allocation3 + $0x4b0] sm:$0xff]
    %v5771 = vld [vmem:[#allocation3 + $0x4b8] sm:$0xff]
    %v5772 = vld [vmem:[#allocation3 + $0x4c0] sm:$0xff]
    %v5773 = vld [vmem:[#allocation3 + $0x4c8] sm:$0xff]
    %v5774 = vld [vmem:[#allocation3 + $0x4d0] sm:$0xff]
    %v5775 = vld [vmem:[#allocation3 + $0x4d8] sm:$0xff]
    %v5776 = vld [vmem:[#allocation3 + $0x4e0] sm:$0xff]
    %v5777 = vld [vmem:[#allocation3 + $0x4e8] sm:$0xff]
    %v5778 = vld [vmem:[#allocation3 + $0x4f0] sm:$0xff]
    %v5779 = vld [vmem:[#allocation3 + $0x4f8] sm:$0xff]
    %v5780 = vld [vmem:[#allocation3 + $0x500] sm:$0xff]
    %v5781 = vld [vmem:[#allocation3 + $0x508] sm:$0xff]
    %v5782 = vld [vmem:[#allocation3 + $0x510] sm:$0xff]
    %v5783 = vld [vmem:[#allocation3 + $0x518] sm:$0xff]
    %v5784 = vld [vmem:[#allocation3 + $0x520] sm:$0xff]
    %v5785 = vld [vmem:[#allocation3 + $0x528] sm:$0xff]
    %v5786 = vld [vmem:[#allocation3 + $0x530] sm:$0xff]
    %v5787 = vld [vmem:[#allocation3 + $0x538] sm:$0xff]
    %v5788 = vld [vmem:[#allocation3 + $0x540] sm:$0xff]
    %v5789 = vld [vmem:[#allocation3 + $0x548] sm:$0xff]
    %v5790 = vld [vmem:[#allocation3 + $0x550] sm:$0xff]
    %v5791 = vld [vmem:[#allocation3 + $0x558] sm:$0xff]
    %v5792 = vld [vmem:[#allocation3 + $0x560] sm:$0xff]
    %v5793 = vld [vmem:[#allocation3 + $0x568] sm:$0xff]
    %v5794 = vld [vmem:[#allocation3 + $0x570] sm:$0xff]
    %v5795 = vld [vmem:[#allocation3 + $0x578] sm:$0xff]
    %v5796 = vld [vmem:[#allocation3 + $0x580] sm:$0xff]
    %v5797 = vld [vmem:[#allocation3 + $0x588] sm:$0xff]
    %v5798 = vld [vmem:[#allocation3 + $0x590] sm:$0xff]
    %v5799 = vld [vmem:[#allocation3 + $0x598] sm:$0xff]
    %v5800 = vld [vmem:[#allocation3 + $0x5a0] sm:$0xff]
    %v5801 = vld [vmem:[#allocation3 + $0x5a8] sm:$0xff]
    %v5802 = vld [vmem:[#allocation3 + $0x5b0] sm:$0xff]
    %v5803 = vld [vmem:[#allocation3 + $0x5b8] sm:$0xff]
    %v5804 = vld [vmem:[#allocation3 + $0x5c0] sm:$0xff]
    %v5805 = vld [vmem:[#allocation3 + $0x5c8] sm:$0xff]
    %v5806 = vld [vmem:[#allocation3 + $0x5d0] sm:$0xff]
    %v5807 = vld [vmem:[#allocation3 + $0x5d8] sm:$0xff]
    %v5808 = vld [vmem:[#allocation3 + $0x5e0] sm:$0xff]
    %v5809 = vld [vmem:[#allocation3 + $0x5e8] sm:$0xff]
    %v5810 = vld [vmem:[#allocation3 + $0x5f0] sm:$0xff]
    %v5811 = vld [vmem:[#allocation3 + $0x5f8] sm:$0xff]
    %v5812 = vld [vmem:[#allocation13] sm:$0x77]
    %v5813 = vld [vmem:[#allocation13 + $0x8] sm:$0x77]
    %v5816 = vlaneseq
    %v5817 = vshrl.u32 %v5816, 7
    %v5818 = vsub.s32 0, %v5817
    %v5819 = vrot.slane %v5812, %v5818
    %v5820 = vlaneseq
    %v5821 = vshrl.u32 %v5820, 7
    %v5822 = vsub.s32 4, %v5821
    %v5823 = vrot.slane %v5812, %v5822
    %v5824 = vlaneseq
    %v5825 = vshrl.u32 %v5824, 7
    %v5826 = vsub.s32 0, %v5825
    %v5827 = vrot.slane %v5813, %v5826
    %v5828 = vlaneseq
    %v5829 = vshrl.u32 %v5828, 7
    %v5830 = vsub.s32 4, %v5829
    %v5831 = vrot.slane %v5813, %v5830
    %v5836 = vlaneseq
    %v5837 = vshrl.u32 %v5836, 7
    %v5838 = vsub.s32 0, %v5837
    %v5839 = vrot.slane %v5819, %v5838
    %v5840 = vlaneseq
    %v5841 = vshrl.u32 %v5840, 7
    %v5842 = vsub.s32 0, %v5841
    %v5843 = vrot.slane %v5823, %v5842
    %v5844 = vlaneseq
    %v5845 = vshrl.u32 %v5844, 7
    %v5846 = vsub.s32 0, %v5845
    %v5847 = vrot.slane %v5827, %v5846
    %v5848 = vlaneseq
    %v5849 = vshrl.u32 %v5848, 7
    %v5850 = vsub.s32 0, %v5849
    %v5851 = vrot.slane %v5831, %v5850
    %5852 = vmatprep.subr.bf16.mxu0 %v5621
    %5853 = vmatpush1.bf16.msra.mxu0 %v5620
    %5854 = vmatprep.subr.bf16.mxu0 %v5625
    %5855 = vmatpush1.bf16.msra.mxu0 %v5624
    %5856 = vmatprep.subr.bf16.mxu0 %v5629
    %5857 = vmatpush1.bf16.msra.mxu0 %v5628
    %5858 = vmatprep.subr.bf16.mxu0 %v5633
    %5859 = vmatpush1.bf16.msra.mxu0 %v5632
    %5860 = vmatprep.subr.bf16.mxu0 %v5637
    %5861 = vmatpush1.bf16.msra.mxu0 %v5636
    %5862 = vmatprep.subr.bf16.mxu0 %v5641
    %5863 = vmatpush1.bf16.msra.mxu0 %v5640
    %5864 = vmatprep.subr.bf16.mxu0 %v5645
    %5865 = vmatpush1.bf16.msra.mxu0 %v5644
    %5866 = vmatprep.subr.bf16.mxu0 %v5649
    %5867 = vmatpush1.bf16.msra.mxu0 %v5648
    %5868 = vmatprep.subr.bf16.mxu0 %v5653
    %5869 = vmatpush1.bf16.msra.mxu0 %v5652
    %5870 = vmatprep.subr.bf16.mxu0 %v5657
    %5871 = vmatpush1.bf16.msra.mxu0 %v5656
    %5872 = vmatprep.subr.bf16.mxu0 %v5661
    %5873 = vmatpush1.bf16.msra.mxu0 %v5660
    %5874 = vmatprep.subr.bf16.mxu0 %v5665
    %5875 = vmatpush1.bf16.msra.mxu0 %v5664
    %5876 = vmatprep.subr.bf16.mxu0 %v5669
    %5877 = vmatpush1.bf16.msra.mxu0 %v5668
    %5878 = vmatprep.subr.bf16.mxu0 %v5673
    %5879 = vmatpush1.bf16.msra.mxu0 %v5672
    %5880 = vmatprep.subr.bf16.mxu0 %v5677
    %5881 = vmatpush1.bf16.msra.mxu0 %v5676
    %5882 = vmatprep.subr.bf16.mxu0 %v5681
    %5883 = vmatpush1.bf16.msra.mxu0 %v5680
    %5884 = vmatprep.mubr.bf16.mxu0 %v5611
    %5885 = vmatmul.mubr.bf16.gmra.mrb[0].mxu0 %v5610
    %v5886 = vpop.f32.mrb[0].mxu0
    %v5887 = vadd.f32 %v5839, %v5886
    %v5888 = vpop.f32.mrb[0].mxu0
    %v5889 = vadd.f32 %v5843, %v5888
    %v5890 = vpop.f32.mrb[0].mxu0
    %v5891 = vadd.f32 %v5839, %v5890
    %v5892 = vpop.f32.mrb[0].mxu0
    %v5893 = vadd.f32 %v5843, %v5892
    %5894 = vdwg.mxu0
    %5895 = vmatprep.subr.bf16.mxu0 %v5685
    %5896 = vmatpush1.bf16.msra.mxu0 %v5684
    %5897 = vmatprep.subr.bf16.mxu0 %v5689
    %5898 = vmatpush1.bf16.msra.mxu0 %v5688
    %5899 = vmatprep.subr.bf16.mxu0 %v5693
    %5900 = vmatpush1.bf16.msra.mxu0 %v5692
    %5901 = vmatprep.subr.bf16.mxu0 %v5697
    %5902 = vmatpush1.bf16.msra.mxu0 %v5696
    %5903 = vmatprep.subr.bf16.mxu0 %v5701
    %5904 = vmatpush1.bf16.msra.mxu0 %v5700
    %5905 = vmatprep.subr.bf16.mxu0 %v5705
    %5906 = vmatpush1.bf16.msra.mxu0 %v5704
    %5907 = vmatprep.subr.bf16.mxu0 %v5709
    %5908 = vmatpush1.bf16.msra.mxu0 %v5708
    %5909 = vmatprep.subr.bf16.mxu0 %v5713
    %5910 = vmatpush1.bf16.msra.mxu0 %v5712
    %5911 = vmatprep.subr.bf16.mxu0 %v5717
    %5912 = vmatpush1.bf16.msra.mxu0 %v5716
    %5913 = vmatprep.subr.bf16.mxu0 %v5721
    %5914 = vmatpush1.bf16.msra.mxu0 %v5720
    %5915 = vmatprep.subr.bf16.mxu0 %v5725
    %5916 = vmatpush1.bf16.msra.mxu0 %v5724
    %5917 = vmatprep.subr.bf16.mxu0 %v5729
    %5918 = vmatpush1.bf16.msra.mxu0 %v5728
    %5919 = vmatprep.subr.bf16.mxu0 %v5733
    %5920 = vmatpush1.bf16.msra.mxu0 %v5732
    %5921 = vmatprep.subr.bf16.mxu0 %v5737
    %5922 = vmatpush1.bf16.msra.mxu0 %v5736
    %5923 = vmatprep.subr.bf16.mxu0 %v5741
    %5924 = vmatpush1.bf16.msra.mxu0 %v5740
    %5925 = vmatprep.subr.bf16.mxu0 %v5745
    %5926 = vmatpush1.bf16.msra.mxu0 %v5744
    %5927 = vmatprep.mubr.bf16.mxu0 %v5613
    %5928 = vmatmul.mubr.bf16.gmra.mrb[0].mxu0 %v5612
    %v5929 = vpop.f32.mrb[0].mxu0
    %v5930 = vadd.f32 %v5887, %v5929
    %v5931 = vpop.f32.mrb[0].mxu0
    %v5932 = vadd.f32 %v5889, %v5931
    %v5933 = vpop.f32.mrb[0].mxu0
    %v5934 = vadd.f32 %v5891, %v5933
    %v5935 = vpop.f32.mrb[0].mxu0
    %v5936 = vadd.f32 %v5893, %v5935
    %5937 = vdwg.mxu0
    %5938 = vmatprep.subr.bf16.mxu0 %v5749
    %5939 = vmatpush1.bf16.msra.mxu0 %v5748
    %5940 = vmatprep.subr.bf16.mxu0 %v5753
    %5941 = vmatpush1.bf16.msra.mxu0 %v5752
    %5942 = vmatprep.subr.bf16.mxu0 %v5757
    %5943 = vmatpush1.bf16.msra.mxu0 %v5756
    %5944 = vmatprep.subr.bf16.mxu0 %v5761
    %5945 = vmatpush1.bf16.msra.mxu0 %v5760
    %5946 = vmatprep.subr.bf16.mxu0 %v5765
    %5947 = vmatpush1.bf16.msra.mxu0 %v5764
    %5948 = vmatprep.subr.bf16.mxu0 %v5769
    %5949 = vmatpush1.bf16.msra.mxu0 %v5768
    %5950 = vmatprep.subr.bf16.mxu0 %v5773
    %5951 = vmatpush1.bf16.msra.mxu0 %v5772
    %5952 = vmatprep.subr.bf16.mxu0 %v5777
    %5953 = vmatpush1.bf16.msra.mxu0 %v5776
    %5954 = vmatprep.subr.bf16.mxu0 %v5781
    %5955 = vmatpush1.bf16.msra.mxu0 %v5780
    %5956 = vmatprep.subr.bf16.mxu0 %v5785
    %5957 = vmatpush1.bf16.msra.mxu0 %v5784
    %5958 = vmatprep.subr.bf16.mxu0 %v5789
    %5959 = vmatpush1.bf16.msra.mxu0 %v5788
    %5960 = vmatprep.subr.bf16.mxu0 %v5793
    %5961 = vmatpush1.bf16.msra.mxu0 %v5792
    %5962 = vmatprep.subr.bf16.mxu0 %v5797
    %5963 = vmatpush1.bf16.msra.mxu0 %v5796
    %5964 = vmatprep.subr.bf16.mxu0 %v5801
    %5965 = vmatpush1.bf16.msra.mxu0 %v5800
    %5966 = vmatprep.subr.bf16.mxu0 %v5805
    %5967 = vmatpush1.bf16.msra.mxu0 %v5804
    %5968 = vmatprep.subr.bf16.mxu0 %v5809
    %5969 = vmatpush1.bf16.msra.mxu0 %v5808
    %5970 = vmatprep.mubr.bf16.mxu0 %v5615
    %5971 = vmatmul.mubr.bf16.gmra.mrb[0].mxu0 %v5614
    %v5972 = vpop.f32.mrb[0].mxu0
    %v5973 = vadd.f32 %v5930, %v5972
    %v5974 = vpop.f32.mrb[0].mxu0
    %v5975 = vadd.f32 %v5932, %v5974
    %v5976 = vpop.f32.mrb[0].mxu0
    %v5977 = vadd.f32 %v5934, %v5976
    %v5978 = vpop.f32.mrb[0].mxu0
    %v5979 = vadd.f32 %v5936, %v5978
    %5980 = vdwg.mxu0
    %5981 = vmatprep.subr.bf16.mxu0 %v5623
    %5982 = vmatpush1.bf16.msra.mxu0 %v5622
    %5983 = vmatprep.subr.bf16.mxu0 %v5627
    %5984 = vmatpush1.bf16.msra.mxu0 %v5626
    %5985 = vmatprep.subr.bf16.mxu0 %v5631
    %5986 = vmatpush1.bf16.msra.mxu0 %v5630
    %5987 = vmatprep.subr.bf16.mxu0 %v5635
    %5988 = vmatpush1.bf16.msra.mxu0 %v5634
    %5989 = vmatprep.subr.bf16.mxu0 %v5639
    %5990 = vmatpush1.bf16.msra.mxu0 %v5638
    %5991 = vmatprep.subr.bf16.mxu0 %v5643
    %5992 = vmatpush1.bf16.msra.mxu0 %v5642
    %5993 = vmatprep.subr.bf16.mxu0 %v5647
    %5994 = vmatpush1.bf16.msra.mxu0 %v5646
    %5995 = vmatprep.subr.bf16.mxu0 %v5651
    %5996 = vmatpush1.bf16.msra.mxu0 %v5650
    %5997 = vmatprep.subr.bf16.mxu0 %v5655
    %5998 = vmatpush1.bf16.msra.mxu0 %v5654
    %5999 = vmatprep.subr.bf16.mxu0 %v5659
    %6000 = vmatpush1.bf16.msra.mxu0 %v5658
    %6001 = vmatprep.subr.bf16.mxu0 %v5663
    %6002 = vmatpush1.bf16.msra.mxu0 %v5662
    %6003 = vmatprep.subr.bf16.mxu0 %v5667
    %6004 = vmatpush1.bf16.msra.mxu0 %v5666
    %6005 = vmatprep.subr.bf16.mxu0 %v5671
    %6006 = vmatpush1.bf16.msra.mxu0 %v5670
    %6007 = vmatprep.subr.bf16.mxu0 %v5675
    %6008 = vmatpush1.bf16.msra.mxu0 %v5674
    %6009 = vmatprep.subr.bf16.mxu0 %v5679
    %6010 = vmatpush1.bf16.msra.mxu0 %v5678
    %6011 = vmatprep.subr.bf16.mxu0 %v5683
    %6012 = vmatpush1.bf16.msra.mxu0 %v5682
    %6013 = vmatprep.mubr.bf16.mxu0 %v5611
    %6014 = vmatmul.mubr.bf16.gmra.mrb[0].mxu0 %v5610
    %v6015 = vpop.f32.mrb[0].mxu0
    %v6016 = vadd.f32 %v5847, %v6015
    %v6017 = vpop.f32.mrb[0].mxu0
    %v6018 = vadd.f32 %v5851, %v6017
    %v6019 = vpop.f32.mrb[0].mxu0
    %v6020 = vadd.f32 %v5847, %v6019
    %v6021 = vpop.f32.mrb[0].mxu0
    %v6022 = vadd.f32 %v5851, %v6021
    %6023 = vdwg.mxu0
    %6024 = vmatprep.subr.bf16.mxu0 %v5687
    %6025 = vmatpush1.bf16.msra.mxu0 %v5686
    %6026 = vmatprep.subr.bf16.mxu0 %v5691
    %6027 = vmatpush1.bf16.msra.mxu0 %v5690
    %6028 = vmatprep.subr.bf16.mxu0 %v5695
    %6029 = vmatpush1.bf16.msra.mxu0 %v5694
    %6030 = vmatprep.subr.bf16.mxu0 %v5699
    %6031 = vmatpush1.bf16.msra.mxu0 %v5698
    %6032 = vmatprep.subr.bf16.mxu0 %v5703
    %6033 = vmatpush1.bf16.msra.mxu0 %v5702
    %6034 = vmatprep.subr.bf16.mxu0 %v5707
    %6035 = vmatpush1.bf16.msra.mxu0 %v5706
    %6036 = vmatprep.subr.bf16.mxu0 %v5711
    %6037 = vmatpush1.bf16.msra.mxu0 %v5710
    %6038 = vmatprep.subr.bf16.mxu0 %v5715
    %6039 = vmatpush1.bf16.msra.mxu0 %v5714
    %6040 = vmatprep.subr.bf16.mxu0 %v5719
    %6041 = vmatpush1.bf16.msra.mxu0 %v5718
    %6042 = vmatprep.subr.bf16.mxu0 %v5723
    %6043 = vmatpush1.bf16.msra.mxu0 %v5722
    %6044 = vmatprep.subr.bf16.mxu0 %v5727
    %6045 = vmatpush1.bf16.msra.mxu0 %v5726
    %6046 = vmatprep.subr.bf16.mxu0 %v5731
    %6047 = vmatpush1.bf16.msra.mxu0 %v5730
    %6048 = vmatprep.subr.bf16.mxu0 %v5735
    %6049 = vmatpush1.bf16.msra.mxu0 %v5734
    %6050 = vmatprep.subr.bf16.mxu0 %v5739
    %6051 = vmatpush1.bf16.msra.mxu0 %v5738
    %6052 = vmatprep.subr.bf16.mxu0 %v5743
    %6053 = vmatpush1.bf16.msra.mxu0 %v5742
    %6054 = vmatprep.subr.bf16.mxu0 %v5747
    %6055 = vmatpush1.bf16.msra.mxu0 %v5746
    %6056 = vmatprep.mubr.bf16.mxu0 %v5613
    %6057 = vmatmul.mubr.bf16.gmra.mrb[0].mxu0 %v5612
    %v6058 = vpop.f32.mrb[0].mxu0
    %v6059 = vadd.f32 %v6016, %v6058
    %v6060 = vpop.f32.mrb[0].mxu0
    %v6061 = vadd.f32 %v6018, %v6060
    %v6062 = vpop.f32.mrb[0].mxu0
    %v6063 = vadd.f32 %v6020, %v6062
    %v6064 = vpop.f32.mrb[0].mxu0
    %v6065 = vadd.f32 %v6022, %v6064
    %6066 = vdwg.mxu0
    %6067 = vmatprep.subr.bf16.mxu0 %v5751
    %6068 = vmatpush1.bf16.msra.mxu0 %v5750
    %6069 = vmatprep.subr.bf16.mxu0 %v5755
    %6070 = vmatpush1.bf16.msra.mxu0 %v5754
    %6071 = vmatprep.subr.bf16.mxu0 %v5759
    %6072 = vmatpush1.bf16.msra.mxu0 %v5758
    %6073 = vmatprep.subr.bf16.mxu0 %v5763
    %6074 = vmatpush1.bf16.msra.mxu0 %v5762
    %6075 = vmatprep.subr.bf16.mxu0 %v5767
    %6076 = vmatpush1.bf16.msra.mxu0 %v5766
    %6077 = vmatprep.subr.bf16.mxu0 %v5771
    %6078 = vmatpush1.bf16.msra.mxu0 %v5770
    %6079 = vmatprep.subr.bf16.mxu0 %v5775
    %6080 = vmatpush1.bf16.msra.mxu0 %v5774
    %6081 = vmatprep.subr.bf16.mxu0 %v5779
    %6082 = vmatpush1.bf16.msra.mxu0 %v5778
    %6083 = vmatprep.subr.bf16.mxu0 %v5783
    %6084 = vmatpush1.bf16.msra.mxu0 %v5782
    %6085 = vmatprep.subr.bf16.mxu0 %v5787
    %6086 = vmatpush1.bf16.msra.mxu0 %v5786
    %6087 = vmatprep.subr.bf16.mxu0 %v5791
    %6088 = vmatpush1.bf16.msra.mxu0 %v5790
    %6089 = vmatprep.subr.bf16.mxu0 %v5795
    %6090 = vmatpush1.bf16.msra.mxu0 %v5794
    %6091 = vmatprep.subr.bf16.mxu0 %v5799
    %6092 = vmatpush1.bf16.msra.mxu0 %v5798
    %6093 = vmatprep.subr.bf16.mxu0 %v5803
    %6094 = vmatpush1.bf16.msra.mxu0 %v5802
    %6095 = vmatprep.subr.bf16.mxu0 %v5807
    %6096 = vmatpush1.bf16.msra.mxu0 %v5806
    %6097 = vmatprep.subr.bf16.mxu0 %v5811
    %6098 = vmatpush1.bf16.msra.mxu0 %v5810
    %6099 = vmatprep.mubr.bf16.mxu0 %v5615
    %6100 = vmatmul.mubr.bf16.gmra.mrb[0].mxu0 %v5614
    %v6101 = vpop.f32.mrb[0].mxu0
    %v6102 = vadd.f32 %v6059, %v6101
    %v6103 = vpop.f32.mrb[0].mxu0
    %v6104 = vadd.f32 %v6061, %v6103
    %v6105 = vpop.f32.mrb[0].mxu0
    %v6106 = vadd.f32 %v6063, %v6105
    %v6107 = vpop.f32.mrb[0].mxu0
    %v6108 = vadd.f32 %v6065, %v6107
    %6109 = vdwg.mxu0
    %v6110 = vadd.f32 %v5973, %v5975
    %v6111 = vadd.f32 %v6110, %v6102
    %v6112 = vadd.f32 %v6111, %v6104
    %6113 = vadd.xlane.f32.xlu0 %v6112
    %v6114 = vpop.xlane.xlu0 %6113
    %v6115 = vadd.f32 %v5977, %v5979
    %v6116 = vadd.f32 %v6115, %v6106
    %v6117 = vadd.f32 %v6116, %v6108
    %6118 = vadd.xlane.f32.xlu0 %v6117
    %v6119 = vpop.xlane.xlu0 %6118
    %v6120 = vrcp.pop 512.0
    %v6121 = vmul.f32 %v6114, %v6120
    %v6122 = vmul.f32 %v6119, %v6120
    %v6123 = vmul.f32 %v5973, %v5973
    %v6124 = vmul.f32 %v5975, %v5975
    %v6125 = vmul.f32 %v6102, %v6102
    %v6126 = vmul.f32 %v6104, %v6104
    %v6127 = vmul.f32 %v5977, %v5977
    %v6128 = vmul.f32 %v5979, %v5979
    %v6129 = vmul.f32 %v6106, %v6106
    %v6130 = vmul.f32 %v6108, %v6108
    %v6131 = vadd.f32 %v6123, %v6124
    %v6132 = vadd.f32 %v6131, %v6125
    %v6133 = vadd.f32 %v6132, %v6126
    %6134 = vadd.xlane.f32.xlu0 %v6133
    %v6135 = vpop.xlane.xlu0 %6134
    %v6136 = vadd.f32 %v6127, %v6128
    %v6137 = vadd.f32 %v6136, %v6129
    %v6138 = vadd.f32 %v6137, %v6130
    %6139 = vadd.xlane.f32.xlu0 %v6138
    %v6140 = vpop.xlane.xlu0 %6139
    %v6141 = vmul.f32 %v6135, %v6120
    %v6142 = vmul.f32 %v6140, %v6120
    %v6143 = vsub.f32 %v5973, %v6121
    %v6144 = vsub.f32 %v5975, %v6121
    %v6145 = vsub.f32 %v6102, %v6121
    %v6146 = vsub.f32 %v6104, %v6121
    %v6147 = vsub.f32 %v5977, %v6122
    %v6148 = vsub.f32 %v5979, %v6122
    %v6149 = vsub.f32 %v6106, %v6122
    %v6150 = vsub.f32 %v6108, %v6122
    %v6151 = vmul.f32 %v6121, %v6121
    %v6152 = vmul.f32 %v6122, %v6122
    %v6153 = vsub.f32 %v6141, %v6151
    %v6154 = vsub.f32 %v6142, %v6152
    %v6155 = vadd.f32 %v6153, 1e-05
    %v6156 = vadd.f32 %v6154, 1e-05
    %v6157 = vrsqrt.pop %v6155
    %v6158 = vrsqrt.pop %v6156
    %v6159 = vmul.f32 %v6143, %v6157
    %v6160 = vmul.f32 %v6144, %v6157
    %v6161 = vmul.f32 %v6145, %v6157
    %v6162 = vmul.f32 %v6146, %v6157
    %v6163 = vmul.f32 %v6147, %v6158
    %v6164 = vmul.f32 %v6148, %v6158
    %v6165 = vmul.f32 %v6149, %v6158
    %v6166 = vmul.f32 %v6150, %v6158
    %v6167 = vlaneseq
    %v6168 = vshrl.u32 %v6167, 7
    %v6169 = vsub.s32 1, %v6168
    %v6170 = vrot.slane %v5812, %v6169
    %v6171 = vlaneseq
    %v6172 = vshrl.u32 %v6171, 7
    %v6173 = vsub.s32 5, %v6172
    %v6174 = vrot.slane %v5812, %v6173
    %v6175 = vlaneseq
    %v6176 = vshrl.u32 %v6175, 7
    %v6177 = vsub.s32 1, %v6176
    %v6178 = vrot.slane %v5813, %v6177
    %v6179 = vlaneseq
    %v6180 = vshrl.u32 %v6179, 7
    %v6181 = vsub.s32 5, %v6180
    %v6182 = vrot.slane %v5813, %v6181
    %v6187 = vlaneseq
    %v6188 = vshrl.u32 %v6187, 7
    %v6189 = vsub.s32 1, %v6188
    %v6190 = vrot.slane %v6170, %v6189
    %v6191 = vlaneseq
    %v6192 = vshrl.u32 %v6191, 7
    %v6193 = vsub.s32 1, %v6192
    %v6194 = vrot.slane %v6174, %v6193
    %v6195 = vlaneseq
    %v6196 = vshrl.u32 %v6195, 7
    %v6197 = vsub.s32 1, %v6196
    %v6198 = vrot.slane %v6178, %v6197
    %v6199 = vlaneseq
    %v6200 = vshrl.u32 %v6199, 7
    %v6201 = vsub.s32 1, %v6200
    %v6202 = vrot.slane %v6182, %v6201
    %v6203 = vmul.f32 %v6159, %v6190
    %v6204 = vmul.f32 %v6160, %v6194
    %v6205 = vmul.f32 %v6161, %v6198
    %v6206 = vmul.f32 %v6162, %v6202
    %v6207 = vmul.f32 %v6163, %v6190
    %v6208 = vmul.f32 %v6164, %v6194
    %v6209 = vmul.f32 %v6165, %v6198
    %v6210 = vmul.f32 %v6166, %v6202
    %v6211 = vlaneseq
    %v6212 = vshrl.u32 %v6211, 7
    %v6213 = vsub.s32 2, %v6212
    %v6214 = vrot.slane %v5812, %v6213
    %v6215 = vlaneseq
    %v6216 = vshrl.u32 %v6215, 7
    %v6217 = vsub.s32 6, %v6216
    %v6218 = vrot.slane %v5812, %v6217
    %v6219 = vlaneseq
    %v6220 = vshrl.u32 %v6219, 7
    %v6221 = vsub.s32 2, %v6220
    %v6222 = vrot.slane %v5813, %v6221
    %v6223 = vlaneseq
    %v6224 = vshrl.u32 %v6223, 7
    %v6225 = vsub.s32 6, %v6224
    %v6226 = vrot.slane %v5813, %v6225
    %v6231 = vlaneseq
    %v6232 = vshrl.u32 %v6231, 7
    %v6233 = vsub.s32 2, %v6232
    %v6234 = vrot.slane %v6214, %v6233
    %v6235 = vlaneseq
    %v6236 = vshrl.u32 %v6235, 7
    %v6237 = vsub.s32 2, %v6236
    %v6238 = vrot.slane %v6218, %v6237
    %v6239 = vlaneseq
    %v6240 = vshrl.u32 %v6239, 7
    %v6241 = vsub.s32 2, %v6240
    %v6242 = vrot.slane %v6222, %v6241
    %v6243 = vlaneseq
    %v6244 = vshrl.u32 %v6243, 7
    %v6245 = vsub.s32 2, %v6244
    %v6246 = vrot.slane %v6226, %v6245
    %v6247 = vadd.f32 %v6203, %v6234
    %v6248 = vadd.f32 %v6204, %v6238
    %v6249 = vadd.f32 %v6205, %v6242
    %v6250 = vadd.f32 %v6206, %v6246
    %v6251 = vadd.f32 %v6207, %v6234
    %v6252 = vadd.f32 %v6208, %v6238
    %v6253 = vadd.f32 %v6209, %v6242
    %v6254 = vadd.f32 %v6210, %v6246
    %v6255 = vpack.c.bf16 %v6251, %v6247
    %v6256 = vpack.c.bf16 %v6252, %v6248
    %v6257 = vpack.c.bf16 %v6253, %v6249
    %v6258 = vpack.c.bf16 %v6254, %v6250
    %v6259 = vtanh.bf16.pop %v6255
    %v6260 = vtanh.bf16.pop %v6256
    %v6261 = vtanh.bf16.pop %v6257
    %v6262 = vtanh.bf16.pop %v6258
    %v6263 = vunpack.c.l.bf16 %v6259
    %v6264 = vunpack.c.l.bf16 %v6260
    %v6265 = vunpack.c.l.bf16 %v6261
    %v6266 = vunpack.c.l.bf16 %v6262
    %v6267 = vunpack.c.h.bf16 %v6259
    %v6268 = vunpack.c.h.bf16 %v6260
    %v6269 = vunpack.c.h.bf16 %v6261
    %v6270 = vunpack.c.h.bf16 %v6262
    %v6271 = vmul.f32 %v6263, %v6263
    %v6272 = vmul.f32 %v6264, %v6264
    %v6273 = vmul.f32 %v6265, %v6265
    %v6274 = vmul.f32 %v6266, %v6266
    %v6275 = vmul.f32 %v6267, %v6267
    %v6276 = vmul.f32 %v6268, %v6268
    %v6277 = vmul.f32 %v6269, %v6269
    %v6278 = vmul.f32 %v6270, %v6270
    %v6279 = vadd.f32 %v6271, %v6272
    %v6280 = vadd.f32 %v6279, %v6273
    %v6281 = vadd.f32 %v6280, %v6274
    %6282 = vadd.xlane.f32.xlu0 %v6281
    %v6283 = vpop.xlane.xlu0 %6282
    %v6284 = vadd.f32 %v6275, %v6276
    %v6285 = vadd.f32 %v6284, %v6277
    %v6286 = vadd.f32 %v6285, %v6278
    %6287 = vadd.xlane.f32.xlu0 %v6286
    %v6288 = vpop.xlane.xlu0 %6287
    %v6289 = vmax.f32 %v6283, 1e-24
    %v6290 = vmax.f32 %v6288, 1e-24
    %v6291 = vrsqrt.pop %v6289
    %v6292 = vrsqrt.pop %v6290
    %v6293 = vmul.f32 %v6263, %v6291
    %v6294 = vmul.f32 %v6264, %v6291
    %v6295 = vmul.f32 %v6265, %v6291
    %v6296 = vmul.f32 %v6266, %v6291
    %v6297 = vmul.f32 %v6267, %v6292
    %v6298 = vmul.f32 %v6268, %v6292
    %v6299 = vmul.f32 %v6269, %v6292
    %v6300 = vmul.f32 %v6270, %v6292
    %6301 = vst [vmem:[#allocation14] sm:$0xff] %v6293
    %6302 = vst [vmem:[#allocation14 + $0x8] sm:$0xff] %v6294
    %6303 = vst [vmem:[#allocation14 + $0x10] sm:$0xff] %v6295
    %6304 = vst [vmem:[#allocation14 + $0x18] sm:$0xff] %v6296
    %6305 = vst [vmem:[#allocation14 + $0x20] sm:$0xff] %v6297
    %6306 = vst [vmem:[#allocation14 + $0x28] sm:$0xff] %v6298
    %6307 = vst [vmem:[#allocation14 + $0x30] sm:$0xff] %v6299
    %6308 = vst [vmem:[#allocation14 + $0x38] sm:$0xff] %v6300
    // Predicated region
    $region42: #{tpu_custom_call.1} parent=1 // pred_check
      _
    $region43: #{tpu_custom_call.1} parent=1 // pred_check_branch
      %6310 = sbr.rel (0) target = $region45
    $region44: #{tpu_custom_call.1} parent=1 // pred_region
      %s6312 = ssub.s32 1024, 1024
      %6313 = vsyncadd [#allocation7], %s6312
      %s6314 = sshll.u32 [#allocation14], 4
      %s6315 = int_to_ptr.vmem [resolvable:$true] %s6314
      %6320 = dma.vmem_to_hbm [thread:$0]  %s6315, 1024, %s7, [#allocation7], 512, 512, 32
    $region45: #{tpu_custom_call.1} parent=1 // pred_fallthru
      _
    // Predicated region
    $region46: #{tpu_custom_call.1} parent=1 // pred_check
      _
    $region47: #{tpu_custom_call.1} parent=1 // pred_check_branch
      %6322 = sbr.rel (0) target = $region49
    $region48: #{tpu_custom_call.1} parent=1 // pred_region
      %6323 = dma.done [#allocation7], 1024
    $region49: #{tpu_custom_call.1} parent=1 // pred_fallthru
      _
    %6324 = vsyncpa [#allocation6], 1
    %6325 = vsyncpa [#allocation9], 1
    %6326 = vsyncpa [#allocation12], 1
    %6327 = vsyncpa [#allocation7], 1
  %6328 = vsyncmov [#allocation4]
  %s6329 = vpop.sfrf %6328
  %p6330 = scmp.eq.s32.totalorder %s6329, 0
  %p6331 = pneg %p6330
  %6333 = shalt.err (%p6331)
  %s6334 = scalar_lea.sflag [#allocation4], 1
  %6335 = vsyncmov %s6334
  %s6336 = vpop.sfrf %6335
  %p6337 = scmp.eq.s32.totalorder %s6336, 0
  %p6338 = pneg %p6337
  %6340 = shalt.err (%p6338)

</llo_original>
